<compile_context>
chip_gen: v7x
topology: tpu7x:2x2x1
jax: 0.10.0
libtpu: 0.0.40
codegen_flags: <defaults>
</compile_context>

<pallas_src>
import functools

import jax
import jax.numpy as jnp
from jax.experimental import pallas as pl
from jax.experimental.pallas import tpu as pltpu


_VMEM_LIMIT = 32 * 1024 * 1024  # safe on v5e/v6e (128 MiB) and v7x (64 MiB)


def _rup(n, m):
    return ((n + m - 1) // m) * m


# ----------------------------------------------------------------------------
# Pallas kernels
# ----------------------------------------------------------------------------
def _conv_tanh_pool_kernel(cols_ref, w_ref, b_ref, o_ref, *, mpad):
    """Fused conv (im2col matmul) + 2x2 max-pool + bias + tanh, one image.

    cols_ref: (1, 4*mpad, Kp) bf16  -- 4 pooling-phase slabs stacked along M
    w_ref:    (Kp, Cp)        bf16  -- K- and C-padded conv weights
    b_ref:    (1, Cp)         f32
    o_ref:    (1, mpad, Cp)   bf16  -- pooled, tanh'd feature map (lane-dense)
    """
    # One big MXU matmul over all 4 pooling phases (RHS pushed once).
    s = jnp.dot(cols_ref[0, :, :], w_ref[...], preferred_element_type=jnp.float32)
    # Max over the 4 pool-window positions; slices are 8-row aligned (mpad%8==0).
    m01 = jnp.maximum(s[0 * mpad:1 * mpad, :], s[1 * mpad:2 * mpad, :])
    m23 = jnp.maximum(s[2 * mpad:3 * mpad, :], s[3 * mpad:4 * mpad, :])
    # max commutes with +bias; tanh monotone  ==  tanh-then-maxpool.
    y = jnp.tanh(jnp.maximum(m01, m23) + b_ref[...])
    o_ref[0, :, :] = y.astype(o_ref.dtype)


def _mlp_kernel(x_ref, w1_ref, b1_ref, w2_ref, b2_ref, w3_ref, b3_ref, o_ref):
    """Fused classifier: tanh(x@W1+b1) -> tanh(.@W2+b2) -> .@W3+b3 (logits)."""
    h = jnp.dot(x_ref[...], w1_ref[...], preferred_element_type=jnp.float32)
    h = jnp.tanh(h + b1_ref[...]).astype(jnp.bfloat16)
    h = jnp.dot(h, w2_ref[...], preferred_element_type=jnp.float32)
    h = jnp.tanh(h + b2_ref[...]).astype(jnp.bfloat16)
    o_ref[...] = jnp.dot(h, w3_ref[...], preferred_element_type=jnp.float32) + b3_ref[...]


def conv_tanh_pool(cols4, w_p, b_p, mpad):
    """cols4: (B, 4*mpad, Kp) bf16 -> (B, mpad, Cp) bf16, grid parallel over batch."""
    B, M4, Kp = cols4.shape
    Cp = w_p.shape[1]
    kernel = functools.partial(_conv_tanh_pool_kernel, mpad=mpad)
    return pl.pallas_call(
        kernel,
        out_shape=jax.ShapeDtypeStruct((B, mpad, Cp), jnp.bfloat16),
        grid=(B,),
        in_specs=[
            pl.BlockSpec((1, M4, Kp), lambda b: (b, 0, 0)),
            pl.BlockSpec((Kp, Cp), lambda b: (0, 0)),   # weights stay VMEM-resident
            pl.BlockSpec((1, Cp), lambda b: (0, 0)),    # bias stays VMEM-resident
        ],
        out_specs=pl.BlockSpec((1, mpad, Cp), lambda b: (b, 0, 0)),
        compiler_params=pltpu.CompilerParams(
            dimension_semantics=("parallel",),
            vmem_limit_bytes=_VMEM_LIMIT,
        ),
    )(cols4, w_p, b_p)


def mlp_head(x, w1, b1, w2, b2, w3, b3, *, tm_cap=512):
    """Fused 3-layer classifier, tiled over the batch (M) dimension."""
    M, Kin = x.shape
    H1, H2, Nout = w1.shape[1], w2.shape[1], w3.shape[1]
    TM = M if M <= tm_cap else tm_cap  # full-dim block for small batch, else 512
    grid = (pl.cdiv(M, TM),)
    return pl.pallas_call(
        _mlp_kernel,
        out_shape=jax.ShapeDtypeStruct((M, Nout), jnp.float32),
        grid=grid,
        in_specs=[
            pl.BlockSpec((TM, Kin), lambda i: (i, 0)),
            pl.BlockSpec((Kin, H1), lambda i: (0, 0)),
            pl.BlockSpec((1, H1), lambda i: (0, 0)),
            pl.BlockSpec((H1, H2), lambda i: (0, 0)),
            pl.BlockSpec((1, H2), lambda i: (0, 0)),
            pl.BlockSpec((H2, Nout), lambda i: (0, 0)),
            pl.BlockSpec((1, Nout), lambda i: (0, 0)),
        ],
        out_specs=pl.BlockSpec((TM, Nout), lambda i: (i, 0)),
        compiler_params=pltpu.CompilerParams(
            dimension_semantics=("parallel",),
            vmem_limit_bytes=_VMEM_LIMIT,
        ),
    )(x, w1, b1, w2, b2, w3, b3)


# ----------------------------------------------------------------------------
# Glue: pooling-phase im2col (pure JAX slicing / reshape, fused by XLA)
# ----------------------------------------------------------------------------
# TODO(synk): for very large spatial sizes the patch gather could move in-kernel
# (manual DMA of row bands); at LeNet scale the XLA gather is cheap.
def im2col_pooled(x_nhwc, k):
    """Return (B, 4*Mpad, k*k*C): 4 im2col slabs stacked along M, one per 2x2
    pooling phase.  Band t rows [t*Mpad, t*Mpad+Mp) hold the patches of conv
    output positions (2i+a, 2j+b); the kernel's max over bands implements
    MaxPool2d(2).  Patch feature order along K is (kh, kw, cin).  Mpad is Mp
    rounded up to a multiple of 8 so in-kernel band slices are sublane-aligned.
    """
    B, H, W, C = x_nhwc.shape
    Ho, Wo = H - k + 1, W - k + 1
    Hp, Wp = Ho // 2, Wo // 2
    Mp = Hp * Wp
    Mpad = _rup(Mp, 8)
    patches = []
    for di in range(k):
        for dj in range(k):
            patches.append(x_nhwc[:, di:di + Ho, dj:dj + Wo, :])
    cols = jnp.stack(patches, axis=3).reshape(B, Ho, Wo, k * k * C)
    bands = []
    for a in (0, 1):
        for b in (0, 1):
            band = cols[:, a:a + 2 * Hp:2, b:b + 2 * Wp:2, :].reshape(B, Mp, k * k * C)
            if Mpad > Mp:
                band = jnp.pad(band, ((0, 0), (0, Mpad - Mp), (0, 0)))
            bands.append(band)
    return jnp.concatenate(bands, axis=1), (Hp, Wp, Mp, Mpad)


def _pad_k_bf16(cols, k_pad):
    """Zero-pad the K (patch) dim to the padded weight K and cast to bf16."""
    k = cols.shape[-1]
    if k < k_pad:
        cols = jnp.pad(cols, ((0, 0), (0, 0), (0, k_pad - k)))
    return cols.astype(jnp.bfloat16)


# ----------------------------------------------------------------------------
# Parameters: init (PyTorch-style uniform bounds) and one-time packing
# ----------------------------------------------------------------------------
def _uniform(key, shape, fan_in):
    bound = 1.0 / jnp.sqrt(float(fan_in))
    return jax.random.uniform(key, shape, jnp.float32, -bound, bound)


def init_lenet_params(key, num_classes, grayscale=False):
    in_c = 1 if grayscale else 3
    c1, c2 = 6 * in_c, 16 * in_c
    f_in = 16 * 5 * 5 * in_c
    h1, h2 = 120 * in_c, 84 * in_c
    ks = jax.random.split(key, 10)
    return {
        # conv weights stored in im2col layout: rows ordered (kh, kw, cin)
        "conv1_w": _uniform(ks[0], (5 * 5 * in_c, c1), 5 * 5 * in_c),
        "conv1_b": _uniform(ks[1], (c1,), 5 * 5 * in_c),
        "conv2_w": _uniform(ks[2], (5 * 5 * c1, c2), 5 * 5 * c1),
        "conv2_b": _uniform(ks[3], (c2,), 5 * 5 * c1),
        # fc1 rows stored in (h, w, c) order == torch's (c, h, w) rows permuted
        # once, so the pooled NHWC tensor flattens directly (no NCHW transpose).
        "fc1_w": _uniform(ks[4], (f_in, h1), f_in),
        "fc1_b": _uniform(ks[5], (h1,), f_in),
        "fc2_w": _uniform(ks[6], (h1, h2), h1),
        "fc2_b": _uniform(ks[7], (h2,), h1),
        "fc3_w": _uniform(ks[8], (h2, num_classes), h2),
        "fc3_b": _uniform(ks[9], (num_classes,), h2),
    }


def pack_params(params):
    """One-time packing (outside the hot path): zero-pad K and out dims to
    multiples of 128 for aligned MXU tiles and lane-dense stores; cast weights
    to bf16 (biases stay f32 for the f32 epilogue)."""
    packed = {}
    for name in ("conv1", "conv2", "fc1", "fc2", "fc3"):
        w = params[name + "_w"]
        b = params[name + "_b"]
        K, N = w.shape
        Kp = K if name == "fc1" else _rup(K, 128)  # fc1 K comes unpadded from the conv slice
        Np = _rup(N, 128)
        wp = jnp.zeros((Kp, Np), jnp.float32).at[:K, :N].set(w).astype(jnp.bfloat16)
        bp = jnp.zeros((1, Np), jnp.float32).at[0, :N].set(b)
        packed[name + "_w"] = wp
        packed[name + "_b"] = bp
    return packed


# ----------------------------------------------------------------------------
# LeNet forward
# ----------------------------------------------------------------------------
def lenet_forward(packed, pixel_values_nchw, labels=None, *, in_c, num_classes):
    """pixel_values_nchw: (B, C, 32, 32) float32, like the PyTorch module."""
    x = jnp.transpose(pixel_values_nchw, (0, 2, 3, 1)).astype(jnp.float32)  # NHWC
    B = x.shape[0]
    c1, c2 = 6 * in_c, 16 * in_c

    # conv1 + tanh + maxpool2x2  (single fused pallas_call)
    cols, (hp1, wp1, mp1, mpad1) = im2col_pooled(x, 5)
    cols = _pad_k_bf16(cols, packed["conv1_w"].shape[0])
    y = conv_tanh_pool(cols, packed["conv1_w"], packed["conv1_b"], mpad1)  # (B, 200, 128)

    # conv2 + tanh + maxpool2x2  (single fused pallas_call)
    y = y[:, :mp1, :c1].reshape(B, hp1, wp1, c1)  # drop row/channel padding
    cols, (hp2, wp2, mp2, mpad2) = im2col_pooled(y, 5)
    cols = _pad_k_bf16(cols, packed["conv2_w"].shape[0])
    y = conv_tanh_pool(cols, packed["conv2_w"], packed["conv2_b"], mpad2)  # (B, 32, 128)

    # flatten in (h, w, c) order; fc1_w rows are stored in the matching order
    feat = y[:, :mp2, :c2].reshape(B, hp2 * wp2 * c2)  # (B, 1200) bf16

    # fc1+tanh, fc2+tanh, fc3 fused into one pallas_call; slice off logit padding
    logits_p = mlp_head(
        feat,
        packed["fc1_w"], packed["fc1_b"],
        packed["fc2_w"], packed["fc2_b"],
        packed["fc3_w"], packed["fc3_b"],
    )
    logits = logits_p[:, :num_classes]

    loss = None
    if labels is not None:
        # CrossEntropyLoss (mean reduction) — small glue reduction in plain JAX.
        logz = jax.nn.logsumexp(logits, axis=-1)
        picked = jnp.take_along_axis(logits, labels.reshape(-1, 1), axis=-1)[:, 0]
        loss = jnp.mean(logz - picked)
    return loss, logits


# ----------------------------------------------------------------------------
# Demo
# ----------------------------------------------------------------------------
if __name__ == "__main__":
    num_classes = 10
    grayscale = False
    in_c = 1 if grayscale else 3

    key = jax.random.PRNGKey(0)
    k_param, k_x, k_lab = jax.random.split(key, 3)

    params = init_lenet_params(k_param, num_classes, grayscale)
    packed = pack_params(params)

    # The classifier's fixed 16*5*5*in_c flatten size forces 32x32 spatial input.
    batch = 2
    x = jax.random.normal(k_x, (batch, in_c, 32, 32), dtype=jnp.float32)
    labels = jax.random.randint(k_lab, (batch,), 0, num_classes)

    fwd = jax.jit(functools.partial(lenet_forward, in_c=in_c, num_classes=num_classes))
    loss, logits = fwd(packed, x, labels)
    jax.block_until_ready((loss, logits))

    assert logits.shape == (batch, num_classes)
    assert bool(jnp.isfinite(loss))
    print("KERNEL_OK")
</pallas_src>

<mosaic_0001>
module attributes {stable_mosaic.version = 11 : i64} {
  func.func @_conv_tanh_pool_kernel(%arg0: i32, %arg1: memref<1x800x128xbf16, #tpu.memory_space<vmem>>, %arg2: memref<128x128xbf16, #tpu.memory_space<vmem>>, %arg3: memref<1x128xf32, #tpu.memory_space<vmem>>, %arg4: memref<1x200x128xbf16, #tpu.memory_space<vmem>>) attributes {dimension_semantics = [#tpu.dimension_semantics<parallel>], iteration_bounds = array<i64: 2>, scalar_prefetch = 0 : i64, scratch_operands = 0 : i64, tpu.core_type = #tpu.core_type<tc>, window_params = [{transform_indices = @transform_0, window_bounds = array<i64: 1, 800, 128>}, {pipeline_mode = #tpu.pipeline_mode<synchronous>, transform_indices = @transform_1, window_bounds = array<i64: 128, 128>}, {pipeline_mode = #tpu.pipeline_mode<synchronous>, transform_indices = @transform_2, window_bounds = array<i64: 1, 128>}, {transform_indices = @transform_3, window_bounds = array<i64: 1, 200, 128>}]} {
    %c0 = arith.constant 0 : index
    %c0_0 = arith.constant 0 : index
    %c0_1 = arith.constant 0 : index
    %0 = vector.load %arg1[%c0, %c0_0, %c0_1] : memref<1x800x128xbf16, #tpu.memory_space<vmem>>, vector<1x800x128xbf16>
    %1 = vector.shape_cast %0 : vector<1x800x128xbf16> to vector<800x128xbf16>
    %c0_2 = arith.constant 0 : index
    %c0_3 = arith.constant 0 : index
    %2 = vector.load %arg2[%c0_2, %c0_3] : memref<128x128xbf16, #tpu.memory_space<vmem>>, vector<128x128xbf16>
    %cst = arith.constant dense<0.000000e+00> : vector<800x128xf32>
    %3 = tpu.matmul %1, %2, %cst {dimension_numbers = #tpu.dot_dimension_numbers<[1], [0], [0], [1], [0, 0, 1, 1], [], []>} : vector<800x128xbf16>, vector<128x128xbf16>, vector<800x128xf32> -> vector<800x128xf32>
    %4 = vector.extract_strided_slice %3 {offsets = [0, 0], sizes = [200, 128], strides = [1, 1]} : vector<800x128xf32> to vector<200x128xf32>
    %5 = vector.extract_strided_slice %3 {offsets = [200, 0], sizes = [200, 128], strides = [1, 1]} : vector<800x128xf32> to vector<200x128xf32>
    %6 = arith.maximumf %4, %5 : vector<200x128xf32>
    %7 = vector.extract_strided_slice %3 {offsets = [400, 0], sizes = [200, 128], strides = [1, 1]} : vector<800x128xf32> to vector<200x128xf32>
    %8 = vector.extract_strided_slice %3 {offsets = [600, 0], sizes = [200, 128], strides = [1, 1]} : vector<800x128xf32> to vector<200x128xf32>
    %9 = arith.maximumf %7, %8 : vector<200x128xf32>
    %10 = arith.maximumf %6, %9 : vector<200x128xf32>
    %c0_4 = arith.constant 0 : index
    %c0_5 = arith.constant 0 : index
    %11 = vector.load %arg3[%c0_4, %c0_5] : memref<1x128xf32, #tpu.memory_space<vmem>>, vector<1x128xf32>
    %12 = vector.broadcast %11 : vector<1x128xf32> to vector<200x128xf32>
    %13 = arith.addf %10, %12 : vector<200x128xf32>
    %14 = math.tanh %13 : vector<200x128xf32>
    %15 = arith.truncf %14 : vector<200x128xf32> to vector<200x128xbf16>
    %c0_6 = arith.constant 0 : index
    %c0_7 = arith.constant 0 : index
    %c0_8 = arith.constant 0 : index
    %16 = vector.load %arg4[%c0_6, %c0_7, %c0_8] : memref<1x200x128xbf16, #tpu.memory_space<vmem>>, vector<1x200x128xbf16>
    %17 = vector.shape_cast %16 : vector<1x200x128xbf16> to vector<200x128xbf16>
    %18 = vector.shape_cast %15 : vector<200x128xbf16> to vector<1x200x128xbf16>
    tpu.vector_store %arg4[%c0_6, %c0_7, %c0_8], %18 {strides = array<i32>} : memref<1x200x128xbf16, #tpu.memory_space<vmem>>, vector<1x200x128xbf16>,
    return
  }
  func.func @transform_0(%arg0: i32) -> (i32, i32, i32) {
    %c0_i32 = arith.constant 0 : i32
    %c0_i32_0 = arith.constant 0 : i32
    %c0_i32_1 = arith.constant 0 : i32
    return %arg0, %c0_i32, %c0_i32_0 : i32, i32, i32
  }
  func.func @transform_1(%arg0: i32) -> (i32, i32) {
    %c0_i32 = arith.constant 0 : i32
    %c0_i32_0 = arith.constant 0 : i32
    %c0_i32_1 = arith.constant 0 : i32
    return %c0_i32, %c0_i32_0 : i32, i32
  }
  func.func @transform_2(%arg0: i32) -> (i32, i32) {
    %c0_i32 = arith.constant 0 : i32
    %c0_i32_0 = arith.constant 0 : i32
    %c0_i32_1 = arith.constant 0 : i32
    return %c0_i32, %c0_i32_0 : i32, i32
  }
  func.func @transform_3(%arg0: i32) -> (i32, i32, i32) {
    %c0_i32 = arith.constant 0 : i32
    %c0_i32_0 = arith.constant 0 : i32
    %c0_i32_1 = arith.constant 0 : i32
    return %arg0, %c0_i32, %c0_i32_0 : i32, i32, i32
  }
}

module attributes {stable_mosaic.version = 11 : i64} {
  func.func @_conv_tanh_pool_kernel(%arg0: i32, %arg1: memref<1x128x512xbf16, #tpu.memory_space<vmem>>, %arg2: memref<512x128xbf16, #tpu.memory_space<vmem>>, %arg3: memref<1x128xf32, #tpu.memory_space<vmem>>, %arg4: memref<1x32x128xbf16, #tpu.memory_space<vmem>>) attributes {dimension_semantics = [#tpu.dimension_semantics<parallel>], iteration_bounds = array<i64: 2>, scalar_prefetch = 0 : i64, scratch_operands = 0 : i64, tpu.core_type = #tpu.core_type<tc>, window_params = [{transform_indices = @transform_0, window_bounds = array<i64: 1, 128, 512>}, {pipeline_mode = #tpu.pipeline_mode<synchronous>, transform_indices = @transform_1, window_bounds = array<i64: 512, 128>}, {pipeline_mode = #tpu.pipeline_mode<synchronous>, transform_indices = @transform_2, window_bounds = array<i64: 1, 128>}, {transform_indices = @transform_3, window_bounds = array<i64: 1, 32, 128>}]} {
    %c0 = arith.constant 0 : index
    %c0_0 = arith.constant 0 : index
    %c0_1 = arith.constant 0 : index
    %0 = vector.load %arg1[%c0, %c0_0, %c0_1] : memref<1x128x512xbf16, #tpu.memory_space<vmem>>, vector<1x128x512xbf16>
    %1 = vector.shape_cast %0 : vector<1x128x512xbf16> to vector<128x512xbf16>
    %c0_2 = arith.constant 0 : index
    %c0_3 = arith.constant 0 : index
    %2 = vector.load %arg2[%c0_2, %c0_3] : memref<512x128xbf16, #tpu.memory_space<vmem>>, vector<512x128xbf16>
    %cst = arith.constant dense<0.000000e+00> : vector<128x128xf32>
    %3 = tpu.matmul %1, %2, %cst {dimension_numbers = #tpu.dot_dimension_numbers<[1], [0], [0], [1], [0, 0, 1, 1], [], []>} : vector<128x512xbf16>, vector<512x128xbf16>, vector<128x128xf32> -> vector<128x128xf32>
    %4 = vector.extract_strided_slice %3 {offsets = [0, 0], sizes = [32, 128], strides = [1, 1]} : vector<128x128xf32> to vector<32x128xf32>
    %5 = vector.extract_strided_slice %3 {offsets = [32, 0], sizes = [32, 128], strides = [1, 1]} : vector<128x128xf32> to vector<32x128xf32>
    %6 = arith.maximumf %4, %5 : vector<32x128xf32>
    %7 = vector.extract_strided_slice %3 {offsets = [64, 0], sizes = [32, 128], strides = [1, 1]} : vector<128x128xf32> to vector<32x128xf32>
    %8 = vector.extract_strided_slice %3 {offsets = [96, 0], sizes = [32, 128], strides = [1, 1]} : vector<128x128xf32> to vector<32x128xf32>
    %9 = arith.maximumf %7, %8 : vector<32x128xf32>
    %10 = arith.maximumf %6, %9 : vector<32x128xf32>
    %c0_4 = arith.constant 0 : index
    %c0_5 = arith.constant 0 : index
    %11 = vector.load %arg3[%c0_4, %c0_5] : memref<1x128xf32, #tpu.memory_space<vmem>>, vector<1x128xf32>
    %12 = vector.broadcast %11 : vector<1x128xf32> to vector<32x128xf32>
    %13 = arith.addf %10, %12 : vector<32x128xf32>
    %14 = math.tanh %13 : vector<32x128xf32>
    %15 = arith.truncf %14 : vector<32x128xf32> to vector<32x128xbf16>
    %c0_6 = arith.constant 0 : index
    %c0_7 = arith.constant 0 : index
    %c0_8 = arith.constant 0 : index
    %16 = vector.load %arg4[%c0_6, %c0_7, %c0_8] : memref<1x32x128xbf16, #tpu.memory_space<vmem>>, vector<1x32x128xbf16>
    %17 = vector.shape_cast %16 : vector<1x32x128xbf16> to vector<32x128xbf16>
    %18 = vector.shape_cast %15 : vector<32x128xbf16> to vector<1x32x128xbf16>
    tpu.vector_store %arg4[%c0_6, %c0_7, %c0_8], %18 {strides = array<i32>} : memref<1x32x128xbf16, #tpu.memory_space<vmem>>, vector<1x32x128xbf16>,
    return
  }
  func.func @transform_0(%arg0: i32) -> (i32, i32, i32) {
    %c0_i32 = arith.constant 0 : i32
    %c0_i32_0 = arith.constant 0 : i32
    %c0_i32_1 = arith.constant 0 : i32
    return %arg0, %c0_i32, %c0_i32_0 : i32, i32, i32
  }
  func.func @transform_1(%arg0: i32) -> (i32, i32) {
    %c0_i32 = arith.constant 0 : i32
    %c0_i32_0 = arith.constant 0 : i32
    %c0_i32_1 = arith.constant 0 : i32
    return %c0_i32, %c0_i32_0 : i32, i32
  }
  func.func @transform_2(%arg0: i32) -> (i32, i32) {
    %c0_i32 = arith.constant 0 : i32
    %c0_i32_0 = arith.constant 0 : i32
    %c0_i32_1 = arith.constant 0 : i32
    return %c0_i32, %c0_i32_0 : i32, i32
  }
  func.func @transform_3(%arg0: i32) -> (i32, i32, i32) {
    %c0_i32 = arith.constant 0 : i32
    %c0_i32_0 = arith.constant 0 : i32
    %c0_i32_1 = arith.constant 0 : i32
    return %arg0, %c0_i32, %c0_i32_0 : i32, i32, i32
  }
}

module attributes {stable_mosaic.version = 11 : i64} {
  func.func @_mlp_kernel(%arg0: i32, %arg1: memref<2x1200xbf16, #tpu.memory_space<vmem>>, %arg2: memref<1200x384xbf16, #tpu.memory_space<vmem>>, %arg3: memref<1x384xf32, #tpu.memory_space<vmem>>, %arg4: memref<384x256xbf16, #tpu.memory_space<vmem>>, %arg5: memref<1x256xf32, #tpu.memory_space<vmem>>, %arg6: memref<256x128xbf16, #tpu.memory_space<vmem>>, %arg7: memref<1x128xf32, #tpu.memory_space<vmem>>, %arg8: memref<2x128xf32, #tpu.memory_space<vmem>>) attributes {dimension_semantics = [#tpu.dimension_semantics<parallel>], iteration_bounds = array<i64: 1>, scalar_prefetch = 0 : i64, scratch_operands = 0 : i64, tpu.core_type = #tpu.core_type<tc>, window_params = [{transform_indices = @transform_0, window_bounds = array<i64: 2, 1200>}, {pipeline_mode = #tpu.pipeline_mode<synchronous>, transform_indices = @transform_1, window_bounds = array<i64: 1200, 384>}, {pipeline_mode = #tpu.pipeline_mode<synchronous>, transform_indices = @transform_2, window_bounds = array<i64: 1, 384>}, {pipeline_mode = #tpu.pipeline_mode<synchronous>, transform_indices = @transform_3, window_bounds = array<i64: 384, 256>}, {pipeline_mode = #tpu.pipeline_mode<synchronous>, transform_indices = @transform_4, window_bounds = array<i64: 1, 256>}, {pipeline_mode = #tpu.pipeline_mode<synchronous>, transform_indices = @transform_5, window_bounds = array<i64: 256, 128>}, {pipeline_mode = #tpu.pipeline_mode<synchronous>, transform_indices = @transform_6, window_bounds = array<i64: 1, 128>}, {transform_indices = @transform_7, window_bounds = array<i64: 2, 128>}]} {
    %c0 = arith.constant 0 : index
    %c0_0 = arith.constant 0 : index
    %0 = vector.load %arg1[%c0, %c0_0] : memref<2x1200xbf16, #tpu.memory_space<vmem>>, vector<2x1200xbf16>
    %c0_1 = arith.constant 0 : index
    %c0_2 = arith.constant 0 : index
    %1 = vector.load %arg2[%c0_1, %c0_2] : memref<1200x384xbf16, #tpu.memory_space<vmem>>, vector<1200x384xbf16>
    %cst = arith.constant dense<0.000000e+00> : vector<2x384xf32>
    %2 = tpu.matmul %0, %1, %cst {dimension_numbers = #tpu.dot_dimension_numbers<[1], [0], [0], [1], [0, 0, 1, 1], [], []>} : vector<2x1200xbf16>, vector<1200x384xbf16>, vector<2x384xf32> -> vector<2x384xf32>
    %c0_3 = arith.constant 0 : index
    %c0_4 = arith.constant 0 : index
    %3 = vector.load %arg3[%c0_3, %c0_4] : memref<1x384xf32, #tpu.memory_space<vmem>>, vector<1x384xf32>
    %4 = vector.broadcast %3 : vector<1x384xf32> to vector<2x384xf32>
    %5 = arith.addf %2, %4 : vector<2x384xf32>
    %6 = math.tanh %5 : vector<2x384xf32>
    %7 = arith.truncf %6 : vector<2x384xf32> to vector<2x384xbf16>
    %c0_5 = arith.constant 0 : index
    %c0_6 = arith.constant 0 : index
    %8 = vector.load %arg4[%c0_5, %c0_6] : memref<384x256xbf16, #tpu.memory_space<vmem>>, vector<384x256xbf16>
    %cst_7 = arith.constant dense<0.000000e+00> : vector<2x256xf32>
    %9 = tpu.matmul %7, %8, %cst_7 {dimension_numbers = #tpu.dot_dimension_numbers<[1], [0], [0], [1], [0, 0, 1, 1], [], []>} : vector<2x384xbf16>, vector<384x256xbf16>, vector<2x256xf32> -> vector<2x256xf32>
    %c0_8 = arith.constant 0 : index
    %c0_9 = arith.constant 0 : index
    %10 = vector.load %arg5[%c0_8, %c0_9] : memref<1x256xf32, #tpu.memory_space<vmem>>, vector<1x256xf32>
    %11 = vector.broadcast %10 : vector<1x256xf32> to vector<2x256xf32>
    %12 = arith.addf %9, %11 : vector<2x256xf32>
    %13 = math.tanh %12 : vector<2x256xf32>
    %14 = arith.truncf %13 : vector<2x256xf32> to vector<2x256xbf16>
    %c0_10 = arith.constant 0 : index
    %c0_11 = arith.constant 0 : index
    %15 = vector.load %arg6[%c0_10, %c0_11] : memref<256x128xbf16, #tpu.memory_space<vmem>>, vector<256x128xbf16>
    %cst_12 = arith.constant dense<0.000000e+00> : vector<2x128xf32>
    %16 = tpu.matmul %14, %15, %cst_12 {dimension_numbers = #tpu.dot_dimension_numbers<[1], [0], [0], [1], [0, 0, 1, 1], [], []>} : vector<2x256xbf16>, vector<256x128xbf16>, vector<2x128xf32> -> vector<2x128xf32>
    %c0_13 = arith.constant 0 : index
    %c0_14 = arith.constant 0 : index
    %17 = vector.load %arg7[%c0_13, %c0_14] : memref<1x128xf32, #tpu.memory_space<vmem>>, vector<1x128xf32>
    %18 = vector.broadcast %17 : vector<1x128xf32> to vector<2x128xf32>
    %19 = arith.addf %16, %18 : vector<2x128xf32>
    %c0_15 = arith.constant 0 : index
    %c0_16 = arith.constant 0 : index
    %20 = vector.load %arg8[%c0_15, %c0_16] : memref<2x128xf32, #tpu.memory_space<vmem>>, vector<2x128xf32>
    tpu.vector_store %arg8[%c0_15, %c0_16], %19 {strides = array<i32>} : memref<2x128xf32, #tpu.memory_space<vmem>>, vector<2x128xf32>,
    return
  }
  func.func @transform_0(%arg0: i32) -> (i32, i32) {
    %c0_i32 = arith.constant 0 : i32
    %c0_i32_0 = arith.constant 0 : i32
    return %arg0, %c0_i32 : i32, i32
  }
  func.func @transform_1(%arg0: i32) -> (i32, i32) {
    %c0_i32 = arith.constant 0 : i32
    %c0_i32_0 = arith.constant 0 : i32
    %c0_i32_1 = arith.constant 0 : i32
    return %c0_i32, %c0_i32_0 : i32, i32
  }
  func.func @transform_2(%arg0: i32) -> (i32, i32) {
    %c0_i32 = arith.constant 0 : i32
    %c0_i32_0 = arith.constant 0 : i32
    %c0_i32_1 = arith.constant 0 : i32
    return %c0_i32, %c0_i32_0 : i32, i32
  }
  func.func @transform_3(%arg0: i32) -> (i32, i32) {
    %c0_i32 = arith.constant 0 : i32
    %c0_i32_0 = arith.constant 0 : i32
    %c0_i32_1 = arith.constant 0 : i32
    return %c0_i32, %c0_i32_0 : i32, i32
  }
  func.func @transform_4(%arg0: i32) -> (i32, i32) {
    %c0_i32 = arith.constant 0 : i32
    %c0_i32_0 = arith.constant 0 : i32
    %c0_i32_1 = arith.constant 0 : i32
    return %c0_i32, %c0_i32_0 : i32, i32
  }
  func.func @transform_5(%arg0: i32) -> (i32, i32) {
    %c0_i32 = arith.constant 0 : i32
    %c0_i32_0 = arith.constant 0 : i32
    %c0_i32_1 = arith.constant 0 : i32
    return %c0_i32, %c0_i32_0 : i32, i32
  }
  func.func @transform_6(%arg0: i32) -> (i32, i32) {
    %c0_i32 = arith.constant 0 : i32
    %c0_i32_0 = arith.constant 0 : i32
    %c0_i32_1 = arith.constant 0 : i32
    return %c0_i32, %c0_i32_0 : i32, i32
  }
  func.func @transform_7(%arg0: i32) -> (i32, i32) {
    %c0_i32 = arith.constant 0 : i32
    %c0_i32_0 = arith.constant 0 : i32
    return %arg0, %c0_i32 : i32, i32
  }
}

</mosaic_0001>

<llo_original>
// kernel: lenet_forward.3
$region0: #{lenet_forward.3}
  #allocation0 [shape = 'u32[]', space=smem, size = 0x4, offset = 0x4, fixed_abs, tag = 'smem constant byte address 0x4 - core index']
  #allocation1 [shape = 'u32[144,128]{1,0:T(1,128)}', space=vmem, size = 0x12000, scoped, tag = 'internal scratch']
  %s0 = inlined_call_operand.vmem [shape: bf16[2,800,128], index: 0, kind: input, shape index: {}]
  %s1 = inlined_call_operand.vmem [shape: bf16[128,128], index: 1, kind: input, shape index: {}]
  %s2 = inlined_call_operand.vmem [shape: f32[1,128], index: 2, kind: input, shape index: {}]
  %s3 = inlined_call_operand.vmem [shape: bf16[2,200,128], index: 3, kind: output, shape index: {}]
  %s4 = sld [smem:[#allocation0]]
  $region45: #{lenet_forward.3} parent=0
    _
  %s6 = ssub.s32 1, %s4
  %s7 = scalar_select 0, %s6, %s4
  loop: start=0, step=1, limit=4
  $region2: #{lenet_forward.3} parent=0 // loop_pre_header
    _
  $region3: #{lenet_forward.3} parent=0 // loop_header
    %s9 = sphi 0, %s13
    %p10 = scmp.ge.s32.totalorder %s9, 4
    %s19 = sphi 0, %s21
    %s22 = sphi 0, %s19
    %s23 = sphi 0, %s22
    %s39 = sphi 0, %s23
    %s43 = sphi 0, %s43
    %s45 = sphi 0, %s43
    %s46 = sphi 0, %s45
    %s60 = sphi 0, %s46
    %s64 = sphi 0, %s64
    %s66 = sphi 0, %s64
    %s67 = sphi 0, %s66
    %s81 = sphi 0, %s67
    %s87 = sphi 0, %s89
    %s90 = sphi 0, %s87
    %s91 = sphi 0, %s90
    %s107 = sphi 0, %s91
  $region4: #{lenet_forward.3} parent=0 // loop_header_branch
    %12 = sbr.rel (%p10) target = $region8
  $region5: #{lenet_forward.3} parent=0 // loop_body
    %s14 = ssub.s32 %s9, 1
    %s15 = ssub.s32 %s9, 2
    %s16 = sadd.s32 %s9, 1
    %s17 = ssub.s32 %s9, %s16
    %p18 = scmp.eq.s32.totalorder %s17, 0
    %s20 = sadd.s32 %s19, 1
    %s21 = scalar_select %p18, %s19, %s20
    %p24 = pneg %p18
    %p25 = scmp.eq.s32.totalorder %s9, 1
    %p26 = por %p24, %p25
    %p27 = scmp.ne.s32.totalorder %s19, %s22
    %p28 = scmp.eq.s32.totalorder %s9, 0
    %p29 = por %p27, %p28
    %p30 = scmp.ne.s32.totalorder %s19, %s22
    %p31 = scmp.eq.s32.totalorder %s14, 1
    %p32 = por %p30, %p31
    %p33 = scmp.ne.s32.totalorder %s22, %s23
    %p34 = scmp.eq.s32.totalorder %s14, 0
    %p35 = por %p33, %p34
    %p36 = scmp.ne.s32.totalorder %s22, %s23
    %p37 = scmp.eq.s32.totalorder %s15, 1
    %p38 = por %p36, %p37
    %p40 = scmp.ne.s32.totalorder %s23, %s39
    %p41 = scmp.eq.s32.totalorder %s15, 0
    %p42 = por %p40, %p41
    %s44 = sadd.s32 %s43, 1
    %p47 = scmp.eq.s32.totalorder %s9, 1
    %p48 = scmp.ne.s32.totalorder %s43, %s45
    %p49 = scmp.eq.s32.totalorder %s9, 0
    %p50 = por %p48, %p49
    %p51 = scmp.ne.s32.totalorder %s43, %s45
    %p52 = scmp.eq.s32.totalorder %s14, 1
    %p53 = por %p51, %p52
    %p54 = scmp.ne.s32.totalorder %s45, %s46
    %p55 = scmp.eq.s32.totalorder %s14, 0
    %p56 = por %p54, %p55
    %p57 = scmp.ne.s32.totalorder %s45, %s46
    %p58 = scmp.eq.s32.totalorder %s15, 1
    %p59 = por %p57, %p58
    %p61 = scmp.ne.s32.totalorder %s46, %s60
    %p62 = scmp.eq.s32.totalorder %s15, 0
    %p63 = por %p61, %p62
    %s65 = sadd.s32 %s64, 1
    %p68 = scmp.eq.s32.totalorder %s9, 1
    %p69 = scmp.ne.s32.totalorder %s64, %s66
    %p70 = scmp.eq.s32.totalorder %s9, 0
    %p71 = por %p69, %p70
    %p72 = scmp.ne.s32.totalorder %s64, %s66
    %p73 = scmp.eq.s32.totalorder %s14, 1
    %p74 = por %p72, %p73
    %p75 = scmp.ne.s32.totalorder %s66, %s67
    %p76 = scmp.eq.s32.totalorder %s14, 0
    %p77 = por %p75, %p76
    %p78 = scmp.ne.s32.totalorder %s66, %s67
    %p79 = scmp.eq.s32.totalorder %s15, 1
    %p80 = por %p78, %p79
    %p82 = scmp.ne.s32.totalorder %s67, %s81
    %p83 = scmp.eq.s32.totalorder %s15, 0
    %p84 = por %p82, %p83
    %s85 = ssub.s32 %s9, %s16
    %p86 = scmp.eq.s32.totalorder %s85, 0
    %s88 = sadd.s32 %s87, 1
    %s89 = scalar_select %p86, %s87, %s88
    %p92 = pneg %p86
    %p93 = scmp.eq.s32.totalorder %s9, 1
    %p94 = por %p92, %p93
    %p95 = scmp.ne.s32.totalorder %s87, %s90
    %p96 = scmp.eq.s32.totalorder %s9, 0
    %p97 = por %p95, %p96
    %p98 = scmp.ne.s32.totalorder %s87, %s90
    %p99 = scmp.eq.s32.totalorder %s14, 1
    %p100 = por %p98, %p99
    %p101 = scmp.ne.s32.totalorder %s90, %s91
    %p102 = scmp.eq.s32.totalorder %s14, 0
    %p103 = por %p101, %p102
    %p104 = scmp.ne.s32.totalorder %s90, %s91
    %p105 = scmp.eq.s32.totalorder %s15, 1
    %p106 = por %p104, %p105
    %p108 = scmp.ne.s32.totalorder %s91, %s107
    %p109 = scmp.eq.s32.totalorder %s15, 0
    %p110 = por %p108, %p109
    %p111 = scmp.le.s32.totalorder 1, %s9
    %p112 = scmp.lt.s32.totalorder %s9, 3
    %p113 = pnand %p111, %p112
    %p114 = pneg %p113
    // Predicated region
    $region9: #{lenet_forward.3} parent=5 // pred_check
      _
    $region10: #{lenet_forward.3} parent=5 // pred_check_branch
      %116 = sbr.rel (%p113) target = $region12
    $region11: #{lenet_forward.3} parent=5 // pred_region
      %s117 = ssub.s32 %s9, 1
      // Predicated region
      $region13: #{lenet_forward.3} parent=11 // pred_check
        %p118 = pneg %p56
      $region14: #{lenet_forward.3} parent=11 // pred_check_branch
        %120 = sbr.rel (%p118) target = $region16
      $region15: #{lenet_forward.3} parent=11 // pred_region
        _
      $region16: #{lenet_forward.3} parent=11 // pred_fallthru
        _
      // Predicated region
      $region17: #{lenet_forward.3} parent=11 // pred_check
        %p121 = pneg %p77
      $region18: #{lenet_forward.3} parent=11 // pred_check_branch
        %123 = sbr.rel (%p121) target = $region20
      $region19: #{lenet_forward.3} parent=11 // pred_region
        _
      $region20: #{lenet_forward.3} parent=11 // pred_fallthru
        _
    $region12: #{lenet_forward.3} parent=5 // pred_fallthru
      _
    %p124 = scmp.lt.s32.totalorder %s9, 2
    // Predicated region
    $region21: #{lenet_forward.3} parent=5 // pred_check
      %p125 = pneg %p124
    $region22: #{lenet_forward.3} parent=5 // pred_check_branch
      %127 = sbr.rel (%p125) target = $region24
    $region23: #{lenet_forward.3} parent=5 // pred_region
      // Predicated region
      $region25: #{lenet_forward.3} parent=23 // pred_check
        %p128 = pneg %p29
      $region26: #{lenet_forward.3} parent=23 // pred_check_branch
        %130 = sbr.rel (%p128) target = $region28
      $region27: #{lenet_forward.3} parent=23 // pred_region
        %p131 = scmp.lt.s32.totalorder %s9, 1
        %s132 = scalar_select %p131, %s9, 1
        %s133 = smul.addr %s132, 100
        %s134 = smul.addr %s133, 4
        %s135 = scalar_lea.vmem %s0, %s134
      $region28: #{lenet_forward.3} parent=23 // pred_fallthru
        _
    $region24: #{lenet_forward.3} parent=5 // pred_fallthru
      _
    %p136 = scmp.le.s32.totalorder 1, %s9
    %p137 = scmp.lt.s32.totalorder %s9, 3
    %p138 = pnand %p136, %p137
    %p139 = pneg %p138
    // Predicated region
    $region29: #{lenet_forward.3} parent=5 // pred_check
      _
    $region30: #{lenet_forward.3} parent=5 // pred_check_branch
      %141 = sbr.rel (%p138) target = $region32
    $region31: #{lenet_forward.3} parent=5 // pred_region
      %s142 = ssub.s32 %s9, 1
      %p143 = scmp.lt.s32.totalorder %s14, 1
      %s144 = scalar_select %p143, %s14, 1
      %s145 = smul.addr %s144, 100
      %s146 = smul.addr %s145, 4
      %s147 = scalar_lea.vmem %s0, %s146
      %p148 = pneg %p35
      %p149 = pneg %p32
      %p150 = pneg %p56
      %p151 = pneg %p53
      %p152 = pneg %p77
      %p153 = pneg %p74
      %p154 = pneg %p103
      %p155 = pneg %p100
      %p156 = scmp.lt.s32.totalorder %s14, 1
      %s157 = scalar_select %p156, %s14, 1
      %s158 = smul.addr %s157, 25
      %s159 = smul.addr %s158, 4
      %s160 = scalar_lea.vmem %s3, %s159
      %p161 = scmp.lt.s32.totalorder %s14, 1
      %s162 = scalar_select %p161, %s14, 1
      %s163 = smul.addr %s162, 100
      %s164 = smul.addr %s163, 4
      %s165 = scalar_lea.vmem %s0, %s164
      %p166 = scmp.lt.s32.totalorder %s14, 1
      %s167 = scalar_select %p166, %s14, 1
      %s168 = smul.addr %s167, 25
      %s169 = smul.addr %s168, 4
      %s170 = scalar_lea.vmem %s3, %s169
      %v172 = vld [vmem:[%s165] sm:$0xf]
      %v173 = vld [vmem:[%s165 + $0x4] sm:$0xf]
      %v174 = vld [vmem:[%s165 + $0x8] sm:$0xf]
      %v175 = vld [vmem:[%s165 + $0xc] sm:$0xf]
      %v176 = vld [vmem:[%s165 + $0x10] sm:$0xf]
      %v177 = vld [vmem:[%s165 + $0x14] sm:$0xf]
      %v178 = vld [vmem:[%s165 + $0x18] sm:$0xf]
      %v179 = vld [vmem:[%s165 + $0x1c] sm:$0xf]
      %v180 = vld [vmem:[%s165 + $0x20] sm:$0xf]
      %v181 = vld [vmem:[%s165 + $0x24] sm:$0xf]
      %v182 = vld [vmem:[%s165 + $0x28] sm:$0xf]
      %v183 = vld [vmem:[%s165 + $0x2c] sm:$0xf]
      %v184 = vld [vmem:[%s165 + $0x30] sm:$0xf]
      %v185 = vld [vmem:[%s165 + $0x34] sm:$0xf]
      %v186 = vld [vmem:[%s165 + $0x38] sm:$0xf]
      %v187 = vld [vmem:[%s165 + $0x3c] sm:$0xf]
      %v188 = vld [vmem:[%s165 + $0x40] sm:$0xf]
      %v189 = vld [vmem:[%s165 + $0x44] sm:$0xf]
      %v190 = vld [vmem:[%s165 + $0x48] sm:$0xf]
      %v191 = vld [vmem:[%s165 + $0x4c] sm:$0xf]
      %v192 = vld [vmem:[%s165 + $0x50] sm:$0xf]
      %v193 = vld [vmem:[%s165 + $0x54] sm:$0xf]
      %v194 = vld [vmem:[%s165 + $0x58] sm:$0xf]
      %v195 = vld [vmem:[%s165 + $0x5c] sm:$0xf]
      %v196 = vld [vmem:[%s165 + $0x60] sm:$0xf]
      %v197 = vld [vmem:[%s165 + $0x64] sm:$0xf]
      %v198 = vld [vmem:[%s165 + $0x68] sm:$0xf]
      %v199 = vld [vmem:[%s165 + $0x6c] sm:$0xf]
      %v200 = vld [vmem:[%s165 + $0x70] sm:$0xf]
      %v201 = vld [vmem:[%s165 + $0x74] sm:$0xf]
      %v202 = vld [vmem:[%s165 + $0x78] sm:$0xf]
      %v203 = vld [vmem:[%s165 + $0x7c] sm:$0xf]
      %v204 = vld [vmem:[%s165 + $0x80] sm:$0xf]
      %v205 = vld [vmem:[%s165 + $0x84] sm:$0xf]
      %v206 = vld [vmem:[%s165 + $0x88] sm:$0xf]
      %v207 = vld [vmem:[%s165 + $0x8c] sm:$0xf]
      %v208 = vld [vmem:[%s165 + $0x90] sm:$0xf]
      %v209 = vld [vmem:[%s165 + $0x94] sm:$0xf]
      %v210 = vld [vmem:[%s165 + $0x98] sm:$0xf]
      %v211 = vld [vmem:[%s165 + $0x9c] sm:$0xf]
      %v212 = vld [vmem:[%s165 + $0xa0] sm:$0xf]
      %v213 = vld [vmem:[%s165 + $0xa4] sm:$0xf]
      %v214 = vld [vmem:[%s165 + $0xa8] sm:$0xf]
      %v215 = vld [vmem:[%s165 + $0xac] sm:$0xf]
      %v216 = vld [vmem:[%s165 + $0xb0] sm:$0xf]
      %v217 = vld [vmem:[%s165 + $0xb4] sm:$0xf]
      %v218 = vld [vmem:[%s165 + $0xb8] sm:$0xf]
      %v219 = vld [vmem:[%s165 + $0xbc] sm:$0xf]
      %v220 = vld [vmem:[%s165 + $0xc0] sm:$0xf]
      %v221 = vld [vmem:[%s165 + $0xc4] sm:$0xf]
      %v222 = vld [vmem:[%s165 + $0xc8] sm:$0xf]
      %v223 = vld [vmem:[%s165 + $0xcc] sm:$0xf]
      %v224 = vld [vmem:[%s165 + $0xd0] sm:$0xf]
      %v225 = vld [vmem:[%s165 + $0xd4] sm:$0xf]
      %v226 = vld [vmem:[%s165 + $0xd8] sm:$0xf]
      %v227 = vld [vmem:[%s165 + $0xdc] sm:$0xf]
      %v228 = vld [vmem:[%s165 + $0xe0] sm:$0xf]
      %v229 = vld [vmem:[%s165 + $0xe4] sm:$0xf]
      %v230 = vld [vmem:[%s165 + $0xe8] sm:$0xf]
      %v231 = vld [vmem:[%s165 + $0xec] sm:$0xf]
      %v232 = vld [vmem:[%s165 + $0xf0] sm:$0xf]
      %v233 = vld [vmem:[%s165 + $0xf4] sm:$0xf]
      %v234 = vld [vmem:[%s165 + $0xf8] sm:$0xf]
      %v235 = vld [vmem:[%s165 + $0xfc] sm:$0xf]
      %v236 = vld [vmem:[%s165 + $0x100] sm:$0xf]
      %v237 = vld [vmem:[%s165 + $0x104] sm:$0xf]
      %v238 = vld [vmem:[%s165 + $0x108] sm:$0xf]
      %v239 = vld [vmem:[%s165 + $0x10c] sm:$0xf]
      %v240 = vld [vmem:[%s165 + $0x110] sm:$0xf]
      %v241 = vld [vmem:[%s165 + $0x114] sm:$0xf]
      %v242 = vld [vmem:[%s165 + $0x118] sm:$0xf]
      %v243 = vld [vmem:[%s165 + $0x11c] sm:$0xf]
      %v244 = vld [vmem:[%s165 + $0x120] sm:$0xf]
      %v245 = vld [vmem:[%s165 + $0x124] sm:$0xf]
      %v246 = vld [vmem:[%s165 + $0x128] sm:$0xf]
      %v247 = vld [vmem:[%s165 + $0x12c] sm:$0xf]
      %v248 = vld [vmem:[%s165 + $0x130] sm:$0xf]
      %v249 = vld [vmem:[%s165 + $0x134] sm:$0xf]
      %v250 = vld [vmem:[%s165 + $0x138] sm:$0xf]
      %v251 = vld [vmem:[%s165 + $0x13c] sm:$0xf]
      %v252 = vld [vmem:[%s165 + $0x140] sm:$0xf]
      %v253 = vld [vmem:[%s165 + $0x144] sm:$0xf]
      %v254 = vld [vmem:[%s165 + $0x148] sm:$0xf]
      %v255 = vld [vmem:[%s165 + $0x14c] sm:$0xf]
      %v256 = vld [vmem:[%s165 + $0x150] sm:$0xf]
      %v257 = vld [vmem:[%s165 + $0x154] sm:$0xf]
      %v258 = vld [vmem:[%s165 + $0x158] sm:$0xf]
      %v259 = vld [vmem:[%s165 + $0x15c] sm:$0xf]
      %v260 = vld [vmem:[%s165 + $0x160] sm:$0xf]
      %v261 = vld [vmem:[%s165 + $0x164] sm:$0xf]
      %v262 = vld [vmem:[%s165 + $0x168] sm:$0xf]
      %v263 = vld [vmem:[%s165 + $0x16c] sm:$0xf]
      %v264 = vld [vmem:[%s165 + $0x170] sm:$0xf]
      %v265 = vld [vmem:[%s165 + $0x174] sm:$0xf]
      %v266 = vld [vmem:[%s165 + $0x178] sm:$0xf]
      %v267 = vld [vmem:[%s165 + $0x17c] sm:$0xf]
      %v268 = vld [vmem:[%s165 + $0x180] sm:$0xf]
      %v269 = vld [vmem:[%s165 + $0x184] sm:$0xf]
      %v270 = vld [vmem:[%s165 + $0x188] sm:$0xf]
      %v271 = vld [vmem:[%s165 + $0x18c] sm:$0xf]
      %v272 = vld [vmem:[%s1] sm:$0xf]
      %v273 = vld [vmem:[%s1 + $0x4] sm:$0xf]
      %v274 = vld [vmem:[%s1 + $0x8] sm:$0xf]
      %v275 = vld [vmem:[%s1 + $0xc] sm:$0xf]
      %v276 = vld [vmem:[%s1 + $0x10] sm:$0xf]
      %v277 = vld [vmem:[%s1 + $0x14] sm:$0xf]
      %v278 = vld [vmem:[%s1 + $0x18] sm:$0xf]
      %v279 = vld [vmem:[%s1 + $0x1c] sm:$0xf]
      %v280 = vld [vmem:[%s1 + $0x20] sm:$0xf]
      %v281 = vld [vmem:[%s1 + $0x24] sm:$0xf]
      %v282 = vld [vmem:[%s1 + $0x28] sm:$0xf]
      %v283 = vld [vmem:[%s1 + $0x2c] sm:$0xf]
      %v284 = vld [vmem:[%s1 + $0x30] sm:$0xf]
      %v285 = vld [vmem:[%s1 + $0x34] sm:$0xf]
      %v286 = vld [vmem:[%s1 + $0x38] sm:$0xf]
      %v287 = vld [vmem:[%s1 + $0x3c] sm:$0xf]
      %v388 = vunpack.c.l.b16 %v172
      %v389 = vunpack.c.l.b16 %v173
      %v390 = vunpack.c.l.b16 %v174
      %v391 = vunpack.c.l.b16 %v175
      %v392 = vunpack.c.l.b16 %v176
      %v393 = vunpack.c.l.b16 %v177
      %v394 = vunpack.c.l.b16 %v178
      %v395 = vunpack.c.l.b16 %v179
      %v396 = vunpack.c.l.b16 %v180
      %v397 = vunpack.c.l.b16 %v181
      %v398 = vunpack.c.l.b16 %v182
      %v399 = vunpack.c.l.b16 %v183
      %v400 = vunpack.c.l.b16 %v184
      %v401 = vunpack.c.l.b16 %v185
      %v402 = vunpack.c.l.b16 %v186
      %v403 = vunpack.c.l.b16 %v187
      %v404 = vunpack.c.l.b16 %v188
      %v405 = vunpack.c.l.b16 %v189
      %v406 = vunpack.c.l.b16 %v190
      %v407 = vunpack.c.l.b16 %v191
      %v408 = vunpack.c.l.b16 %v192
      %v409 = vunpack.c.l.b16 %v193
      %v410 = vunpack.c.l.b16 %v194
      %v411 = vunpack.c.l.b16 %v195
      %v412 = vunpack.c.l.b16 %v196
      %v413 = vunpack.c.l.b16 %v197
      %v414 = vunpack.c.l.b16 %v198
      %v415 = vunpack.c.l.b16 %v199
      %v416 = vunpack.c.l.b16 %v200
      %v417 = vunpack.c.l.b16 %v201
      %v418 = vunpack.c.l.b16 %v202
      %v419 = vunpack.c.l.b16 %v203
      %v420 = vunpack.c.l.b16 %v204
      %v421 = vunpack.c.l.b16 %v205
      %v422 = vunpack.c.l.b16 %v206
      %v423 = vunpack.c.l.b16 %v207
      %v424 = vunpack.c.l.b16 %v208
      %v425 = vunpack.c.l.b16 %v209
      %v426 = vunpack.c.l.b16 %v210
      %v427 = vunpack.c.l.b16 %v211
      %v428 = vunpack.c.l.b16 %v212
      %v429 = vunpack.c.l.b16 %v213
      %v430 = vunpack.c.l.b16 %v214
      %v431 = vunpack.c.l.b16 %v215
      %v432 = vunpack.c.l.b16 %v216
      %v433 = vunpack.c.l.b16 %v217
      %v434 = vunpack.c.l.b16 %v218
      %v435 = vunpack.c.l.b16 %v219
      %v436 = vunpack.c.l.b16 %v220
      %v437 = vunpack.c.l.b16 %v221
      %v438 = vunpack.c.l.b16 %v222
      %v439 = vunpack.c.l.b16 %v223
      %v440 = vunpack.c.l.b16 %v224
      %v441 = vunpack.c.l.b16 %v225
      %v442 = vunpack.c.l.b16 %v226
      %v443 = vunpack.c.l.b16 %v227
      %v444 = vunpack.c.l.b16 %v228
      %v445 = vunpack.c.l.b16 %v229
      %v446 = vunpack.c.l.b16 %v230
      %v447 = vunpack.c.l.b16 %v231
      %v448 = vunpack.c.l.b16 %v232
      %v449 = vunpack.c.l.b16 %v233
      %v450 = vunpack.c.l.b16 %v234
      %v451 = vunpack.c.l.b16 %v235
      %v452 = vunpack.c.l.b16 %v236
      %v453 = vunpack.c.l.b16 %v237
      %v454 = vunpack.c.l.b16 %v238
      %v455 = vunpack.c.l.b16 %v239
      %v456 = vunpack.c.l.b16 %v240
      %v457 = vunpack.c.l.b16 %v241
      %v458 = vunpack.c.l.b16 %v242
      %v459 = vunpack.c.l.b16 %v243
      %v460 = vunpack.c.l.b16 %v244
      %v461 = vunpack.c.l.b16 %v245
      %v462 = vunpack.c.l.b16 %v246
      %v463 = vunpack.c.l.b16 %v247
      %v464 = vunpack.c.l.b16 %v248
      %v465 = vunpack.c.l.b16 %v249
      %v466 = vunpack.c.l.b16 %v250
      %v467 = vunpack.c.l.b16 %v251
      %v468 = vunpack.c.l.b16 %v252
      %v469 = vunpack.c.l.b16 %v253
      %v470 = vunpack.c.l.b16 %v254
      %v471 = vunpack.c.l.b16 %v255
      %v472 = vunpack.c.l.b16 %v256
      %v473 = vunpack.c.l.b16 %v257
      %v474 = vunpack.c.l.b16 %v258
      %v475 = vunpack.c.l.b16 %v259
      %v476 = vunpack.c.l.b16 %v260
      %v477 = vunpack.c.l.b16 %v261
      %v478 = vunpack.c.l.b16 %v262
      %v479 = vunpack.c.l.b16 %v263
      %v480 = vunpack.c.l.b16 %v264
      %v481 = vunpack.c.l.b16 %v265
      %v482 = vunpack.c.l.b16 %v266
      %v483 = vunpack.c.l.b16 %v267
      %v484 = vunpack.c.l.b16 %v268
      %v485 = vunpack.c.l.b16 %v269
      %v486 = vunpack.c.l.b16 %v270
      %v487 = vunpack.c.l.b16 %v271
      %v488 = vpack.c.b16 %v389, %v388
      %v489 = vpack.c.b16 %v391, %v390
      %v490 = vpack.c.b16 %v393, %v392
      %v491 = vpack.c.b16 %v395, %v394
      %v492 = vpack.c.b16 %v397, %v396
      %v493 = vpack.c.b16 %v399, %v398
      %v494 = vpack.c.b16 %v401, %v400
      %v495 = vpack.c.b16 %v403, %v402
      %v496 = vpack.c.b16 %v405, %v404
      %v497 = vpack.c.b16 %v407, %v406
      %v498 = vpack.c.b16 %v409, %v408
      %v499 = vpack.c.b16 %v411, %v410
      %v500 = vpack.c.b16 %v413, %v412
      %v501 = vpack.c.b16 %v415, %v414
      %v502 = vpack.c.b16 %v417, %v416
      %v503 = vpack.c.b16 %v419, %v418
      %v504 = vpack.c.b16 %v421, %v420
      %v505 = vpack.c.b16 %v423, %v422
      %v506 = vpack.c.b16 %v425, %v424
      %v507 = vpack.c.b16 %v427, %v426
      %v508 = vpack.c.b16 %v429, %v428
      %v509 = vpack.c.b16 %v431, %v430
      %v510 = vpack.c.b16 %v433, %v432
      %v511 = vpack.c.b16 %v435, %v434
      %v512 = vpack.c.b16 %v437, %v436
      %v513 = vpack.c.b16 %v439, %v438
      %v514 = vpack.c.b16 %v441, %v440
      %v515 = vpack.c.b16 %v443, %v442
      %v516 = vpack.c.b16 %v445, %v444
      %v517 = vpack.c.b16 %v447, %v446
      %v518 = vpack.c.b16 %v449, %v448
      %v519 = vpack.c.b16 %v451, %v450
      %v520 = vpack.c.b16 %v453, %v452
      %v521 = vpack.c.b16 %v455, %v454
      %v522 = vpack.c.b16 %v457, %v456
      %v523 = vpack.c.b16 %v459, %v458
      %v524 = vpack.c.b16 %v461, %v460
      %v525 = vpack.c.b16 %v463, %v462
      %v526 = vpack.c.b16 %v465, %v464
      %v527 = vpack.c.b16 %v467, %v466
      %v528 = vpack.c.b16 %v469, %v468
      %v529 = vpack.c.b16 %v471, %v470
      %v530 = vpack.c.b16 %v473, %v472
      %v531 = vpack.c.b16 %v475, %v474
      %v532 = vpack.c.b16 %v477, %v476
      %v533 = vpack.c.b16 %v479, %v478
      %v534 = vpack.c.b16 %v481, %v480
      %v535 = vpack.c.b16 %v483, %v482
      %v536 = vpack.c.b16 %v485, %v484
      %v537 = vpack.c.b16 %v487, %v486
      %v604 = vunpack.c.l.b16 %v272
      %v605 = vunpack.c.l.b16 %v273
      %v606 = vunpack.c.l.b16 %v274
      %v607 = vunpack.c.l.b16 %v275
      %v608 = vunpack.c.l.b16 %v276
      %v609 = vunpack.c.l.b16 %v277
      %v610 = vunpack.c.l.b16 %v278
      %v611 = vunpack.c.l.b16 %v279
      %v612 = vunpack.c.l.b16 %v280
      %v613 = vunpack.c.l.b16 %v281
      %v614 = vunpack.c.l.b16 %v282
      %v615 = vunpack.c.l.b16 %v283
      %v616 = vunpack.c.l.b16 %v284
      %v617 = vunpack.c.l.b16 %v285
      %v618 = vunpack.c.l.b16 %v286
      %v619 = vunpack.c.l.b16 %v287
      %v620 = vpack.c.b16 %v605, %v604
      %v621 = vpack.c.b16 %v607, %v606
      %v622 = vpack.c.b16 %v609, %v608
      %v623 = vpack.c.b16 %v611, %v610
      %v624 = vpack.c.b16 %v613, %v612
      %v625 = vpack.c.b16 %v615, %v614
      %v626 = vpack.c.b16 %v617, %v616
      %v627 = vpack.c.b16 %v619, %v618
      %636 = vmatprep.subr.bf16.mxu0 0
      %637 = vmatpush1.bf16.msra.mxu0 %v620
      %638 = vmatprep.subr.bf16.mxu0 0
      %639 = vmatpush1.bf16.msra.mxu0 %v621
      %640 = vmatprep.subr.bf16.mxu0 0
      %641 = vmatpush1.bf16.msra.mxu0 %v622
      %642 = vmatprep.subr.bf16.mxu0 0
      %643 = vmatpush1.bf16.msra.mxu0 %v623
      %644 = vmatprep.subr.bf16.mxu0 0
      %645 = vmatpush1.bf16.msra.mxu0 %v624
      %646 = vmatprep.subr.bf16.mxu0 0
      %647 = vmatpush1.bf16.msra.mxu0 %v625
      %648 = vmatprep.subr.bf16.mxu0 0
      %649 = vmatpush1.bf16.msra.mxu0 %v626
      %650 = vmatprep.subr.bf16.mxu0 0
      %651 = vmatpush1.bf16.msra.mxu0 %v627
      %652 = vmatprep.subr.bf16.mxu0 0
      %653 = vmatpush1.bf16.msra.mxu0 0
      %654 = vmatprep.subr.bf16.mxu0 0
      %655 = vmatpush1.bf16.msra.mxu0 0
      %656 = vmatprep.subr.bf16.mxu0 0
      %657 = vmatpush1.bf16.msra.mxu0 0
      %658 = vmatprep.subr.bf16.mxu0 0
      %659 = vmatpush1.bf16.msra.mxu0 0
      %660 = vmatprep.subr.bf16.mxu0 0
      %661 = vmatpush1.bf16.msra.mxu0 0
      %662 = vmatprep.subr.bf16.mxu0 0
      %663 = vmatpush1.bf16.msra.mxu0 0
      %664 = vmatprep.subr.bf16.mxu0 0
      %665 = vmatpush1.bf16.msra.mxu0 0
      %666 = vmatprep.subr.bf16.mxu0 0
      %667 = vmatpush1.bf16.msra.mxu0 0
      %668 = vmatprep.mubr.bf16.mxu0 0
      %669 = vmatmul.mubr.bf16.gmra.mrb[0].mxu0 %v488
      %v670 = vpop.f32.mrb[0].mxu0
      %v671 = vadd.f32 0.0, %v670
      %v672 = vpop.f32.mrb[0].mxu0
      %v673 = vpop.f32.mrb[0].mxu0
      %v674 = vadd.f32 0.0, %v673
      %v675 = vpop.f32.mrb[0].mxu0
      %676 = vmatprep.mubr.bf16.mxu0 0
      %677 = vmatmul.mubr.bf16.gmra.mrb[0].mxu0 %v489
      %v678 = vpop.f32.mrb[0].mxu0
      %v679 = vadd.f32 0.0, %v678
      %v680 = vpop.f32.mrb[0].mxu0
      %v681 = vpop.f32.mrb[0].mxu0
      %v682 = vadd.f32 0.0, %v681
      %v683 = vpop.f32.mrb[0].mxu0
      %684 = vmatprep.mubr.bf16.mxu0 0
      %685 = vmatmul.mubr.bf16.gmra.mrb[0].mxu0 %v490
      %v686 = vpop.f32.mrb[0].mxu0
      %v687 = vadd.f32 0.0, %v686
      %v688 = vpop.f32.mrb[0].mxu0
      %v689 = vpop.f32.mrb[0].mxu0
      %v690 = vadd.f32 0.0, %v689
      %v691 = vpop.f32.mrb[0].mxu0
      %692 = vmatprep.mubr.bf16.mxu0 0
      %693 = vmatmul.mubr.bf16.gmra.mrb[0].mxu0 %v491
      %v694 = vpop.f32.mrb[0].mxu0
      %v695 = vadd.f32 0.0, %v694
      %v696 = vpop.f32.mrb[0].mxu0
      %v697 = vpop.f32.mrb[0].mxu0
      %v698 = vadd.f32 0.0, %v697
      %v699 = vpop.f32.mrb[0].mxu0
      %700 = vmatprep.mubr.bf16.mxu0 0
      %701 = vmatmul.mubr.bf16.gmra.mrb[0].mxu0 %v492
      %v702 = vpop.f32.mrb[0].mxu0
      %v703 = vadd.f32 0.0, %v702
      %v704 = vpop.f32.mrb[0].mxu0
      %v705 = vpop.f32.mrb[0].mxu0
      %v706 = vadd.f32 0.0, %v705
      %v707 = vpop.f32.mrb[0].mxu0
      %708 = vmatprep.mubr.bf16.mxu0 0
      %709 = vmatmul.mubr.bf16.gmra.mrb[0].mxu0 %v493
      %v710 = vpop.f32.mrb[0].mxu0
      %v711 = vadd.f32 0.0, %v710
      %v712 = vpop.f32.mrb[0].mxu0
      %v713 = vpop.f32.mrb[0].mxu0
      %v714 = vadd.f32 0.0, %v713
      %v715 = vpop.f32.mrb[0].mxu0
      %716 = vmatprep.mubr.bf16.mxu0 0
      %717 = vmatmul.mubr.bf16.gmra.mrb[0].mxu0 %v494
      %v718 = vpop.f32.mrb[0].mxu0
      %v719 = vadd.f32 0.0, %v718
      %v720 = vpop.f32.mrb[0].mxu0
      %v721 = vpop.f32.mrb[0].mxu0
      %v722 = vadd.f32 0.0, %v721
      %v723 = vpop.f32.mrb[0].mxu0
      %724 = vmatprep.mubr.bf16.mxu0 0
      %725 = vmatmul.mubr.bf16.gmra.mrb[0].mxu0 %v495
      %v726 = vpop.f32.mrb[0].mxu0
      %v727 = vadd.f32 0.0, %v726
      %v728 = vpop.f32.mrb[0].mxu0
      %v729 = vpop.f32.mrb[0].mxu0
      %v730 = vadd.f32 0.0, %v729
      %v731 = vpop.f32.mrb[0].mxu0
      %732 = vmatprep.mubr.bf16.mxu0 0
      %733 = vmatmul.mubr.bf16.gmra.mrb[0].mxu0 %v496
      %v734 = vpop.f32.mrb[0].mxu0
      %v735 = vadd.f32 0.0, %v734
      %v736 = vpop.f32.mrb[0].mxu0
      %v737 = vpop.f32.mrb[0].mxu0
      %v738 = vadd.f32 0.0, %v737
      %v739 = vpop.f32.mrb[0].mxu0
      %740 = vmatprep.mubr.bf16.mxu0 0
      %741 = vmatmul.mubr.bf16.gmra.mrb[0].mxu0 %v497
      %v742 = vpop.f32.mrb[0].mxu0
      %v743 = vadd.f32 0.0, %v742
      %v744 = vpop.f32.mrb[0].mxu0
      %v745 = vpop.f32.mrb[0].mxu0
      %v746 = vadd.f32 0.0, %v745
      %v747 = vpop.f32.mrb[0].mxu0
      %748 = vmatprep.mubr.bf16.mxu0 0
      %749 = vmatmul.mubr.bf16.gmra.mrb[0].mxu0 %v498
      %v750 = vpop.f32.mrb[0].mxu0
      %v751 = vadd.f32 0.0, %v750
      %v752 = vpop.f32.mrb[0].mxu0
      %v753 = vpop.f32.mrb[0].mxu0
      %v754 = vadd.f32 0.0, %v753
      %v755 = vpop.f32.mrb[0].mxu0
      %756 = vmatprep.mubr.bf16.mxu0 0
      %757 = vmatmul.mubr.bf16.gmra.mrb[0].mxu0 %v499
      %v758 = vpop.f32.mrb[0].mxu0
      %v759 = vadd.f32 0.0, %v758
      %v760 = vpop.f32.mrb[0].mxu0
      %v761 = vpop.f32.mrb[0].mxu0
      %v762 = vadd.f32 0.0, %v761
      %v763 = vpop.f32.mrb[0].mxu0
      %764 = vmatprep.mubr.bf16.mxu0 0
      %765 = vmatmul.mubr.bf16.gmra.mrb[0].mxu0 %v500
      %v766 = vpop.f32.mrb[0].mxu0
      %v767 = vadd.f32 0.0, %v766
      %v768 = vpop.f32.mrb[0].mxu0
      %v769 = vpop.f32.mrb[0].mxu0
      %v770 = vadd.f32 0.0, %v769
      %v771 = vpop.f32.mrb[0].mxu0
      %772 = vmatprep.mubr.bf16.mxu0 0
      %773 = vmatmul.mubr.bf16.gmra.mrb[0].mxu0 %v501
      %v774 = vpop.f32.mrb[0].mxu0
      %v775 = vadd.f32 0.0, %v774
      %v776 = vpop.f32.mrb[0].mxu0
      %v777 = vpop.f32.mrb[0].mxu0
      %v778 = vadd.f32 0.0, %v777
      %v779 = vpop.f32.mrb[0].mxu0
      %780 = vmatprep.mubr.bf16.mxu0 0
      %781 = vmatmul.mubr.bf16.gmra.mrb[0].mxu0 %v502
      %v782 = vpop.f32.mrb[0].mxu0
      %v783 = vadd.f32 0.0, %v782
      %v784 = vpop.f32.mrb[0].mxu0
      %v785 = vpop.f32.mrb[0].mxu0
      %v786 = vadd.f32 0.0, %v785
      %v787 = vpop.f32.mrb[0].mxu0
      %788 = vmatprep.mubr.bf16.mxu0 0
      %789 = vmatmul.mubr.bf16.gmra.mrb[0].mxu0 %v503
      %v790 = vpop.f32.mrb[0].mxu0
      %v791 = vadd.f32 0.0, %v790
      %v792 = vpop.f32.mrb[0].mxu0
      %v793 = vpop.f32.mrb[0].mxu0
      %v794 = vadd.f32 0.0, %v793
      %v795 = vpop.f32.mrb[0].mxu0
      %796 = vmatprep.mubr.bf16.mxu0 0
      %797 = vmatmul.mubr.bf16.gmra.mrb[0].mxu0 %v504
      %v798 = vpop.f32.mrb[0].mxu0
      %v799 = vadd.f32 0.0, %v798
      %v800 = vpop.f32.mrb[0].mxu0
      %v801 = vpop.f32.mrb[0].mxu0
      %v802 = vadd.f32 0.0, %v801
      %v803 = vpop.f32.mrb[0].mxu0
      %804 = vmatprep.mubr.bf16.mxu0 0
      %805 = vmatmul.mubr.bf16.gmra.mrb[0].mxu0 %v505
      %v806 = vpop.f32.mrb[0].mxu0
      %v807 = vadd.f32 0.0, %v806
      %v808 = vpop.f32.mrb[0].mxu0
      %v809 = vpop.f32.mrb[0].mxu0
      %v810 = vadd.f32 0.0, %v809
      %v811 = vpop.f32.mrb[0].mxu0
      %812 = vmatprep.mubr.bf16.mxu0 0
      %813 = vmatmul.mubr.bf16.gmra.mrb[0].mxu0 %v506
      %v814 = vpop.f32.mrb[0].mxu0
      %v815 = vadd.f32 0.0, %v814
      %v816 = vpop.f32.mrb[0].mxu0
      %v817 = vpop.f32.mrb[0].mxu0
      %v818 = vadd.f32 0.0, %v817
      %v819 = vpop.f32.mrb[0].mxu0
      %820 = vmatprep.mubr.bf16.mxu0 0
      %821 = vmatmul.mubr.bf16.gmra.mrb[0].mxu0 %v507
      %v822 = vpop.f32.mrb[0].mxu0
      %v823 = vadd.f32 0.0, %v822
      %v824 = vpop.f32.mrb[0].mxu0
      %v825 = vpop.f32.mrb[0].mxu0
      %v826 = vadd.f32 0.0, %v825
      %v827 = vpop.f32.mrb[0].mxu0
      %828 = vmatprep.mubr.bf16.mxu0 0
      %829 = vmatmul.mubr.bf16.gmra.mrb[0].mxu0 %v508
      %v830 = vpop.f32.mrb[0].mxu0
      %v831 = vadd.f32 0.0, %v830
      %v832 = vpop.f32.mrb[0].mxu0
      %v833 = vpop.f32.mrb[0].mxu0
      %v834 = vadd.f32 0.0, %v833
      %v835 = vpop.f32.mrb[0].mxu0
      %836 = vmatprep.mubr.bf16.mxu0 0
      %837 = vmatmul.mubr.bf16.gmra.mrb[0].mxu0 %v509
      %v838 = vpop.f32.mrb[0].mxu0
      %v839 = vadd.f32 0.0, %v838
      %v840 = vpop.f32.mrb[0].mxu0
      %v841 = vpop.f32.mrb[0].mxu0
      %v842 = vadd.f32 0.0, %v841
      %v843 = vpop.f32.mrb[0].mxu0
      %844 = vmatprep.mubr.bf16.mxu0 0
      %845 = vmatmul.mubr.bf16.gmra.mrb[0].mxu0 %v510
      %v846 = vpop.f32.mrb[0].mxu0
      %v847 = vadd.f32 0.0, %v846
      %v848 = vpop.f32.mrb[0].mxu0
      %v849 = vpop.f32.mrb[0].mxu0
      %v850 = vadd.f32 0.0, %v849
      %v851 = vpop.f32.mrb[0].mxu0
      %852 = vmatprep.mubr.bf16.mxu0 0
      %853 = vmatmul.mubr.bf16.gmra.mrb[0].mxu0 %v511
      %v854 = vpop.f32.mrb[0].mxu0
      %v855 = vadd.f32 0.0, %v854
      %v856 = vpop.f32.mrb[0].mxu0
      %v857 = vpop.f32.mrb[0].mxu0
      %v858 = vadd.f32 0.0, %v857
      %v859 = vpop.f32.mrb[0].mxu0
      %860 = vmatprep.mubr.bf16.mxu0 0
      %861 = vmatmul.mubr.bf16.gmra.mrb[0].mxu0 %v512
      %v862 = vpop.f32.mrb[0].mxu0
      %v863 = vadd.f32 0.0, %v862
      %v864 = vpop.f32.mrb[0].mxu0
      %v865 = vpop.f32.mrb[0].mxu0
      %v866 = vadd.f32 0.0, %v865
      %v867 = vpop.f32.mrb[0].mxu0
      %868 = vmatprep.mubr.bf16.mxu0 0
      %869 = vmatmul.mubr.bf16.gmra.mrb[0].mxu0 %v513
      %v870 = vpop.f32.mrb[0].mxu0
      %v871 = vadd.f32 0.0, %v870
      %v872 = vpop.f32.mrb[0].mxu0
      %v873 = vpop.f32.mrb[0].mxu0
      %v874 = vadd.f32 0.0, %v873
      %v875 = vpop.f32.mrb[0].mxu0
      %876 = vmatprep.mubr.bf16.mxu0 0
      %877 = vmatmul.mubr.bf16.gmra.mrb[0].mxu0 %v514
      %v878 = vpop.f32.mrb[0].mxu0
      %v879 = vadd.f32 0.0, %v878
      %v880 = vpop.f32.mrb[0].mxu0
      %v881 = vpop.f32.mrb[0].mxu0
      %v882 = vadd.f32 0.0, %v881
      %v883 = vpop.f32.mrb[0].mxu0
      %884 = vmatprep.mubr.bf16.mxu0 0
      %885 = vmatmul.mubr.bf16.gmra.mrb[0].mxu0 %v515
      %v886 = vpop.f32.mrb[0].mxu0
      %v887 = vadd.f32 0.0, %v886
      %v888 = vpop.f32.mrb[0].mxu0
      %v889 = vpop.f32.mrb[0].mxu0
      %v890 = vadd.f32 0.0, %v889
      %v891 = vpop.f32.mrb[0].mxu0
      %892 = vmatprep.mubr.bf16.mxu0 0
      %893 = vmatmul.mubr.bf16.gmra.mrb[0].mxu0 %v516
      %v894 = vpop.f32.mrb[0].mxu0
      %v895 = vadd.f32 0.0, %v894
      %v896 = vpop.f32.mrb[0].mxu0
      %v897 = vpop.f32.mrb[0].mxu0
      %v898 = vadd.f32 0.0, %v897
      %v899 = vpop.f32.mrb[0].mxu0
      %900 = vmatprep.mubr.bf16.mxu0 0
      %901 = vmatmul.mubr.bf16.gmra.mrb[0].mxu0 %v517
      %v902 = vpop.f32.mrb[0].mxu0
      %v903 = vadd.f32 0.0, %v902
      %v904 = vpop.f32.mrb[0].mxu0
      %v905 = vpop.f32.mrb[0].mxu0
      %v906 = vadd.f32 0.0, %v905
      %v907 = vpop.f32.mrb[0].mxu0
      %908 = vmatprep.mubr.bf16.mxu0 0
      %909 = vmatmul.mubr.bf16.gmra.mrb[0].mxu0 %v518
      %v910 = vpop.f32.mrb[0].mxu0
      %v911 = vadd.f32 0.0, %v910
      %v912 = vpop.f32.mrb[0].mxu0
      %v913 = vpop.f32.mrb[0].mxu0
      %v914 = vadd.f32 0.0, %v913
      %v915 = vpop.f32.mrb[0].mxu0
      %916 = vmatprep.mubr.bf16.mxu0 0
      %917 = vmatmul.mubr.bf16.gmra.mrb[0].mxu0 %v519
      %v918 = vpop.f32.mrb[0].mxu0
      %v919 = vadd.f32 0.0, %v918
      %v920 = vpop.f32.mrb[0].mxu0
      %v921 = vpop.f32.mrb[0].mxu0
      %v922 = vadd.f32 0.0, %v921
      %v923 = vpop.f32.mrb[0].mxu0
      %924 = vmatprep.mubr.bf16.mxu0 0
      %925 = vmatmul.mubr.bf16.gmra.mrb[0].mxu0 %v520
      %v926 = vpop.f32.mrb[0].mxu0
      %v927 = vadd.f32 0.0, %v926
      %v928 = vpop.f32.mrb[0].mxu0
      %v929 = vpop.f32.mrb[0].mxu0
      %v930 = vadd.f32 0.0, %v929
      %v931 = vpop.f32.mrb[0].mxu0
      %932 = vmatprep.mubr.bf16.mxu0 0
      %933 = vmatmul.mubr.bf16.gmra.mrb[0].mxu0 %v521
      %v934 = vpop.f32.mrb[0].mxu0
      %v935 = vadd.f32 0.0, %v934
      %v936 = vpop.f32.mrb[0].mxu0
      %v937 = vpop.f32.mrb[0].mxu0
      %v938 = vadd.f32 0.0, %v937
      %v939 = vpop.f32.mrb[0].mxu0
      %940 = vmatprep.mubr.bf16.mxu0 0
      %941 = vmatmul.mubr.bf16.gmra.mrb[0].mxu0 %v522
      %v942 = vpop.f32.mrb[0].mxu0
      %v943 = vadd.f32 0.0, %v942
      %v944 = vpop.f32.mrb[0].mxu0
      %v945 = vpop.f32.mrb[0].mxu0
      %v946 = vadd.f32 0.0, %v945
      %v947 = vpop.f32.mrb[0].mxu0
      %948 = vmatprep.mubr.bf16.mxu0 0
      %949 = vmatmul.mubr.bf16.gmra.mrb[0].mxu0 %v523
      %v950 = vpop.f32.mrb[0].mxu0
      %v951 = vadd.f32 0.0, %v950
      %v952 = vpop.f32.mrb[0].mxu0
      %v953 = vpop.f32.mrb[0].mxu0
      %v954 = vadd.f32 0.0, %v953
      %v955 = vpop.f32.mrb[0].mxu0
      %956 = vmatprep.mubr.bf16.mxu0 0
      %957 = vmatmul.mubr.bf16.gmra.mrb[0].mxu0 %v524
      %v958 = vpop.f32.mrb[0].mxu0
      %v959 = vadd.f32 0.0, %v958
      %v960 = vpop.f32.mrb[0].mxu0
      %v961 = vpop.f32.mrb[0].mxu0
      %v962 = vadd.f32 0.0, %v961
      %v963 = vpop.f32.mrb[0].mxu0
      %964 = vmatprep.mubr.bf16.mxu0 0
      %965 = vmatmul.mubr.bf16.gmra.mrb[0].mxu0 %v525
      %v966 = vpop.f32.mrb[0].mxu0
      %v967 = vadd.f32 0.0, %v966
      %v968 = vpop.f32.mrb[0].mxu0
      %v969 = vpop.f32.mrb[0].mxu0
      %v970 = vadd.f32 0.0, %v969
      %v971 = vpop.f32.mrb[0].mxu0
      %972 = vmatprep.mubr.bf16.mxu0 0
      %973 = vmatmul.mubr.bf16.gmra.mrb[0].mxu0 %v526
      %v974 = vpop.f32.mrb[0].mxu0
      %v975 = vadd.f32 0.0, %v974
      %v976 = vpop.f32.mrb[0].mxu0
      %v977 = vpop.f32.mrb[0].mxu0
      %v978 = vadd.f32 0.0, %v977
      %v979 = vpop.f32.mrb[0].mxu0
      %980 = vmatprep.mubr.bf16.mxu0 0
      %981 = vmatmul.mubr.bf16.gmra.mrb[0].mxu0 %v527
      %v982 = vpop.f32.mrb[0].mxu0
      %v983 = vadd.f32 0.0, %v982
      %v984 = vpop.f32.mrb[0].mxu0
      %v985 = vpop.f32.mrb[0].mxu0
      %v986 = vadd.f32 0.0, %v985
      %v987 = vpop.f32.mrb[0].mxu0
      %988 = vmatprep.mubr.bf16.mxu0 0
      %989 = vmatmul.mubr.bf16.gmra.mrb[0].mxu0 %v528
      %v990 = vpop.f32.mrb[0].mxu0
      %v991 = vadd.f32 0.0, %v990
      %v992 = vpop.f32.mrb[0].mxu0
      %v993 = vpop.f32.mrb[0].mxu0
      %v994 = vadd.f32 0.0, %v993
      %v995 = vpop.f32.mrb[0].mxu0
      %996 = vmatprep.mubr.bf16.mxu0 0
      %997 = vmatmul.mubr.bf16.gmra.mrb[0].mxu0 %v529
      %v998 = vpop.f32.mrb[0].mxu0
      %v999 = vadd.f32 0.0, %v998
      %v1000 = vpop.f32.mrb[0].mxu0
      %v1001 = vpop.f32.mrb[0].mxu0
      %v1002 = vadd.f32 0.0, %v1001
      %v1003 = vpop.f32.mrb[0].mxu0
      %1004 = vmatprep.mubr.bf16.mxu0 0
      %1005 = vmatmul.mubr.bf16.gmra.mrb[0].mxu0 %v530
      %v1006 = vpop.f32.mrb[0].mxu0
      %v1007 = vadd.f32 0.0, %v1006
      %v1008 = vpop.f32.mrb[0].mxu0
      %v1009 = vpop.f32.mrb[0].mxu0
      %v1010 = vadd.f32 0.0, %v1009
      %v1011 = vpop.f32.mrb[0].mxu0
      %1012 = vmatprep.mubr.bf16.mxu0 0
      %1013 = vmatmul.mubr.bf16.gmra.mrb[0].mxu0 %v531
      %v1014 = vpop.f32.mrb[0].mxu0
      %v1015 = vadd.f32 0.0, %v1014
      %v1016 = vpop.f32.mrb[0].mxu0
      %v1017 = vpop.f32.mrb[0].mxu0
      %v1018 = vadd.f32 0.0, %v1017
      %v1019 = vpop.f32.mrb[0].mxu0
      %1020 = vmatprep.mubr.bf16.mxu0 0
      %1021 = vmatmul.mubr.bf16.gmra.mrb[0].mxu0 %v532
      %v1022 = vpop.f32.mrb[0].mxu0
      %v1023 = vadd.f32 0.0, %v1022
      %v1024 = vpop.f32.mrb[0].mxu0
      %v1025 = vpop.f32.mrb[0].mxu0
      %v1026 = vadd.f32 0.0, %v1025
      %v1027 = vpop.f32.mrb[0].mxu0
      %1028 = vmatprep.mubr.bf16.mxu0 0
      %1029 = vmatmul.mubr.bf16.gmra.mrb[0].mxu0 %v533
      %v1030 = vpop.f32.mrb[0].mxu0
      %v1031 = vadd.f32 0.0, %v1030
      %v1032 = vpop.f32.mrb[0].mxu0
      %v1033 = vpop.f32.mrb[0].mxu0
      %v1034 = vadd.f32 0.0, %v1033
      %v1035 = vpop.f32.mrb[0].mxu0
      %1036 = vmatprep.mubr.bf16.mxu0 0
      %1037 = vmatmul.mubr.bf16.gmra.mrb[0].mxu0 %v534
      %v1038 = vpop.f32.mrb[0].mxu0
      %v1039 = vadd.f32 0.0, %v1038
      %v1040 = vpop.f32.mrb[0].mxu0
      %v1041 = vpop.f32.mrb[0].mxu0
      %v1042 = vadd.f32 0.0, %v1041
      %v1043 = vpop.f32.mrb[0].mxu0
      %1044 = vmatprep.mubr.bf16.mxu0 0
      %1045 = vmatmul.mubr.bf16.gmra.mrb[0].mxu0 %v535
      %v1046 = vpop.f32.mrb[0].mxu0
      %v1047 = vadd.f32 0.0, %v1046
      %v1048 = vpop.f32.mrb[0].mxu0
      %v1049 = vpop.f32.mrb[0].mxu0
      %v1050 = vadd.f32 0.0, %v1049
      %v1051 = vpop.f32.mrb[0].mxu0
      %1052 = vmatprep.mubr.bf16.mxu0 0
      %1053 = vmatmul.mubr.bf16.gmra.mrb[0].mxu0 %v536
      %v1054 = vpop.f32.mrb[0].mxu0
      %v1055 = vadd.f32 0.0, %v1054
      %v1056 = vpop.f32.mrb[0].mxu0
      %v1057 = vpop.f32.mrb[0].mxu0
      %v1058 = vadd.f32 0.0, %v1057
      %v1059 = vpop.f32.mrb[0].mxu0
      %1060 = vmatprep.mubr.bf16.mxu0 0
      %1061 = vmatmul.mubr.bf16.gmra.mrb[0].mxu0 %v537
      %v1062 = vpop.f32.mrb[0].mxu0
      %v1063 = vadd.f32 0.0, %v1062
      %v1064 = vpop.f32.mrb[0].mxu0
      %v1065 = vpop.f32.mrb[0].mxu0
      %v1066 = vadd.f32 0.0, %v1065
      %v1067 = vpop.f32.mrb[0].mxu0
      %1068 = vdwg.mxu0
      %v1069 = vmax.f32 %v671, %v770
      %v1070 = vmax.f32 %v674, %v775
      %v1071 = vmax.f32 %v679, %v778
      %v1072 = vmax.f32 %v682, %v783
      %v1073 = vmax.f32 %v687, %v786
      %v1074 = vmax.f32 %v690, %v791
      %v1075 = vmax.f32 %v695, %v794
      %v1076 = vmax.f32 %v698, %v799
      %v1077 = vmax.f32 %v703, %v802
      %v1078 = vmax.f32 %v706, %v807
      %v1079 = vmax.f32 %v711, %v810
      %v1080 = vmax.f32 %v714, %v815
      %v1081 = vmax.f32 %v719, %v818
      %v1082 = vmax.f32 %v722, %v823
      %v1083 = vmax.f32 %v727, %v826
      %v1084 = vmax.f32 %v730, %v831
      %v1085 = vmax.f32 %v735, %v834
      %v1086 = vmax.f32 %v738, %v839
      %v1087 = vmax.f32 %v743, %v842
      %v1088 = vmax.f32 %v746, %v847
      %v1089 = vmax.f32 %v751, %v850
      %v1090 = vmax.f32 %v754, %v855
      %v1091 = vmax.f32 %v759, %v858
      %v1092 = vmax.f32 %v762, %v863
      %v1093 = vmax.f32 %v767, %v866
      %v1094 = vmax.f32 %v871, %v970
      %v1095 = vmax.f32 %v874, %v975
      %v1096 = vmax.f32 %v879, %v978
      %v1097 = vmax.f32 %v882, %v983
      %v1098 = vmax.f32 %v887, %v986
      %v1099 = vmax.f32 %v890, %v991
      %v1100 = vmax.f32 %v895, %v994
      %v1101 = vmax.f32 %v898, %v999
      %v1102 = vmax.f32 %v903, %v1002
      %v1103 = vmax.f32 %v906, %v1007
      %v1104 = vmax.f32 %v911, %v1010
      %v1105 = vmax.f32 %v914, %v1015
      %v1106 = vmax.f32 %v919, %v1018
      %v1107 = vmax.f32 %v922, %v1023
      %v1108 = vmax.f32 %v927, %v1026
      %v1109 = vmax.f32 %v930, %v1031
      %v1110 = vmax.f32 %v935, %v1034
      %v1111 = vmax.f32 %v938, %v1039
      %v1112 = vmax.f32 %v943, %v1042
      %v1113 = vmax.f32 %v946, %v1047
      %v1114 = vmax.f32 %v951, %v1050
      %v1115 = vmax.f32 %v954, %v1055
      %v1116 = vmax.f32 %v959, %v1058
      %v1117 = vmax.f32 %v962, %v1063
      %v1118 = vmax.f32 %v967, %v1066
      %v1119 = vmax.f32 %v1069, %v1094
      %v1120 = vmax.f32 %v1070, %v1095
      %v1121 = vmax.f32 %v1071, %v1096
      %v1122 = vmax.f32 %v1072, %v1097
      %v1123 = vmax.f32 %v1073, %v1098
      %v1124 = vmax.f32 %v1074, %v1099
      %v1125 = vmax.f32 %v1075, %v1100
      %v1126 = vmax.f32 %v1076, %v1101
      %v1127 = vmax.f32 %v1077, %v1102
      %v1128 = vmax.f32 %v1078, %v1103
      %v1129 = vmax.f32 %v1079, %v1104
      %v1130 = vmax.f32 %v1080, %v1105
      %v1131 = vmax.f32 %v1081, %v1106
      %v1132 = vmax.f32 %v1082, %v1107
      %v1133 = vmax.f32 %v1083, %v1108
      %v1134 = vmax.f32 %v1084, %v1109
      %v1135 = vmax.f32 %v1085, %v1110
      %v1136 = vmax.f32 %v1086, %v1111
      %v1137 = vmax.f32 %v1087, %v1112
      %v1138 = vmax.f32 %v1088, %v1113
      %v1139 = vmax.f32 %v1089, %v1114
      %v1140 = vmax.f32 %v1090, %v1115
      %v1141 = vmax.f32 %v1091, %v1116
      %v1142 = vmax.f32 %v1092, %v1117
      %v1143 = vmax.f32 %v1093, %v1118
      %v1144 = vld [vmem:[%s2] sm:$0x1]
      %v1146 = vlaneseq
      %v1147 = vshrl.u32 %v1146, 7
      %v1148 = vsub.s32 0, %v1147
      %v1149 = vrot.slane %v1144, %v1148
      %v1151 = vadd.f32 %v1119, %v1149
      %v1152 = vadd.f32 %v1120, %v1149
      %v1153 = vadd.f32 %v1121, %v1149
      %v1154 = vadd.f32 %v1122, %v1149
      %v1155 = vadd.f32 %v1123, %v1149
      %v1156 = vadd.f32 %v1124, %v1149
      %v1157 = vadd.f32 %v1125, %v1149
      %v1158 = vadd.f32 %v1126, %v1149
      %v1159 = vadd.f32 %v1127, %v1149
      %v1160 = vadd.f32 %v1128, %v1149
      %v1161 = vadd.f32 %v1129, %v1149
      %v1162 = vadd.f32 %v1130, %v1149
      %v1163 = vadd.f32 %v1131, %v1149
      %v1164 = vadd.f32 %v1132, %v1149
      %v1165 = vadd.f32 %v1133, %v1149
      %v1166 = vadd.f32 %v1134, %v1149
      %v1167 = vadd.f32 %v1135, %v1149
      %v1168 = vadd.f32 %v1136, %v1149
      %v1169 = vadd.f32 %v1137, %v1149
      %v1170 = vadd.f32 %v1138, %v1149
      %v1171 = vadd.f32 %v1139, %v1149
      %v1172 = vadd.f32 %v1140, %v1149
      %v1173 = vadd.f32 %v1141, %v1149
      %v1174 = vadd.f32 %v1142, %v1149
      %v1175 = vadd.f32 %v1143, %v1149
      %v1176 = vtanh.pop %v1151
      %v1177 = vtanh.pop %v1152
      %v1178 = vtanh.pop %v1153
      %v1179 = vtanh.pop %v1154
      %v1180 = vtanh.pop %v1155
      %v1181 = vtanh.pop %v1156
      %v1182 = vtanh.pop %v1157
      %v1183 = vtanh.pop %v1158
      %v1184 = vtanh.pop %v1159
      %v1185 = vtanh.pop %v1160
      %v1186 = vtanh.pop %v1161
      %v1187 = vtanh.pop %v1162
      %v1188 = vtanh.pop %v1163
      %v1189 = vtanh.pop %v1164
      %v1190 = vtanh.pop %v1165
      %v1191 = vtanh.pop %v1166
      %v1192 = vtanh.pop %v1167
      %v1193 = vtanh.pop %v1168
      %v1194 = vtanh.pop %v1169
      %v1195 = vtanh.pop %v1170
      %v1196 = vtanh.pop %v1171
      %v1197 = vtanh.pop %v1172
      %v1198 = vtanh.pop %v1173
      %v1199 = vtanh.pop %v1174
      %v1200 = vtanh.pop %v1175
      %v1201 = vpack.c.bf16 %v1177, %v1176
      %v1202 = vpack.c.bf16 %v1179, %v1178
      %v1203 = vpack.c.bf16 %v1181, %v1180
      %v1204 = vpack.c.bf16 %v1183, %v1182
      %v1205 = vpack.c.bf16 %v1185, %v1184
      %v1206 = vpack.c.bf16 %v1187, %v1186
      %v1207 = vpack.c.bf16 %v1189, %v1188
      %v1208 = vpack.c.bf16 %v1191, %v1190
      %v1209 = vpack.c.bf16 %v1193, %v1192
      %v1210 = vpack.c.bf16 %v1195, %v1194
      %v1211 = vpack.c.bf16 %v1197, %v1196
      %v1212 = vpack.c.bf16 %v1199, %v1198
      %v1213 = vpack.c.bf16 %v1200, %v1200
      %v1227 = vunpack.c.l.b16 %v1201
      %v1228 = vunpack.c.h.b16 %v1201
      %v1229 = vunpack.c.l.b16 %v1202
      %v1230 = vunpack.c.h.b16 %v1202
      %v1231 = vunpack.c.l.b16 %v1203
      %v1232 = vunpack.c.h.b16 %v1203
      %v1233 = vunpack.c.l.b16 %v1204
      %v1234 = vunpack.c.h.b16 %v1204
      %v1235 = vunpack.c.l.b16 %v1205
      %v1236 = vunpack.c.h.b16 %v1205
      %v1237 = vunpack.c.l.b16 %v1206
      %v1238 = vunpack.c.h.b16 %v1206
      %v1239 = vunpack.c.l.b16 %v1207
      %v1240 = vunpack.c.h.b16 %v1207
      %v1241 = vunpack.c.l.b16 %v1208
      %v1242 = vunpack.c.h.b16 %v1208
      %v1243 = vunpack.c.l.b16 %v1209
      %v1244 = vunpack.c.h.b16 %v1209
      %v1245 = vunpack.c.l.b16 %v1210
      %v1246 = vunpack.c.h.b16 %v1210
      %v1247 = vunpack.c.l.b16 %v1211
      %v1248 = vunpack.c.h.b16 %v1211
      %v1249 = vunpack.c.l.b16 %v1212
      %v1250 = vunpack.c.h.b16 %v1212
      %v1251 = vunpack.c.l.b16 %v1213
      %v1252 = vpack.c.b16 %v1227, %v1227
      %v1253 = vpack.c.b16 %v1228, %v1228
      %v1254 = vpack.c.b16 %v1229, %v1229
      %v1255 = vpack.c.b16 %v1230, %v1230
      %v1256 = vpack.c.b16 %v1231, %v1231
      %v1257 = vpack.c.b16 %v1232, %v1232
      %v1258 = vpack.c.b16 %v1233, %v1233
      %v1259 = vpack.c.b16 %v1234, %v1234
      %v1260 = vpack.c.b16 %v1235, %v1235
      %v1261 = vpack.c.b16 %v1236, %v1236
      %v1262 = vpack.c.b16 %v1237, %v1237
      %v1263 = vpack.c.b16 %v1238, %v1238
      %v1264 = vpack.c.b16 %v1239, %v1239
      %v1265 = vpack.c.b16 %v1240, %v1240
      %v1266 = vpack.c.b16 %v1241, %v1241
      %v1267 = vpack.c.b16 %v1242, %v1242
      %v1268 = vpack.c.b16 %v1243, %v1243
      %v1269 = vpack.c.b16 %v1244, %v1244
      %v1270 = vpack.c.b16 %v1245, %v1245
      %v1271 = vpack.c.b16 %v1246, %v1246
      %v1272 = vpack.c.b16 %v1247, %v1247
      %v1273 = vpack.c.b16 %v1248, %v1248
      %v1274 = vpack.c.b16 %v1249, %v1249
      %v1275 = vpack.c.b16 %v1250, %v1250
      %v1276 = vpack.c.b16 %v1251, %v1251
      %1302 = vst [vmem:[%s170] sm:$0xf] %v1252
      %1303 = vst [vmem:[%s170 + $0x4] sm:$0xf] %v1253
      %1304 = vst [vmem:[%s170 + $0x8] sm:$0xf] %v1254
      %1305 = vst [vmem:[%s170 + $0xc] sm:$0xf] %v1255
      %1306 = vst [vmem:[%s170 + $0x10] sm:$0xf] %v1256
      %1307 = vst [vmem:[%s170 + $0x14] sm:$0xf] %v1257
      %1308 = vst [vmem:[%s170 + $0x18] sm:$0xf] %v1258
      %1309 = vst [vmem:[%s170 + $0x1c] sm:$0xf] %v1259
      %1310 = vst [vmem:[%s170 + $0x20] sm:$0xf] %v1260
      %1311 = vst [vmem:[%s170 + $0x24] sm:$0xf] %v1261
      %1312 = vst [vmem:[%s170 + $0x28] sm:$0xf] %v1262
      %1313 = vst [vmem:[%s170 + $0x2c] sm:$0xf] %v1263
      %1314 = vst [vmem:[%s170 + $0x30] sm:$0xf] %v1264
      %1315 = vst [vmem:[%s170 + $0x34] sm:$0xf] %v1265
      %1316 = vst [vmem:[%s170 + $0x38] sm:$0xf] %v1266
      %1317 = vst [vmem:[%s170 + $0x3c] sm:$0xf] %v1267
      %1318 = vst [vmem:[%s170 + $0x40] sm:$0xf] %v1268
      %1319 = vst [vmem:[%s170 + $0x44] sm:$0xf] %v1269
      %1320 = vst [vmem:[%s170 + $0x48] sm:$0xf] %v1270
      %1321 = vst [vmem:[%s170 + $0x4c] sm:$0xf] %v1271
      %1322 = vst [vmem:[%s170 + $0x50] sm:$0xf] %v1272
      %1323 = vst [vmem:[%s170 + $0x54] sm:$0xf] %v1273
      %1324 = vst [vmem:[%s170 + $0x58] sm:$0xf] %v1274
      %1325 = vst [vmem:[%s170 + $0x5c] sm:$0xf] %v1275
      %1326 = vst [vmem:[%s170 + $0x60] sm:$0xf] %v1276
      %p1327 = scmp.lt.s32.totalorder %s14, 1
      %s1328 = scalar_select %p1327, %s14, 1
      %s1329 = smul.addr %s1328, 25
      %s1330 = smul.addr %s1329, 4
      %s1331 = scalar_lea.vmem %s3, %s1330
      // Predicated region
      $region33: #{lenet_forward.3} parent=31 // pred_check
        %p1332 = pneg %p100
      $region34: #{lenet_forward.3} parent=31 // pred_check_branch
        %1334 = sbr.rel (%p1332) target = $region36
      $region35: #{lenet_forward.3} parent=31 // pred_region
        _
      $region36: #{lenet_forward.3} parent=31 // pred_fallthru
        _
    $region32: #{lenet_forward.3} parent=5 // pred_fallthru
      _
    %p1335 = scmp.le.s32.totalorder 2, %s9
    // Predicated region
    $region37: #{lenet_forward.3} parent=5 // pred_check
      %p1336 = pneg %p1335
    $region38: #{lenet_forward.3} parent=5 // pred_check_branch
      %1338 = sbr.rel (%p1336) target = $region40
    $region39: #{lenet_forward.3} parent=5 // pred_region
      %s1339 = ssub.s32 %s9, 2
      // Predicated region
      $region41: #{lenet_forward.3} parent=39 // pred_check
        %p1340 = pneg %p106
      $region42: #{lenet_forward.3} parent=39 // pred_check_branch
        %1342 = sbr.rel (%p1340) target = $region44
      $region43: #{lenet_forward.3} parent=39 // pred_region
        %p1343 = scmp.lt.s32.totalorder %s15, 1
        %s1344 = scalar_select %p1343, %s15, 1
        %s1345 = smul.addr %s1344, 25
        %s1346 = smul.addr %s1345, 4
        %s1347 = scalar_lea.vmem %s3, %s1346
      $region44: #{lenet_forward.3} parent=39 // pred_fallthru
        _
    $region40: #{lenet_forward.3} parent=5 // pred_fallthru
      _
  $region6: #{lenet_forward.3} parent=0 // loop_footer
    %s13 = sadd.s32 1, %s9
  $region7: #{lenet_forward.3} parent=0 // loop_footer_branch
    %8 = sbr.rel target = $region3
  $region8: #{lenet_forward.3} parent=0 // loop_exit
    _

// kernel: lenet_forward.4
$region0: #{lenet_forward.4}
  #allocation0 [shape = 'u32[]', space=smem, size = 0x4, offset = 0x4, fixed_abs, tag = 'smem constant byte address 0x4 - core index']
  #allocation1 [shape = 'u32[144,128]{1,0:T(1,128)}', space=vmem, size = 0x12000, scoped, tag = 'internal scratch']
  %s0 = inlined_call_operand.vmem [shape: bf16[2,128,512], index: 0, kind: input, shape index: {}]
  %s1 = inlined_call_operand.vmem [shape: bf16[512,128], index: 1, kind: input, shape index: {}]
  %s2 = inlined_call_operand.vmem [shape: f32[1,128], index: 2, kind: input, shape index: {}]
  %s3 = inlined_call_operand.vmem [shape: bf16[2,32,128], index: 3, kind: output, shape index: {}]
  %s4 = sld [smem:[#allocation0]]
  $region45: #{lenet_forward.4} parent=0
    _
  %s6 = ssub.s32 1, %s4
  %s7 = scalar_select 0, %s6, %s4
  loop: start=0, step=1, limit=4
  $region2: #{lenet_forward.4} parent=0 // loop_pre_header
    _
  $region3: #{lenet_forward.4} parent=0 // loop_header
    %s9 = sphi 0, %s13
    %p10 = scmp.ge.s32.totalorder %s9, 4
    %s19 = sphi 0, %s21
    %s22 = sphi 0, %s19
    %s23 = sphi 0, %s22
    %s39 = sphi 0, %s23
    %s43 = sphi 0, %s43
    %s45 = sphi 0, %s43
    %s46 = sphi 0, %s45
    %s60 = sphi 0, %s46
    %s64 = sphi 0, %s64
    %s66 = sphi 0, %s64
    %s67 = sphi 0, %s66
    %s81 = sphi 0, %s67
    %s87 = sphi 0, %s89
    %s90 = sphi 0, %s87
    %s91 = sphi 0, %s90
    %s107 = sphi 0, %s91
  $region4: #{lenet_forward.4} parent=0 // loop_header_branch
    %12 = sbr.rel (%p10) target = $region8
  $region5: #{lenet_forward.4} parent=0 // loop_body
    %s14 = ssub.s32 %s9, 1
    %s15 = ssub.s32 %s9, 2
    %s16 = sadd.s32 %s9, 1
    %s17 = ssub.s32 %s9, %s16
    %p18 = scmp.eq.s32.totalorder %s17, 0
    %s20 = sadd.s32 %s19, 1
    %s21 = scalar_select %p18, %s19, %s20
    %p24 = pneg %p18
    %p25 = scmp.eq.s32.totalorder %s9, 1
    %p26 = por %p24, %p25
    %p27 = scmp.ne.s32.totalorder %s19, %s22
    %p28 = scmp.eq.s32.totalorder %s9, 0
    %p29 = por %p27, %p28
    %p30 = scmp.ne.s32.totalorder %s19, %s22
    %p31 = scmp.eq.s32.totalorder %s14, 1
    %p32 = por %p30, %p31
    %p33 = scmp.ne.s32.totalorder %s22, %s23
    %p34 = scmp.eq.s32.totalorder %s14, 0
    %p35 = por %p33, %p34
    %p36 = scmp.ne.s32.totalorder %s22, %s23
    %p37 = scmp.eq.s32.totalorder %s15, 1
    %p38 = por %p36, %p37
    %p40 = scmp.ne.s32.totalorder %s23, %s39
    %p41 = scmp.eq.s32.totalorder %s15, 0
    %p42 = por %p40, %p41
    %s44 = sadd.s32 %s43, 1
    %p47 = scmp.eq.s32.totalorder %s9, 1
    %p48 = scmp.ne.s32.totalorder %s43, %s45
    %p49 = scmp.eq.s32.totalorder %s9, 0
    %p50 = por %p48, %p49
    %p51 = scmp.ne.s32.totalorder %s43, %s45
    %p52 = scmp.eq.s32.totalorder %s14, 1
    %p53 = por %p51, %p52
    %p54 = scmp.ne.s32.totalorder %s45, %s46
    %p55 = scmp.eq.s32.totalorder %s14, 0
    %p56 = por %p54, %p55
    %p57 = scmp.ne.s32.totalorder %s45, %s46
    %p58 = scmp.eq.s32.totalorder %s15, 1
    %p59 = por %p57, %p58
    %p61 = scmp.ne.s32.totalorder %s46, %s60
    %p62 = scmp.eq.s32.totalorder %s15, 0
    %p63 = por %p61, %p62
    %s65 = sadd.s32 %s64, 1
    %p68 = scmp.eq.s32.totalorder %s9, 1
    %p69 = scmp.ne.s32.totalorder %s64, %s66
    %p70 = scmp.eq.s32.totalorder %s9, 0
    %p71 = por %p69, %p70
    %p72 = scmp.ne.s32.totalorder %s64, %s66
    %p73 = scmp.eq.s32.totalorder %s14, 1
    %p74 = por %p72, %p73
    %p75 = scmp.ne.s32.totalorder %s66, %s67
    %p76 = scmp.eq.s32.totalorder %s14, 0
    %p77 = por %p75, %p76
    %p78 = scmp.ne.s32.totalorder %s66, %s67
    %p79 = scmp.eq.s32.totalorder %s15, 1
    %p80 = por %p78, %p79
    %p82 = scmp.ne.s32.totalorder %s67, %s81
    %p83 = scmp.eq.s32.totalorder %s15, 0
    %p84 = por %p82, %p83
    %s85 = ssub.s32 %s9, %s16
    %p86 = scmp.eq.s32.totalorder %s85, 0
    %s88 = sadd.s32 %s87, 1
    %s89 = scalar_select %p86, %s87, %s88
    %p92 = pneg %p86
    %p93 = scmp.eq.s32.totalorder %s9, 1
    %p94 = por %p92, %p93
    %p95 = scmp.ne.s32.totalorder %s87, %s90
    %p96 = scmp.eq.s32.totalorder %s9, 0
    %p97 = por %p95, %p96
    %p98 = scmp.ne.s32.totalorder %s87, %s90
    %p99 = scmp.eq.s32.totalorder %s14, 1
    %p100 = por %p98, %p99
    %p101 = scmp.ne.s32.totalorder %s90, %s91
    %p102 = scmp.eq.s32.totalorder %s14, 0
    %p103 = por %p101, %p102
    %p104 = scmp.ne.s32.totalorder %s90, %s91
    %p105 = scmp.eq.s32.totalorder %s15, 1
    %p106 = por %p104, %p105
    %p108 = scmp.ne.s32.totalorder %s91, %s107
    %p109 = scmp.eq.s32.totalorder %s15, 0
    %p110 = por %p108, %p109
    %p111 = scmp.le.s32.totalorder 1, %s9
    %p112 = scmp.lt.s32.totalorder %s9, 3
    %p113 = pnand %p111, %p112
    %p114 = pneg %p113
    // Predicated region
    $region9: #{lenet_forward.4} parent=5 // pred_check
      _
    $region10: #{lenet_forward.4} parent=5 // pred_check_branch
      %116 = sbr.rel (%p113) target = $region12
    $region11: #{lenet_forward.4} parent=5 // pred_region
      %s117 = ssub.s32 %s9, 1
      // Predicated region
      $region13: #{lenet_forward.4} parent=11 // pred_check
        %p118 = pneg %p56
      $region14: #{lenet_forward.4} parent=11 // pred_check_branch
        %120 = sbr.rel (%p118) target = $region16
      $region15: #{lenet_forward.4} parent=11 // pred_region
        _
      $region16: #{lenet_forward.4} parent=11 // pred_fallthru
        _
      // Predicated region
      $region17: #{lenet_forward.4} parent=11 // pred_check
        %p121 = pneg %p77
      $region18: #{lenet_forward.4} parent=11 // pred_check_branch
        %123 = sbr.rel (%p121) target = $region20
      $region19: #{lenet_forward.4} parent=11 // pred_region
        _
      $region20: #{lenet_forward.4} parent=11 // pred_fallthru
        _
    $region12: #{lenet_forward.4} parent=5 // pred_fallthru
      _
    %p124 = scmp.lt.s32.totalorder %s9, 2
    // Predicated region
    $region21: #{lenet_forward.4} parent=5 // pred_check
      %p125 = pneg %p124
    $region22: #{lenet_forward.4} parent=5 // pred_check_branch
      %127 = sbr.rel (%p125) target = $region24
    $region23: #{lenet_forward.4} parent=5 // pred_region
      // Predicated region
      $region25: #{lenet_forward.4} parent=23 // pred_check
        %p128 = pneg %p29
      $region26: #{lenet_forward.4} parent=23 // pred_check_branch
        %130 = sbr.rel (%p128) target = $region28
      $region27: #{lenet_forward.4} parent=23 // pred_region
        %p131 = scmp.lt.s32.totalorder %s9, 1
        %s132 = scalar_select %p131, %s9, 1
        %s133 = smul.addr %s132, 64
        %s134 = smul.addr %s133, 4
        %s135 = scalar_lea.vmem %s0, %s134
      $region28: #{lenet_forward.4} parent=23 // pred_fallthru
        _
    $region24: #{lenet_forward.4} parent=5 // pred_fallthru
      _
    %p136 = scmp.le.s32.totalorder 1, %s9
    %p137 = scmp.lt.s32.totalorder %s9, 3
    %p138 = pnand %p136, %p137
    %p139 = pneg %p138
    // Predicated region
    $region29: #{lenet_forward.4} parent=5 // pred_check
      _
    $region30: #{lenet_forward.4} parent=5 // pred_check_branch
      %141 = sbr.rel (%p138) target = $region32
    $region31: #{lenet_forward.4} parent=5 // pred_region
      %s142 = ssub.s32 %s9, 1
      %p143 = scmp.lt.s32.totalorder %s14, 1
      %s144 = scalar_select %p143, %s14, 1
      %s145 = smul.addr %s144, 64
      %s146 = smul.addr %s145, 4
      %s147 = scalar_lea.vmem %s0, %s146
      %p148 = pneg %p35
      %p149 = pneg %p32
      %p150 = pneg %p56
      %p151 = pneg %p53
      %p152 = pneg %p77
      %p153 = pneg %p74
      %p154 = pneg %p103
      %p155 = pneg %p100
      %p156 = scmp.lt.s32.totalorder %s14, 1
      %s157 = scalar_select %p156, %s14, 1
      %s158 = smul.addr %s157, 4
      %s159 = smul.addr %s158, 4
      %s160 = scalar_lea.vmem %s3, %s159
      %p161 = scmp.lt.s32.totalorder %s14, 1
      %s162 = scalar_select %p161, %s14, 1
      %s163 = smul.addr %s162, 64
      %s164 = smul.addr %s163, 4
      %s165 = scalar_lea.vmem %s0, %s164
      %p166 = scmp.lt.s32.totalorder %s14, 1
      %s167 = scalar_select %p166, %s14, 1
      %s168 = smul.addr %s167, 4
      %s169 = smul.addr %s168, 4
      %s170 = scalar_lea.vmem %s3, %s169
      %v172 = vld [vmem:[%s165] sm:$0xff]
      %v173 = vld [vmem:[%s165 + $0x8] sm:$0xff]
      %v174 = vld [vmem:[%s165 + $0x10] sm:$0xff]
      %v175 = vld [vmem:[%s165 + $0x18] sm:$0xff]
      %v176 = vld [vmem:[%s165 + $0x20] sm:$0xff]
      %v177 = vld [vmem:[%s165 + $0x28] sm:$0xff]
      %v178 = vld [vmem:[%s165 + $0x30] sm:$0xff]
      %v179 = vld [vmem:[%s165 + $0x38] sm:$0xff]
      %v180 = vld [vmem:[%s165 + $0x40] sm:$0xff]
      %v181 = vld [vmem:[%s165 + $0x48] sm:$0xff]
      %v182 = vld [vmem:[%s165 + $0x50] sm:$0xff]
      %v183 = vld [vmem:[%s165 + $0x58] sm:$0xff]
      %v184 = vld [vmem:[%s165 + $0x60] sm:$0xff]
      %v185 = vld [vmem:[%s165 + $0x68] sm:$0xff]
      %v186 = vld [vmem:[%s165 + $0x70] sm:$0xff]
      %v187 = vld [vmem:[%s165 + $0x78] sm:$0xff]
      %v188 = vld [vmem:[%s165 + $0x80] sm:$0xff]
      %v189 = vld [vmem:[%s165 + $0x88] sm:$0xff]
      %v190 = vld [vmem:[%s165 + $0x90] sm:$0xff]
      %v191 = vld [vmem:[%s165 + $0x98] sm:$0xff]
      %v192 = vld [vmem:[%s165 + $0xa0] sm:$0xff]
      %v193 = vld [vmem:[%s165 + $0xa8] sm:$0xff]
      %v194 = vld [vmem:[%s165 + $0xb0] sm:$0xff]
      %v195 = vld [vmem:[%s165 + $0xb8] sm:$0xff]
      %v196 = vld [vmem:[%s165 + $0xc0] sm:$0xff]
      %v197 = vld [vmem:[%s165 + $0xc8] sm:$0xff]
      %v198 = vld [vmem:[%s165 + $0xd0] sm:$0xff]
      %v199 = vld [vmem:[%s165 + $0xd8] sm:$0xff]
      %v200 = vld [vmem:[%s165 + $0xe0] sm:$0xff]
      %v201 = vld [vmem:[%s165 + $0xe8] sm:$0xff]
      %v202 = vld [vmem:[%s165 + $0xf0] sm:$0xff]
      %v203 = vld [vmem:[%s165 + $0xf8] sm:$0xff]
      %v204 = vld [vmem:[%s1] sm:$0xf]
      %v205 = vld [vmem:[%s1 + $0x4] sm:$0xf]
      %v206 = vld [vmem:[%s1 + $0x8] sm:$0xf]
      %v207 = vld [vmem:[%s1 + $0xc] sm:$0xf]
      %v208 = vld [vmem:[%s1 + $0x10] sm:$0xf]
      %v209 = vld [vmem:[%s1 + $0x14] sm:$0xf]
      %v210 = vld [vmem:[%s1 + $0x18] sm:$0xf]
      %v211 = vld [vmem:[%s1 + $0x1c] sm:$0xf]
      %v212 = vld [vmem:[%s1 + $0x20] sm:$0xf]
      %v213 = vld [vmem:[%s1 + $0x24] sm:$0xf]
      %v214 = vld [vmem:[%s1 + $0x28] sm:$0xf]
      %v215 = vld [vmem:[%s1 + $0x2c] sm:$0xf]
      %v216 = vld [vmem:[%s1 + $0x30] sm:$0xf]
      %v217 = vld [vmem:[%s1 + $0x34] sm:$0xf]
      %v218 = vld [vmem:[%s1 + $0x38] sm:$0xf]
      %v219 = vld [vmem:[%s1 + $0x3c] sm:$0xf]
      %v220 = vld [vmem:[%s1 + $0x40] sm:$0xf]
      %v221 = vld [vmem:[%s1 + $0x44] sm:$0xf]
      %v222 = vld [vmem:[%s1 + $0x48] sm:$0xf]
      %v223 = vld [vmem:[%s1 + $0x4c] sm:$0xf]
      %v224 = vld [vmem:[%s1 + $0x50] sm:$0xf]
      %v225 = vld [vmem:[%s1 + $0x54] sm:$0xf]
      %v226 = vld [vmem:[%s1 + $0x58] sm:$0xf]
      %v227 = vld [vmem:[%s1 + $0x5c] sm:$0xf]
      %v228 = vld [vmem:[%s1 + $0x60] sm:$0xf]
      %v229 = vld [vmem:[%s1 + $0x64] sm:$0xf]
      %v230 = vld [vmem:[%s1 + $0x68] sm:$0xf]
      %v231 = vld [vmem:[%s1 + $0x6c] sm:$0xf]
      %v232 = vld [vmem:[%s1 + $0x70] sm:$0xf]
      %v233 = vld [vmem:[%s1 + $0x74] sm:$0xf]
      %v234 = vld [vmem:[%s1 + $0x78] sm:$0xf]
      %v235 = vld [vmem:[%s1 + $0x7c] sm:$0xf]
      %v236 = vld [vmem:[%s1 + $0x80] sm:$0xf]
      %v237 = vld [vmem:[%s1 + $0x84] sm:$0xf]
      %v238 = vld [vmem:[%s1 + $0x88] sm:$0xf]
      %v239 = vld [vmem:[%s1 + $0x8c] sm:$0xf]
      %v240 = vld [vmem:[%s1 + $0x90] sm:$0xf]
      %v241 = vld [vmem:[%s1 + $0x94] sm:$0xf]
      %v242 = vld [vmem:[%s1 + $0x98] sm:$0xf]
      %v243 = vld [vmem:[%s1 + $0x9c] sm:$0xf]
      %v244 = vld [vmem:[%s1 + $0xa0] sm:$0xf]
      %v245 = vld [vmem:[%s1 + $0xa4] sm:$0xf]
      %v246 = vld [vmem:[%s1 + $0xa8] sm:$0xf]
      %v247 = vld [vmem:[%s1 + $0xac] sm:$0xf]
      %v248 = vld [vmem:[%s1 + $0xb0] sm:$0xf]
      %v249 = vld [vmem:[%s1 + $0xb4] sm:$0xf]
      %v250 = vld [vmem:[%s1 + $0xb8] sm:$0xf]
      %v251 = vld [vmem:[%s1 + $0xbc] sm:$0xf]
      %v252 = vld [vmem:[%s1 + $0xc0] sm:$0xf]
      %v253 = vld [vmem:[%s1 + $0xc4] sm:$0xf]
      %v254 = vld [vmem:[%s1 + $0xc8] sm:$0xf]
      %v255 = vld [vmem:[%s1 + $0xcc] sm:$0xf]
      %v256 = vld [vmem:[%s1 + $0xd0] sm:$0xf]
      %v257 = vld [vmem:[%s1 + $0xd4] sm:$0xf]
      %v258 = vld [vmem:[%s1 + $0xd8] sm:$0xf]
      %v259 = vld [vmem:[%s1 + $0xdc] sm:$0xf]
      %v260 = vld [vmem:[%s1 + $0xe0] sm:$0xf]
      %v261 = vld [vmem:[%s1 + $0xe4] sm:$0xf]
      %v262 = vld [vmem:[%s1 + $0xe8] sm:$0xf]
      %v263 = vld [vmem:[%s1 + $0xec] sm:$0xf]
      %v264 = vld [vmem:[%s1 + $0xf0] sm:$0xf]
      %v265 = vld [vmem:[%s1 + $0xf4] sm:$0xf]
      %v266 = vld [vmem:[%s1 + $0xf8] sm:$0xf]
      %v267 = vld [vmem:[%s1 + $0xfc] sm:$0xf]
      %v300 = vunpack.c.l.b16 %v172
      %v301 = vunpack.c.h.b16 %v172
      %v302 = vunpack.c.l.b16 %v173
      %v303 = vunpack.c.h.b16 %v173
      %v304 = vunpack.c.l.b16 %v174
      %v305 = vunpack.c.h.b16 %v174
      %v306 = vunpack.c.l.b16 %v175
      %v307 = vunpack.c.h.b16 %v175
      %v308 = vunpack.c.l.b16 %v176
      %v309 = vunpack.c.h.b16 %v176
      %v310 = vunpack.c.l.b16 %v177
      %v311 = vunpack.c.h.b16 %v177
      %v312 = vunpack.c.l.b16 %v178
      %v313 = vunpack.c.h.b16 %v178
      %v314 = vunpack.c.l.b16 %v179
      %v315 = vunpack.c.h.b16 %v179
      %v316 = vunpack.c.l.b16 %v180
      %v317 = vunpack.c.h.b16 %v180
      %v318 = vunpack.c.l.b16 %v181
      %v319 = vunpack.c.h.b16 %v181
      %v320 = vunpack.c.l.b16 %v182
      %v321 = vunpack.c.h.b16 %v182
      %v322 = vunpack.c.l.b16 %v183
      %v323 = vunpack.c.h.b16 %v183
      %v324 = vunpack.c.l.b16 %v184
      %v325 = vunpack.c.h.b16 %v184
      %v326 = vunpack.c.l.b16 %v185
      %v327 = vunpack.c.h.b16 %v185
      %v328 = vunpack.c.l.b16 %v186
      %v329 = vunpack.c.h.b16 %v186
      %v330 = vunpack.c.l.b16 %v187
      %v331 = vunpack.c.h.b16 %v187
      %v332 = vunpack.c.l.b16 %v188
      %v333 = vunpack.c.h.b16 %v188
      %v334 = vunpack.c.l.b16 %v189
      %v335 = vunpack.c.h.b16 %v189
      %v336 = vunpack.c.l.b16 %v190
      %v337 = vunpack.c.h.b16 %v190
      %v338 = vunpack.c.l.b16 %v191
      %v339 = vunpack.c.h.b16 %v191
      %v340 = vunpack.c.l.b16 %v192
      %v341 = vunpack.c.h.b16 %v192
      %v342 = vunpack.c.l.b16 %v193
      %v343 = vunpack.c.h.b16 %v193
      %v344 = vunpack.c.l.b16 %v194
      %v345 = vunpack.c.h.b16 %v194
      %v346 = vunpack.c.l.b16 %v195
      %v347 = vunpack.c.h.b16 %v195
      %v348 = vunpack.c.l.b16 %v196
      %v349 = vunpack.c.h.b16 %v196
      %v350 = vunpack.c.l.b16 %v197
      %v351 = vunpack.c.h.b16 %v197
      %v352 = vunpack.c.l.b16 %v198
      %v353 = vunpack.c.h.b16 %v198
      %v354 = vunpack.c.l.b16 %v199
      %v355 = vunpack.c.h.b16 %v199
      %v356 = vunpack.c.l.b16 %v200
      %v357 = vunpack.c.h.b16 %v200
      %v358 = vunpack.c.l.b16 %v201
      %v359 = vunpack.c.h.b16 %v201
      %v360 = vunpack.c.l.b16 %v202
      %v361 = vunpack.c.h.b16 %v202
      %v362 = vunpack.c.l.b16 %v203
      %v363 = vunpack.c.h.b16 %v203
      %v364 = vpack.c.b16 %v304, %v300
      %v365 = vpack.c.b16 %v305, %v301
      %v366 = vpack.c.b16 %v306, %v302
      %v367 = vpack.c.b16 %v307, %v303
      %v368 = vpack.c.b16 %v312, %v308
      %v369 = vpack.c.b16 %v313, %v309
      %v370 = vpack.c.b16 %v314, %v310
      %v371 = vpack.c.b16 %v315, %v311
      %v372 = vpack.c.b16 %v320, %v316
      %v373 = vpack.c.b16 %v321, %v317
      %v374 = vpack.c.b16 %v322, %v318
      %v375 = vpack.c.b16 %v323, %v319
      %v376 = vpack.c.b16 %v328, %v324
      %v377 = vpack.c.b16 %v329, %v325
      %v378 = vpack.c.b16 %v330, %v326
      %v379 = vpack.c.b16 %v331, %v327
      %v380 = vpack.c.b16 %v336, %v332
      %v381 = vpack.c.b16 %v337, %v333
      %v382 = vpack.c.b16 %v338, %v334
      %v383 = vpack.c.b16 %v339, %v335
      %v384 = vpack.c.b16 %v344, %v340
      %v385 = vpack.c.b16 %v345, %v341
      %v386 = vpack.c.b16 %v346, %v342
      %v387 = vpack.c.b16 %v347, %v343
      %v388 = vpack.c.b16 %v352, %v348
      %v389 = vpack.c.b16 %v353, %v349
      %v390 = vpack.c.b16 %v354, %v350
      %v391 = vpack.c.b16 %v355, %v351
      %v392 = vpack.c.b16 %v360, %v356
      %v393 = vpack.c.b16 %v361, %v357
      %v394 = vpack.c.b16 %v362, %v358
      %v395 = vpack.c.b16 %v363, %v359
      %v492 = vunpack.c.l.b16 %v204
      %v493 = vunpack.c.l.b16 %v205
      %v494 = vunpack.c.l.b16 %v206
      %v495 = vunpack.c.l.b16 %v207
      %v496 = vunpack.c.l.b16 %v208
      %v497 = vunpack.c.l.b16 %v209
      %v498 = vunpack.c.l.b16 %v210
      %v499 = vunpack.c.l.b16 %v211
      %v500 = vunpack.c.l.b16 %v212
      %v501 = vunpack.c.l.b16 %v213
      %v502 = vunpack.c.l.b16 %v214
      %v503 = vunpack.c.l.b16 %v215
      %v504 = vunpack.c.l.b16 %v216
      %v505 = vunpack.c.l.b16 %v217
      %v506 = vunpack.c.l.b16 %v218
      %v507 = vunpack.c.l.b16 %v219
      %v508 = vunpack.c.l.b16 %v220
      %v509 = vunpack.c.l.b16 %v221
      %v510 = vunpack.c.l.b16 %v222
      %v511 = vunpack.c.l.b16 %v223
      %v512 = vunpack.c.l.b16 %v224
      %v513 = vunpack.c.l.b16 %v225
      %v514 = vunpack.c.l.b16 %v226
      %v515 = vunpack.c.l.b16 %v227
      %v516 = vunpack.c.l.b16 %v228
      %v517 = vunpack.c.l.b16 %v229
      %v518 = vunpack.c.l.b16 %v230
      %v519 = vunpack.c.l.b16 %v231
      %v520 = vunpack.c.l.b16 %v232
      %v521 = vunpack.c.l.b16 %v233
      %v522 = vunpack.c.l.b16 %v234
      %v523 = vunpack.c.l.b16 %v235
      %v524 = vunpack.c.l.b16 %v236
      %v525 = vunpack.c.l.b16 %v237
      %v526 = vunpack.c.l.b16 %v238
      %v527 = vunpack.c.l.b16 %v239
      %v528 = vunpack.c.l.b16 %v240
      %v529 = vunpack.c.l.b16 %v241
      %v530 = vunpack.c.l.b16 %v242
      %v531 = vunpack.c.l.b16 %v243
      %v532 = vunpack.c.l.b16 %v244
      %v533 = vunpack.c.l.b16 %v245
      %v534 = vunpack.c.l.b16 %v246
      %v535 = vunpack.c.l.b16 %v247
      %v536 = vunpack.c.l.b16 %v248
      %v537 = vunpack.c.l.b16 %v249
      %v538 = vunpack.c.l.b16 %v250
      %v539 = vunpack.c.l.b16 %v251
      %v540 = vunpack.c.l.b16 %v252
      %v541 = vunpack.c.l.b16 %v253
      %v542 = vunpack.c.l.b16 %v254
      %v543 = vunpack.c.l.b16 %v255
      %v544 = vunpack.c.l.b16 %v256
      %v545 = vunpack.c.l.b16 %v257
      %v546 = vunpack.c.l.b16 %v258
      %v547 = vunpack.c.l.b16 %v259
      %v548 = vunpack.c.l.b16 %v260
      %v549 = vunpack.c.l.b16 %v261
      %v550 = vunpack.c.l.b16 %v262
      %v551 = vunpack.c.l.b16 %v263
      %v552 = vunpack.c.l.b16 %v264
      %v553 = vunpack.c.l.b16 %v265
      %v554 = vunpack.c.l.b16 %v266
      %v555 = vunpack.c.l.b16 %v267
      %v556 = vpack.c.b16 %v493, %v492
      %v557 = vpack.c.b16 %v495, %v494
      %v558 = vpack.c.b16 %v497, %v496
      %v559 = vpack.c.b16 %v499, %v498
      %v560 = vpack.c.b16 %v501, %v500
      %v561 = vpack.c.b16 %v503, %v502
      %v562 = vpack.c.b16 %v505, %v504
      %v563 = vpack.c.b16 %v507, %v506
      %v564 = vpack.c.b16 %v509, %v508
      %v565 = vpack.c.b16 %v511, %v510
      %v566 = vpack.c.b16 %v513, %v512
      %v567 = vpack.c.b16 %v515, %v514
      %v568 = vpack.c.b16 %v517, %v516
      %v569 = vpack.c.b16 %v519, %v518
      %v570 = vpack.c.b16 %v521, %v520
      %v571 = vpack.c.b16 %v523, %v522
      %v572 = vpack.c.b16 %v525, %v524
      %v573 = vpack.c.b16 %v527, %v526
      %v574 = vpack.c.b16 %v529, %v528
      %v575 = vpack.c.b16 %v531, %v530
      %v576 = vpack.c.b16 %v533, %v532
      %v577 = vpack.c.b16 %v535, %v534
      %v578 = vpack.c.b16 %v537, %v536
      %v579 = vpack.c.b16 %v539, %v538
      %v580 = vpack.c.b16 %v541, %v540
      %v581 = vpack.c.b16 %v543, %v542
      %v582 = vpack.c.b16 %v545, %v544
      %v583 = vpack.c.b16 %v547, %v546
      %v584 = vpack.c.b16 %v549, %v548
      %v585 = vpack.c.b16 %v551, %v550
      %v586 = vpack.c.b16 %v553, %v552
      %v587 = vpack.c.b16 %v555, %v554
      %620 = vmatprep.subr.bf16.mxu0 0
      %621 = vmatpush1.bf16.msra.mxu0 %v556
      %622 = vmatprep.subr.bf16.mxu0 0
      %623 = vmatpush1.bf16.msra.mxu0 %v557
      %624 = vmatprep.subr.bf16.mxu0 0
      %625 = vmatpush1.bf16.msra.mxu0 %v558
      %626 = vmatprep.subr.bf16.mxu0 0
      %627 = vmatpush1.bf16.msra.mxu0 %v559
      %628 = vmatprep.subr.bf16.mxu0 0
      %629 = vmatpush1.bf16.msra.mxu0 %v560
      %630 = vmatprep.subr.bf16.mxu0 0
      %631 = vmatpush1.bf16.msra.mxu0 %v561
      %632 = vmatprep.subr.bf16.mxu0 0
      %633 = vmatpush1.bf16.msra.mxu0 %v562
      %634 = vmatprep.subr.bf16.mxu0 0
      %635 = vmatpush1.bf16.msra.mxu0 %v563
      %636 = vmatprep.subr.bf16.mxu0 0
      %637 = vmatpush1.bf16.msra.mxu0 %v564
      %638 = vmatprep.subr.bf16.mxu0 0
      %639 = vmatpush1.bf16.msra.mxu0 %v565
      %640 = vmatprep.subr.bf16.mxu0 0
      %641 = vmatpush1.bf16.msra.mxu0 %v566
      %642 = vmatprep.subr.bf16.mxu0 0
      %643 = vmatpush1.bf16.msra.mxu0 %v567
      %644 = vmatprep.subr.bf16.mxu0 0
      %645 = vmatpush1.bf16.msra.mxu0 %v568
      %646 = vmatprep.subr.bf16.mxu0 0
      %647 = vmatpush1.bf16.msra.mxu0 %v569
      %648 = vmatprep.subr.bf16.mxu0 0
      %649 = vmatpush1.bf16.msra.mxu0 %v570
      %650 = vmatprep.subr.bf16.mxu0 0
      %651 = vmatpush1.bf16.msra.mxu0 %v571
      %652 = vmatprep.mubr.bf16.mxu0 %v365
      %653 = vmatmul.mubr.bf16.gmra.mrb[0].mxu0 %v364
      %v654 = vpop.f32.mrb[0].mxu0
      %v655 = vadd.f32 0.0, %v654
      %v656 = vpop.f32.mrb[0].mxu0
      %v657 = vpop.f32.mrb[0].mxu0
      %v658 = vadd.f32 0.0, %v657
      %v659 = vpop.f32.mrb[0].mxu0
      %660 = vmatprep.mubr.bf16.mxu0 %v369
      %661 = vmatmul.mubr.bf16.gmra.mrb[0].mxu0 %v368
      %v662 = vpop.f32.mrb[0].mxu0
      %v663 = vadd.f32 0.0, %v662
      %v664 = vpop.f32.mrb[0].mxu0
      %v665 = vpop.f32.mrb[0].mxu0
      %v666 = vadd.f32 0.0, %v665
      %v667 = vpop.f32.mrb[0].mxu0
      %668 = vmatprep.mubr.bf16.mxu0 %v373
      %669 = vmatmul.mubr.bf16.gmra.mrb[0].mxu0 %v372
      %v670 = vpop.f32.mrb[0].mxu0
      %v671 = vadd.f32 0.0, %v670
      %v672 = vpop.f32.mrb[0].mxu0
      %v673 = vpop.f32.mrb[0].mxu0
      %v674 = vadd.f32 0.0, %v673
      %v675 = vpop.f32.mrb[0].mxu0
      %676 = vmatprep.mubr.bf16.mxu0 %v377
      %677 = vmatmul.mubr.bf16.gmra.mrb[0].mxu0 %v376
      %v678 = vpop.f32.mrb[0].mxu0
      %v679 = vadd.f32 0.0, %v678
      %v680 = vpop.f32.mrb[0].mxu0
      %v681 = vpop.f32.mrb[0].mxu0
      %v682 = vadd.f32 0.0, %v681
      %v683 = vpop.f32.mrb[0].mxu0
      %684 = vmatprep.mubr.bf16.mxu0 %v381
      %685 = vmatmul.mubr.bf16.gmra.mrb[0].mxu0 %v380
      %v686 = vpop.f32.mrb[0].mxu0
      %v687 = vadd.f32 0.0, %v686
      %v688 = vpop.f32.mrb[0].mxu0
      %v689 = vpop.f32.mrb[0].mxu0
      %v690 = vadd.f32 0.0, %v689
      %v691 = vpop.f32.mrb[0].mxu0
      %692 = vmatprep.mubr.bf16.mxu0 %v385
      %693 = vmatmul.mubr.bf16.gmra.mrb[0].mxu0 %v384
      %v694 = vpop.f32.mrb[0].mxu0
      %v695 = vadd.f32 0.0, %v694
      %v696 = vpop.f32.mrb[0].mxu0
      %v697 = vpop.f32.mrb[0].mxu0
      %v698 = vadd.f32 0.0, %v697
      %v699 = vpop.f32.mrb[0].mxu0
      %700 = vmatprep.mubr.bf16.mxu0 %v389
      %701 = vmatmul.mubr.bf16.gmra.mrb[0].mxu0 %v388
      %v702 = vpop.f32.mrb[0].mxu0
      %v703 = vadd.f32 0.0, %v702
      %v704 = vpop.f32.mrb[0].mxu0
      %v705 = vpop.f32.mrb[0].mxu0
      %v706 = vadd.f32 0.0, %v705
      %v707 = vpop.f32.mrb[0].mxu0
      %708 = vmatprep.mubr.bf16.mxu0 %v393
      %709 = vmatmul.mubr.bf16.gmra.mrb[0].mxu0 %v392
      %v710 = vpop.f32.mrb[0].mxu0
      %v711 = vadd.f32 0.0, %v710
      %v712 = vpop.f32.mrb[0].mxu0
      %v713 = vpop.f32.mrb[0].mxu0
      %v714 = vadd.f32 0.0, %v713
      %v715 = vpop.f32.mrb[0].mxu0
      %716 = vdwg.mxu0
      %717 = vmatprep.subr.bf16.mxu0 0
      %718 = vmatpush1.bf16.msra.mxu0 %v572
      %719 = vmatprep.subr.bf16.mxu0 0
      %720 = vmatpush1.bf16.msra.mxu0 %v573
      %721 = vmatprep.subr.bf16.mxu0 0
      %722 = vmatpush1.bf16.msra.mxu0 %v574
      %723 = vmatprep.subr.bf16.mxu0 0
      %724 = vmatpush1.bf16.msra.mxu0 %v575
      %725 = vmatprep.subr.bf16.mxu0 0
      %726 = vmatpush1.bf16.msra.mxu0 %v576
      %727 = vmatprep.subr.bf16.mxu0 0
      %728 = vmatpush1.bf16.msra.mxu0 %v577
      %729 = vmatprep.subr.bf16.mxu0 0
      %730 = vmatpush1.bf16.msra.mxu0 %v578
      %731 = vmatprep.subr.bf16.mxu0 0
      %732 = vmatpush1.bf16.msra.mxu0 %v579
      %733 = vmatprep.subr.bf16.mxu0 0
      %734 = vmatpush1.bf16.msra.mxu0 %v580
      %735 = vmatprep.subr.bf16.mxu0 0
      %736 = vmatpush1.bf16.msra.mxu0 %v581
      %737 = vmatprep.subr.bf16.mxu0 0
      %738 = vmatpush1.bf16.msra.mxu0 %v582
      %739 = vmatprep.subr.bf16.mxu0 0
      %740 = vmatpush1.bf16.msra.mxu0 %v583
      %741 = vmatprep.subr.bf16.mxu0 0
      %742 = vmatpush1.bf16.msra.mxu0 %v584
      %743 = vmatprep.subr.bf16.mxu0 0
      %744 = vmatpush1.bf16.msra.mxu0 %v585
      %745 = vmatprep.subr.bf16.mxu0 0
      %746 = vmatpush1.bf16.msra.mxu0 %v586
      %747 = vmatprep.subr.bf16.mxu0 0
      %748 = vmatpush1.bf16.msra.mxu0 %v587
      %749 = vmatprep.mubr.bf16.mxu0 %v367
      %750 = vmatmul.mubr.bf16.gmra.mrb[0].mxu0 %v366
      %v751 = vpop.f32.mrb[0].mxu0
      %v752 = vadd.f32 %v655, %v751
      %v753 = vpop.f32.mrb[0].mxu0
      %v754 = vpop.f32.mrb[0].mxu0
      %v755 = vadd.f32 %v658, %v754
      %v756 = vpop.f32.mrb[0].mxu0
      %757 = vmatprep.mubr.bf16.mxu0 %v371
      %758 = vmatmul.mubr.bf16.gmra.mrb[0].mxu0 %v370
      %v759 = vpop.f32.mrb[0].mxu0
      %v760 = vadd.f32 %v663, %v759
      %v761 = vpop.f32.mrb[0].mxu0
      %v762 = vpop.f32.mrb[0].mxu0
      %v763 = vadd.f32 %v666, %v762
      %v764 = vpop.f32.mrb[0].mxu0
      %765 = vmatprep.mubr.bf16.mxu0 %v375
      %766 = vmatmul.mubr.bf16.gmra.mrb[0].mxu0 %v374
      %v767 = vpop.f32.mrb[0].mxu0
      %v768 = vadd.f32 %v671, %v767
      %v769 = vpop.f32.mrb[0].mxu0
      %v770 = vpop.f32.mrb[0].mxu0
      %v771 = vadd.f32 %v674, %v770
      %v772 = vpop.f32.mrb[0].mxu0
      %773 = vmatprep.mubr.bf16.mxu0 %v379
      %774 = vmatmul.mubr.bf16.gmra.mrb[0].mxu0 %v378
      %v775 = vpop.f32.mrb[0].mxu0
      %v776 = vadd.f32 %v679, %v775
      %v777 = vpop.f32.mrb[0].mxu0
      %v778 = vpop.f32.mrb[0].mxu0
      %v779 = vadd.f32 %v682, %v778
      %v780 = vpop.f32.mrb[0].mxu0
      %781 = vmatprep.mubr.bf16.mxu0 %v383
      %782 = vmatmul.mubr.bf16.gmra.mrb[0].mxu0 %v382
      %v783 = vpop.f32.mrb[0].mxu0
      %v784 = vadd.f32 %v687, %v783
      %v785 = vpop.f32.mrb[0].mxu0
      %v786 = vpop.f32.mrb[0].mxu0
      %v787 = vadd.f32 %v690, %v786
      %v788 = vpop.f32.mrb[0].mxu0
      %789 = vmatprep.mubr.bf16.mxu0 %v387
      %790 = vmatmul.mubr.bf16.gmra.mrb[0].mxu0 %v386
      %v791 = vpop.f32.mrb[0].mxu0
      %v792 = vadd.f32 %v695, %v791
      %v793 = vpop.f32.mrb[0].mxu0
      %v794 = vpop.f32.mrb[0].mxu0
      %v795 = vadd.f32 %v698, %v794
      %v796 = vpop.f32.mrb[0].mxu0
      %797 = vmatprep.mubr.bf16.mxu0 %v391
      %798 = vmatmul.mubr.bf16.gmra.mrb[0].mxu0 %v390
      %v799 = vpop.f32.mrb[0].mxu0
      %v800 = vadd.f32 %v703, %v799
      %v801 = vpop.f32.mrb[0].mxu0
      %v802 = vpop.f32.mrb[0].mxu0
      %v803 = vadd.f32 %v706, %v802
      %v804 = vpop.f32.mrb[0].mxu0
      %805 = vmatprep.mubr.bf16.mxu0 %v395
      %806 = vmatmul.mubr.bf16.gmra.mrb[0].mxu0 %v394
      %v807 = vpop.f32.mrb[0].mxu0
      %v808 = vadd.f32 %v711, %v807
      %v809 = vpop.f32.mrb[0].mxu0
      %v810 = vpop.f32.mrb[0].mxu0
      %v811 = vadd.f32 %v714, %v810
      %v812 = vpop.f32.mrb[0].mxu0
      %813 = vdwg.mxu0
      %v814 = vmax.f32 %v752, %v768
      %v815 = vmax.f32 %v755, %v771
      %v816 = vmax.f32 %v760, %v776
      %v817 = vmax.f32 %v763, %v779
      %v818 = vmax.f32 %v784, %v800
      %v819 = vmax.f32 %v787, %v803
      %v820 = vmax.f32 %v792, %v808
      %v821 = vmax.f32 %v795, %v811
      %v822 = vmax.f32 %v814, %v818
      %v823 = vmax.f32 %v815, %v819
      %v824 = vmax.f32 %v816, %v820
      %v825 = vmax.f32 %v817, %v821
      %v826 = vld [vmem:[%s2] sm:$0x1]
      %v828 = vlaneseq
      %v829 = vshrl.u32 %v828, 7
      %v830 = vsub.s32 0, %v829
      %v831 = vrot.slane %v826, %v830
      %v833 = vadd.f32 %v822, %v831
      %v834 = vadd.f32 %v823, %v831
      %v835 = vadd.f32 %v824, %v831
      %v836 = vadd.f32 %v825, %v831
      %v837 = vtanh.pop %v833
      %v838 = vtanh.pop %v834
      %v839 = vtanh.pop %v835
      %v840 = vtanh.pop %v836
      %v841 = vpack.c.bf16 %v838, %v837
      %v842 = vpack.c.bf16 %v840, %v839
      %v845 = vunpack.c.l.b16 %v841
      %v846 = vunpack.c.h.b16 %v841
      %v847 = vunpack.c.l.b16 %v842
      %v848 = vunpack.c.h.b16 %v842
      %v849 = vpack.c.b16 %v845, %v845
      %v850 = vpack.c.b16 %v846, %v846
      %v851 = vpack.c.b16 %v847, %v847
      %v852 = vpack.c.b16 %v848, %v848
      %857 = vst [vmem:[%s170] sm:$0xf] %v849
      %858 = vst [vmem:[%s170 + $0x4] sm:$0xf] %v850
      %859 = vst [vmem:[%s170 + $0x8] sm:$0xf] %v851
      %860 = vst [vmem:[%s170 + $0xc] sm:$0xf] %v852
      %p861 = scmp.lt.s32.totalorder %s14, 1
      %s862 = scalar_select %p861, %s14, 1
      %s863 = smul.addr %s862, 4
      %s864 = smul.addr %s863, 4
      %s865 = scalar_lea.vmem %s3, %s864
      // Predicated region
      $region33: #{lenet_forward.4} parent=31 // pred_check
        %p866 = pneg %p100
      $region34: #{lenet_forward.4} parent=31 // pred_check_branch
        %868 = sbr.rel (%p866) target = $region36
      $region35: #{lenet_forward.4} parent=31 // pred_region
        _
      $region36: #{lenet_forward.4} parent=31 // pred_fallthru
        _
    $region32: #{lenet_forward.4} parent=5 // pred_fallthru
      _
    %p869 = scmp.le.s32.totalorder 2, %s9
    // Predicated region
    $region37: #{lenet_forward.4} parent=5 // pred_check
      %p870 = pneg %p869
    $region38: #{lenet_forward.4} parent=5 // pred_check_branch
      %872 = sbr.rel (%p870) target = $region40
    $region39: #{lenet_forward.4} parent=5 // pred_region
      %s873 = ssub.s32 %s9, 2
      // Predicated region
      $region41: #{lenet_forward.4} parent=39 // pred_check
        %p874 = pneg %p106
      $region42: #{lenet_forward.4} parent=39 // pred_check_branch
        %876 = sbr.rel (%p874) target = $region44
      $region43: #{lenet_forward.4} parent=39 // pred_region
        %p877 = scmp.lt.s32.totalorder %s15, 1
        %s878 = scalar_select %p877, %s15, 1
        %s879 = smul.addr %s878, 4
        %s880 = smul.addr %s879, 4
        %s881 = scalar_lea.vmem %s3, %s880
      $region44: #{lenet_forward.4} parent=39 // pred_fallthru
        _
    $region40: #{lenet_forward.4} parent=5 // pred_fallthru
      _
  $region6: #{lenet_forward.4} parent=0 // loop_footer
    %s13 = sadd.s32 1, %s9
  $region7: #{lenet_forward.4} parent=0 // loop_footer_branch
    %8 = sbr.rel target = $region3
  $region8: #{lenet_forward.4} parent=0 // loop_exit
    _

// kernel: lenet_forward.5
$region0: #{lenet_forward.5}
  #allocation0 [shape = 'u32[]', space=smem, size = 0x4, offset = 0x4, fixed_abs, tag = 'smem constant byte address 0x4 - core index']
  #allocation1 [shape = 'u32[144,128]{1,0:T(1,128)}', space=vmem, size = 0x12000, scoped, tag = 'internal scratch']
  %s0 = inlined_call_operand.vmem [shape: bf16[2,1200], index: 0, kind: input, shape index: {}]
  %s1 = inlined_call_operand.vmem [shape: bf16[1200,384], index: 1, kind: input, shape index: {}]
  %s2 = inlined_call_operand.vmem [shape: f32[1,384], index: 2, kind: input, shape index: {}]
  %s3 = inlined_call_operand.vmem [shape: bf16[384,256], index: 3, kind: input, shape index: {}]
  %s4 = inlined_call_operand.vmem [shape: f32[1,256], index: 4, kind: input, shape index: {}]
  %s5 = inlined_call_operand.vmem [shape: bf16[256,128], index: 5, kind: input, shape index: {}]
  %s6 = inlined_call_operand.vmem [shape: f32[1,128], index: 6, kind: input, shape index: {}]
  %s7 = inlined_call_operand.vmem [shape: f32[2,128], index: 7, kind: output, shape index: {}]
  %s8 = sld [smem:[#allocation0]]
  $region38: #{lenet_forward.5} parent=0
    _
  %s10 = ssub.s32 1, %s8
  %s11 = scalar_select 0, %s10, %s8
  // Predicated region
  $region2: #{lenet_forward.5} parent=0 // pred_check
    _
  $region3: #{lenet_forward.5} parent=0 // pred_check_branch
    %13 = sbr.rel (0) target = $region5
  $region4: #{lenet_forward.5} parent=0 // pred_region
    _
  $region5: #{lenet_forward.5} parent=0 // pred_fallthru
    _
  // Predicated region
  $region6: #{lenet_forward.5} parent=0 // pred_check
    _
  $region7: #{lenet_forward.5} parent=0 // pred_check_branch
    %15 = sbr.rel (0) target = $region9
  $region8: #{lenet_forward.5} parent=0 // pred_region
    _
  $region9: #{lenet_forward.5} parent=0 // pred_fallthru
    _
  // Predicated region
  $region10: #{lenet_forward.5} parent=0 // pred_check
    _
  $region11: #{lenet_forward.5} parent=0 // pred_check_branch
    %17 = sbr.rel (0) target = $region13
  $region12: #{lenet_forward.5} parent=0 // pred_region
    _
  $region13: #{lenet_forward.5} parent=0 // pred_fallthru
    _
  // Predicated region
  $region14: #{lenet_forward.5} parent=0 // pred_check
    _
  $region15: #{lenet_forward.5} parent=0 // pred_check_branch
    %19 = sbr.rel (0) target = $region17
  $region16: #{lenet_forward.5} parent=0 // pred_region
    _
  $region17: #{lenet_forward.5} parent=0 // pred_fallthru
    _
  // Predicated region
  $region18: #{lenet_forward.5} parent=0 // pred_check
    _
  $region19: #{lenet_forward.5} parent=0 // pred_check_branch
    %21 = sbr.rel (0) target = $region21
  $region20: #{lenet_forward.5} parent=0 // pred_region
    _
  $region21: #{lenet_forward.5} parent=0 // pred_fallthru
    _
  // Predicated region
  $region22: #{lenet_forward.5} parent=0 // pred_check
    _
  $region23: #{lenet_forward.5} parent=0 // pred_check_branch
    %23 = sbr.rel (0) target = $region25
  $region24: #{lenet_forward.5} parent=0 // pred_region
    _
  $region25: #{lenet_forward.5} parent=0 // pred_fallthru
    _
  // Predicated region
  $region26: #{lenet_forward.5} parent=0 // pred_check
    _
  $region27: #{lenet_forward.5} parent=0 // pred_check_branch
    %25 = sbr.rel (0) target = $region29
  $region28: #{lenet_forward.5} parent=0 // pred_region
    _
  $region29: #{lenet_forward.5} parent=0 // pred_fallthru
    _
  %v27 = vld [vmem:[%s0] sm:$0xff]
  %v28 = vld [vmem:[%s0 + $0x8] sm:$0x3]
  %v29 = vld [vmem:[%s1] sm:$0xff]
  %v30 = vld [vmem:[%s1 + $0x8] sm:$0xf]
  %v31 = vld [vmem:[%s1 + $0xc] sm:$0xff]
  %v32 = vld [vmem:[%s1 + $0x14] sm:$0xf]
  %v33 = vld [vmem:[%s1 + $0x18] sm:$0xff]
  %v34 = vld [vmem:[%s1 + $0x20] sm:$0xf]
  %v35 = vld [vmem:[%s1 + $0x24] sm:$0xff]
  %v36 = vld [vmem:[%s1 + $0x2c] sm:$0xf]
  %v37 = vld [vmem:[%s1 + $0x30] sm:$0xff]
  %v38 = vld [vmem:[%s1 + $0x38] sm:$0xf]
  %v39 = vld [vmem:[%s1 + $0x3c] sm:$0xff]
  %v40 = vld [vmem:[%s1 + $0x44] sm:$0xf]
  %v41 = vld [vmem:[%s1 + $0x48] sm:$0xff]
  %v42 = vld [vmem:[%s1 + $0x50] sm:$0xf]
  %v43 = vld [vmem:[%s1 + $0x54] sm:$0xff]
  %v44 = vld [vmem:[%s1 + $0x5c] sm:$0xf]
  %v45 = vld [vmem:[%s1 + $0x60] sm:$0xff]
  %v46 = vld [vmem:[%s1 + $0x68] sm:$0xf]
  %v47 = vld [vmem:[%s1 + $0x6c] sm:$0xff]
  %v48 = vld [vmem:[%s1 + $0x74] sm:$0xf]
  %v49 = vld [vmem:[%s1 + $0x78] sm:$0xff]
  %v50 = vld [vmem:[%s1 + $0x80] sm:$0xf]
  %v51 = vld [vmem:[%s1 + $0x84] sm:$0xff]
  %v52 = vld [vmem:[%s1 + $0x8c] sm:$0xf]
  %v53 = vld [vmem:[%s1 + $0x90] sm:$0xff]
  %v54 = vld [vmem:[%s1 + $0x98] sm:$0xf]
  %v55 = vld [vmem:[%s1 + $0x9c] sm:$0xff]
  %v56 = vld [vmem:[%s1 + $0xa4] sm:$0xf]
  %v57 = vld [vmem:[%s1 + $0xa8] sm:$0xff]
  %v58 = vld [vmem:[%s1 + $0xb0] sm:$0xf]
  %v59 = vld [vmem:[%s1 + $0xb4] sm:$0xff]
  %v60 = vld [vmem:[%s1 + $0xbc] sm:$0xf]
  %v61 = vld [vmem:[%s1 + $0xc0] sm:$0xff]
  %v62 = vld [vmem:[%s1 + $0xc8] sm:$0xf]
  %v63 = vld [vmem:[%s1 + $0xcc] sm:$0xff]
  %v64 = vld [vmem:[%s1 + $0xd4] sm:$0xf]
  %v65 = vld [vmem:[%s1 + $0xd8] sm:$0xff]
  %v66 = vld [vmem:[%s1 + $0xe0] sm:$0xf]
  %v67 = vld [vmem:[%s1 + $0xe4] sm:$0xff]
  %v68 = vld [vmem:[%s1 + $0xec] sm:$0xf]
  %v69 = vld [vmem:[%s1 + $0xf0] sm:$0xff]
  %v70 = vld [vmem:[%s1 + $0xf8] sm:$0xf]
  %v71 = vld [vmem:[%s1 + $0xfc] sm:$0xff]
  %v72 = vld [vmem:[%s1 + $0x104] sm:$0xf]
  %v73 = vld [vmem:[%s1 + $0x108] sm:$0xff]
  %v74 = vld [vmem:[%s1 + $0x110] sm:$0xf]
  %v75 = vld [vmem:[%s1 + $0x114] sm:$0xff]
  %v76 = vld [vmem:[%s1 + $0x11c] sm:$0xf]
  %v77 = vld [vmem:[%s1 + $0x120] sm:$0xff]
  %v78 = vld [vmem:[%s1 + $0x128] sm:$0xf]
  %v79 = vld [vmem:[%s1 + $0x12c] sm:$0xff]
  %v80 = vld [vmem:[%s1 + $0x134] sm:$0xf]
  %v81 = vld [vmem:[%s1 + $0x138] sm:$0xff]
  %v82 = vld [vmem:[%s1 + $0x140] sm:$0xf]
  %v83 = vld [vmem:[%s1 + $0x144] sm:$0xff]
  %v84 = vld [vmem:[%s1 + $0x14c] sm:$0xf]
  %v85 = vld [vmem:[%s1 + $0x150] sm:$0xff]
  %v86 = vld [vmem:[%s1 + $0x158] sm:$0xf]
  %v87 = vld [vmem:[%s1 + $0x15c] sm:$0xff]
  %v88 = vld [vmem:[%s1 + $0x164] sm:$0xf]
  %v89 = vld [vmem:[%s1 + $0x168] sm:$0xff]
  %v90 = vld [vmem:[%s1 + $0x170] sm:$0xf]
  %v91 = vld [vmem:[%s1 + $0x174] sm:$0xff]
  %v92 = vld [vmem:[%s1 + $0x17c] sm:$0xf]
  %v93 = vld [vmem:[%s1 + $0x180] sm:$0xff]
  %v94 = vld [vmem:[%s1 + $0x188] sm:$0xf]
  %v95 = vld [vmem:[%s1 + $0x18c] sm:$0xff]
  %v96 = vld [vmem:[%s1 + $0x194] sm:$0xf]
  %v97 = vld [vmem:[%s1 + $0x198] sm:$0xff]
  %v98 = vld [vmem:[%s1 + $0x1a0] sm:$0xf]
  %v99 = vld [vmem:[%s1 + $0x1a4] sm:$0xff]
  %v100 = vld [vmem:[%s1 + $0x1ac] sm:$0xf]
  %v101 = vld [vmem:[%s1 + $0x1b0] sm:$0xff]
  %v102 = vld [vmem:[%s1 + $0x1b8] sm:$0xf]
  %v103 = vld [vmem:[%s1 + $0x1bc] sm:$0xff]
  %v104 = vld [vmem:[%s1 + $0x1c4] sm:$0xf]
  %v105 = vld [vmem:[%s1 + $0x1c8] sm:$0xff]
  %v106 = vld [vmem:[%s1 + $0x1d0] sm:$0xf]
  %v107 = vld [vmem:[%s1 + $0x1d4] sm:$0xff]
  %v108 = vld [vmem:[%s1 + $0x1dc] sm:$0xf]
  %v109 = vld [vmem:[%s1 + $0x1e0] sm:$0xff]
  %v110 = vld [vmem:[%s1 + $0x1e8] sm:$0xf]
  %v111 = vld [vmem:[%s1 + $0x1ec] sm:$0xff]
  %v112 = vld [vmem:[%s1 + $0x1f4] sm:$0xf]
  %v113 = vld [vmem:[%s1 + $0x1f8] sm:$0xff]
  %v114 = vld [vmem:[%s1 + $0x200] sm:$0xf]
  %v115 = vld [vmem:[%s1 + $0x204] sm:$0xff]
  %v116 = vld [vmem:[%s1 + $0x20c] sm:$0xf]
  %v117 = vld [vmem:[%s1 + $0x210] sm:$0xff]
  %v118 = vld [vmem:[%s1 + $0x218] sm:$0xf]
  %v119 = vld [vmem:[%s1 + $0x21c] sm:$0xff]
  %v120 = vld [vmem:[%s1 + $0x224] sm:$0xf]
  %v121 = vld [vmem:[%s1 + $0x228] sm:$0xff]
  %v122 = vld [vmem:[%s1 + $0x230] sm:$0xf]
  %v123 = vld [vmem:[%s1 + $0x234] sm:$0xff]
  %v124 = vld [vmem:[%s1 + $0x23c] sm:$0xf]
  %v125 = vld [vmem:[%s1 + $0x240] sm:$0xff]
  %v126 = vld [vmem:[%s1 + $0x248] sm:$0xf]
  %v127 = vld [vmem:[%s1 + $0x24c] sm:$0xff]
  %v128 = vld [vmem:[%s1 + $0x254] sm:$0xf]
  %v129 = vld [vmem:[%s1 + $0x258] sm:$0xff]
  %v130 = vld [vmem:[%s1 + $0x260] sm:$0xf]
  %v131 = vld [vmem:[%s1 + $0x264] sm:$0xff]
  %v132 = vld [vmem:[%s1 + $0x26c] sm:$0xf]
  %v133 = vld [vmem:[%s1 + $0x270] sm:$0xff]
  %v134 = vld [vmem:[%s1 + $0x278] sm:$0xf]
  %v135 = vld [vmem:[%s1 + $0x27c] sm:$0xff]
  %v136 = vld [vmem:[%s1 + $0x284] sm:$0xf]
  %v137 = vld [vmem:[%s1 + $0x288] sm:$0xff]
  %v138 = vld [vmem:[%s1 + $0x290] sm:$0xf]
  %v139 = vld [vmem:[%s1 + $0x294] sm:$0xff]
  %v140 = vld [vmem:[%s1 + $0x29c] sm:$0xf]
  %v141 = vld [vmem:[%s1 + $0x2a0] sm:$0xff]
  %v142 = vld [vmem:[%s1 + $0x2a8] sm:$0xf]
  %v143 = vld [vmem:[%s1 + $0x2ac] sm:$0xff]
  %v144 = vld [vmem:[%s1 + $0x2b4] sm:$0xf]
  %v145 = vld [vmem:[%s1 + $0x2b8] sm:$0xff]
  %v146 = vld [vmem:[%s1 + $0x2c0] sm:$0xf]
  %v147 = vld [vmem:[%s1 + $0x2c4] sm:$0xff]
  %v148 = vld [vmem:[%s1 + $0x2cc] sm:$0xf]
  %v149 = vld [vmem:[%s1 + $0x2d0] sm:$0xff]
  %v150 = vld [vmem:[%s1 + $0x2d8] sm:$0xf]
  %v151 = vld [vmem:[%s1 + $0x2dc] sm:$0xff]
  %v152 = vld [vmem:[%s1 + $0x2e4] sm:$0xf]
  %v153 = vld [vmem:[%s1 + $0x2e8] sm:$0xff]
  %v154 = vld [vmem:[%s1 + $0x2f0] sm:$0xf]
  %v155 = vld [vmem:[%s1 + $0x2f4] sm:$0xff]
  %v156 = vld [vmem:[%s1 + $0x2fc] sm:$0xf]
  %v157 = vld [vmem:[%s1 + $0x300] sm:$0xff]
  %v158 = vld [vmem:[%s1 + $0x308] sm:$0xf]
  %v159 = vld [vmem:[%s1 + $0x30c] sm:$0xff]
  %v160 = vld [vmem:[%s1 + $0x314] sm:$0xf]
  %v161 = vld [vmem:[%s1 + $0x318] sm:$0xff]
  %v162 = vld [vmem:[%s1 + $0x320] sm:$0xf]
  %v163 = vld [vmem:[%s1 + $0x324] sm:$0xff]
  %v164 = vld [vmem:[%s1 + $0x32c] sm:$0xf]
  %v165 = vld [vmem:[%s1 + $0x330] sm:$0xff]
  %v166 = vld [vmem:[%s1 + $0x338] sm:$0xf]
  %v167 = vld [vmem:[%s1 + $0x33c] sm:$0xff]
  %v168 = vld [vmem:[%s1 + $0x344] sm:$0xf]
  %v169 = vld [vmem:[%s1 + $0x348] sm:$0xff]
  %v170 = vld [vmem:[%s1 + $0x350] sm:$0xf]
  %v171 = vld [vmem:[%s1 + $0x354] sm:$0xff]
  %v172 = vld [vmem:[%s1 + $0x35c] sm:$0xf]
  %v173 = vld [vmem:[%s1 + $0x360] sm:$0xff]
  %v174 = vld [vmem:[%s1 + $0x368] sm:$0xf]
  %v175 = vld [vmem:[%s1 + $0x36c] sm:$0xff]
  %v176 = vld [vmem:[%s1 + $0x374] sm:$0xf]
  %v177 = vld [vmem:[%s1 + $0x378] sm:$0xff]
  %v178 = vld [vmem:[%s1 + $0x380] sm:$0xf]
  %v179 = vld [vmem:[%s1 + $0x384] sm:$0xff]
  %v180 = vld [vmem:[%s1 + $0x38c] sm:$0xf]
  %v181 = vld [vmem:[%s1 + $0x390] sm:$0xff]
  %v182 = vld [vmem:[%s1 + $0x398] sm:$0xf]
  %v183 = vld [vmem:[%s1 + $0x39c] sm:$0xff]
  %v184 = vld [vmem:[%s1 + $0x3a4] sm:$0xf]
  %v185 = vld [vmem:[%s1 + $0x3a8] sm:$0xff]
  %v186 = vld [vmem:[%s1 + $0x3b0] sm:$0xf]
  %v187 = vld [vmem:[%s1 + $0x3b4] sm:$0xff]
  %v188 = vld [vmem:[%s1 + $0x3bc] sm:$0xf]
  %v189 = vld [vmem:[%s1 + $0x3c0] sm:$0xff]
  %v190 = vld [vmem:[%s1 + $0x3c8] sm:$0xf]
  %v191 = vld [vmem:[%s1 + $0x3cc] sm:$0xff]
  %v192 = vld [vmem:[%s1 + $0x3d4] sm:$0xf]
  %v193 = vld [vmem:[%s1 + $0x3d8] sm:$0xff]
  %v194 = vld [vmem:[%s1 + $0x3e0] sm:$0xf]
  %v195 = vld [vmem:[%s1 + $0x3e4] sm:$0xff]
  %v196 = vld [vmem:[%s1 + $0x3ec] sm:$0xf]
  %v197 = vld [vmem:[%s1 + $0x3f0] sm:$0xff]
  %v198 = vld [vmem:[%s1 + $0x3f8] sm:$0xf]
  %v199 = vld [vmem:[%s1 + $0x3fc] sm:$0xff]
  %v200 = vld [vmem:[%s1 + $0x404] sm:$0xf]
  %v201 = vld [vmem:[%s1 + $0x408] sm:$0xff]
  %v202 = vld [vmem:[%s1 + $0x410] sm:$0xf]
  %v203 = vld [vmem:[%s1 + $0x414] sm:$0xff]
  %v204 = vld [vmem:[%s1 + $0x41c] sm:$0xf]
  %v205 = vld [vmem:[%s1 + $0x420] sm:$0xff]
  %v206 = vld [vmem:[%s1 + $0x428] sm:$0xf]
  %v207 = vld [vmem:[%s1 + $0x42c] sm:$0xff]
  %v208 = vld [vmem:[%s1 + $0x434] sm:$0xf]
  %v209 = vld [vmem:[%s1 + $0x438] sm:$0xff]
  %v210 = vld [vmem:[%s1 + $0x440] sm:$0xf]
  %v211 = vld [vmem:[%s1 + $0x444] sm:$0xff]
  %v212 = vld [vmem:[%s1 + $0x44c] sm:$0xf]
  %v213 = vld [vmem:[%s1 + $0x450] sm:$0xff]
  %v214 = vld [vmem:[%s1 + $0x458] sm:$0xf]
  %v215 = vld [vmem:[%s1 + $0x45c] sm:$0xff]
  %v216 = vld [vmem:[%s1 + $0x464] sm:$0xf]
  %v217 = vld [vmem:[%s1 + $0x468] sm:$0xff]
  %v218 = vld [vmem:[%s1 + $0x470] sm:$0xf]
  %v219 = vld [vmem:[%s1 + $0x474] sm:$0xff]
  %v220 = vld [vmem:[%s1 + $0x47c] sm:$0xf]
  %v221 = vld [vmem:[%s1 + $0x480] sm:$0xff]
  %v222 = vld [vmem:[%s1 + $0x488] sm:$0xf]
  %v223 = vld [vmem:[%s1 + $0x48c] sm:$0xff]
  %v224 = vld [vmem:[%s1 + $0x494] sm:$0xf]
  %v225 = vld [vmem:[%s1 + $0x498] sm:$0xff]
  %v226 = vld [vmem:[%s1 + $0x4a0] sm:$0xf]
  %v227 = vld [vmem:[%s1 + $0x4a4] sm:$0xff]
  %v228 = vld [vmem:[%s1 + $0x4ac] sm:$0xf]
  %v229 = vld [vmem:[%s1 + $0x4b0] sm:$0xff]
  %v230 = vld [vmem:[%s1 + $0x4b8] sm:$0xf]
  %v231 = vld [vmem:[%s1 + $0x4bc] sm:$0xff]
  %v232 = vld [vmem:[%s1 + $0x4c4] sm:$0xf]
  %v233 = vld [vmem:[%s1 + $0x4c8] sm:$0xff]
  %v234 = vld [vmem:[%s1 + $0x4d0] sm:$0xf]
  %v235 = vld [vmem:[%s1 + $0x4d4] sm:$0xff]
  %v236 = vld [vmem:[%s1 + $0x4dc] sm:$0xf]
  %v237 = vld [vmem:[%s1 + $0x4e0] sm:$0xff]
  %v238 = vld [vmem:[%s1 + $0x4e8] sm:$0xf]
  %v239 = vld [vmem:[%s1 + $0x4ec] sm:$0xff]
  %v240 = vld [vmem:[%s1 + $0x4f4] sm:$0xf]
  %v241 = vld [vmem:[%s1 + $0x4f8] sm:$0xff]
  %v242 = vld [vmem:[%s1 + $0x500] sm:$0xf]
  %v243 = vld [vmem:[%s1 + $0x504] sm:$0xff]
  %v244 = vld [vmem:[%s1 + $0x50c] sm:$0xf]
  %v245 = vld [vmem:[%s1 + $0x510] sm:$0xff]
  %v246 = vld [vmem:[%s1 + $0x518] sm:$0xf]
  %v247 = vld [vmem:[%s1 + $0x51c] sm:$0xff]
  %v248 = vld [vmem:[%s1 + $0x524] sm:$0xf]
  %v249 = vld [vmem:[%s1 + $0x528] sm:$0xff]
  %v250 = vld [vmem:[%s1 + $0x530] sm:$0xf]
  %v251 = vld [vmem:[%s1 + $0x534] sm:$0xff]
  %v252 = vld [vmem:[%s1 + $0x53c] sm:$0xf]
  %v253 = vld [vmem:[%s1 + $0x540] sm:$0xff]
  %v254 = vld [vmem:[%s1 + $0x548] sm:$0xf]
  %v255 = vld [vmem:[%s1 + $0x54c] sm:$0xff]
  %v256 = vld [vmem:[%s1 + $0x554] sm:$0xf]
  %v257 = vld [vmem:[%s1 + $0x558] sm:$0xff]
  %v258 = vld [vmem:[%s1 + $0x560] sm:$0xf]
  %v259 = vld [vmem:[%s1 + $0x564] sm:$0xff]
  %v260 = vld [vmem:[%s1 + $0x56c] sm:$0xf]
  %v261 = vld [vmem:[%s1 + $0x570] sm:$0xff]
  %v262 = vld [vmem:[%s1 + $0x578] sm:$0xf]
  %v263 = vld [vmem:[%s1 + $0x57c] sm:$0xff]
  %v264 = vld [vmem:[%s1 + $0x584] sm:$0xf]
  %v265 = vld [vmem:[%s1 + $0x588] sm:$0xff]
  %v266 = vld [vmem:[%s1 + $0x590] sm:$0xf]
  %v267 = vld [vmem:[%s1 + $0x594] sm:$0xff]
  %v268 = vld [vmem:[%s1 + $0x59c] sm:$0xf]
  %v269 = vld [vmem:[%s1 + $0x5a0] sm:$0xff]
  %v270 = vld [vmem:[%s1 + $0x5a8] sm:$0xf]
  %v271 = vld [vmem:[%s1 + $0x5ac] sm:$0xff]
  %v272 = vld [vmem:[%s1 + $0x5b4] sm:$0xf]
  %v273 = vld [vmem:[%s1 + $0x5b8] sm:$0xff]
  %v274 = vld [vmem:[%s1 + $0x5c0] sm:$0xf]
  %v275 = vld [vmem:[%s1 + $0x5c4] sm:$0xff]
  %v276 = vld [vmem:[%s1 + $0x5cc] sm:$0xf]
  %v277 = vld [vmem:[%s1 + $0x5d0] sm:$0xff]
  %v278 = vld [vmem:[%s1 + $0x5d8] sm:$0xf]
  %v279 = vld [vmem:[%s1 + $0x5dc] sm:$0xff]
  %v280 = vld [vmem:[%s1 + $0x5e4] sm:$0xf]
  %v281 = vld [vmem:[%s1 + $0x5e8] sm:$0xff]
  %v282 = vld [vmem:[%s1 + $0x5f0] sm:$0xf]
  %v283 = vld [vmem:[%s1 + $0x5f4] sm:$0xff]
  %v284 = vld [vmem:[%s1 + $0x5fc] sm:$0xf]
  %v285 = vld [vmem:[%s1 + $0x600] sm:$0xff]
  %v286 = vld [vmem:[%s1 + $0x608] sm:$0xf]
  %v287 = vld [vmem:[%s1 + $0x60c] sm:$0xff]
  %v288 = vld [vmem:[%s1 + $0x614] sm:$0xf]
  %v289 = vld [vmem:[%s1 + $0x618] sm:$0xff]
  %v290 = vld [vmem:[%s1 + $0x620] sm:$0xf]
  %v291 = vld [vmem:[%s1 + $0x624] sm:$0xff]
  %v292 = vld [vmem:[%s1 + $0x62c] sm:$0xf]
  %v293 = vld [vmem:[%s1 + $0x630] sm:$0xff]
  %v294 = vld [vmem:[%s1 + $0x638] sm:$0xf]
  %v295 = vld [vmem:[%s1 + $0x63c] sm:$0xff]
  %v296 = vld [vmem:[%s1 + $0x644] sm:$0xf]
  %v297 = vld [vmem:[%s1 + $0x648] sm:$0xff]
  %v298 = vld [vmem:[%s1 + $0x650] sm:$0xf]
  %v299 = vld [vmem:[%s1 + $0x654] sm:$0xff]
  %v300 = vld [vmem:[%s1 + $0x65c] sm:$0xf]
  %v301 = vld [vmem:[%s1 + $0x660] sm:$0xff]
  %v302 = vld [vmem:[%s1 + $0x668] sm:$0xf]
  %v303 = vld [vmem:[%s1 + $0x66c] sm:$0xff]
  %v304 = vld [vmem:[%s1 + $0x674] sm:$0xf]
  %v305 = vld [vmem:[%s1 + $0x678] sm:$0xff]
  %v306 = vld [vmem:[%s1 + $0x680] sm:$0xf]
  %v307 = vld [vmem:[%s1 + $0x684] sm:$0xff]
  %v308 = vld [vmem:[%s1 + $0x68c] sm:$0xf]
  %v309 = vld [vmem:[%s1 + $0x690] sm:$0xff]
  %v310 = vld [vmem:[%s1 + $0x698] sm:$0xf]
  %v311 = vld [vmem:[%s1 + $0x69c] sm:$0xff]
  %v312 = vld [vmem:[%s1 + $0x6a4] sm:$0xf]
  %v313 = vld [vmem:[%s1 + $0x6a8] sm:$0xff]
  %v314 = vld [vmem:[%s1 + $0x6b0] sm:$0xf]
  %v315 = vld [vmem:[%s1 + $0x6b4] sm:$0xff]
  %v316 = vld [vmem:[%s1 + $0x6bc] sm:$0xf]
  %v317 = vld [vmem:[%s1 + $0x6c0] sm:$0xff]
  %v318 = vld [vmem:[%s1 + $0x6c8] sm:$0xf]
  %v319 = vld [vmem:[%s1 + $0x6cc] sm:$0xff]
  %v320 = vld [vmem:[%s1 + $0x6d4] sm:$0xf]
  %v321 = vld [vmem:[%s1 + $0x6d8] sm:$0xff]
  %v322 = vld [vmem:[%s1 + $0x6e0] sm:$0xf]
  %v323 = vld [vmem:[%s1 + $0x6e4] sm:$0xff]
  %v324 = vld [vmem:[%s1 + $0x6ec] sm:$0xf]
  %v325 = vld [vmem:[%s1 + $0x6f0] sm:$0xff]
  %v326 = vld [vmem:[%s1 + $0x6f8] sm:$0xf]
  %v327 = vld [vmem:[%s1 + $0x6fc] sm:$0xff]
  %v328 = vld [vmem:[%s1 + $0x704] sm:$0xf]
  %v329 = vld [vmem:[%s2] sm:$0x7]
  %v331 = vlaneseq
  %v332 = vshrl.u32 %v331, 7
  %v333 = vsub.s32 0, %v332
  %v334 = vrot.slane %v329, %v333
  %v335 = vlaneseq
  %v336 = vshrl.u32 %v335, 7
  %v337 = vsub.s32 1, %v336
  %v338 = vrot.slane %v329, %v337
  %v339 = vlaneseq
  %v340 = vshrl.u32 %v339, 7
  %v341 = vsub.s32 2, %v340
  %v342 = vrot.slane %v329, %v341
  %v348 = vcombine.high %v27, %v27
  %v350 = vunpack.c.l.s4 1966171168
  %v351 = vunpack.c.0.s8 %v350
  %v352 = vlaneseq
  %v353 = vshrl.u32 %v352, 7
  %v354 = vsub.s32 %v351, %v353
  %v355 = vrot.slane %v27, %v354
  %v357 = vunpack.c.l.s4 1966171168
  %v358 = vunpack.c.0.s8 %v357
  %v359 = vlaneseq
  %v360 = vshrl.u32 %v359, 7
  %v361 = vsub.s32 %v358, %v360
  %v362 = vrot.slane %v348, %v361
  %v363 = vcombine.high %v355, %v355
  %v364 = vcombine.high %v362, %v362
  %v366 = vunpack.c.l.s4 1966171168
  %v367 = vunpack.c.0.s8 %v366
  %v368 = vlaneseq
  %v369 = vshrl.u32 %v368, 7
  %v370 = vsub.s32 %v367, %v369
  %v371 = vrot.slane %v355, %v370
  %v373 = vunpack.c.l.s4 1966171168
  %v374 = vunpack.c.0.s8 %v373
  %v375 = vlaneseq
  %v376 = vshrl.u32 %v375, 7
  %v377 = vsub.s32 %v374, %v376
  %v378 = vrot.slane %v362, %v377
  %v380 = vunpack.c.l.s4 1966171168
  %v381 = vunpack.c.0.s8 %v380
  %v382 = vlaneseq
  %v383 = vshrl.u32 %v382, 7
  %v384 = vsub.s32 %v381, %v383
  %v385 = vrot.slane %v363, %v384
  %v387 = vunpack.c.l.s4 1966171168
  %v388 = vunpack.c.0.s8 %v387
  %v389 = vlaneseq
  %v390 = vshrl.u32 %v389, 7
  %v391 = vsub.s32 %v388, %v390
  %v392 = vrot.slane %v364, %v391
  %v393 = vcombine.high %v371, %v371
  %v394 = vcombine.high %v378, %v378
  %v395 = vcombine.high %v385, %v385
  %v396 = vcombine.high %v392, %v392
  %v398 = vunpack.c.l.s4 1966171168
  %v399 = vunpack.c.0.s8 %v398
  %v400 = vlaneseq
  %v401 = vshrl.u32 %v400, 7
  %v402 = vsub.s32 %v399, %v401
  %v403 = vrot.slane %v28, %v402
  %v404 = vcombine.high %v403, %v403
  %v406 = vunpack.c.l.s4 1966171168
  %v407 = vunpack.c.0.s8 %v406
  %v408 = vlaneseq
  %v409 = vshrl.u32 %v408, 7
  %v410 = vsub.s32 %v407, %v409
  %v411 = vrot.slane %v403, %v410
  %v413 = vunpack.c.l.s4 1966171168
  %v414 = vunpack.c.0.s8 %v413
  %v415 = vlaneseq
  %v416 = vshrl.u32 %v415, 7
  %v417 = vsub.s32 %v414, %v416
  %v418 = vrot.slane %v404, %v417
  %v728 = vunpack.c.l.b16 %v29
  %v729 = vunpack.c.h.b16 %v29
  %v730 = vunpack.c.l.b16 %v30
  %v731 = vunpack.c.l.b16 %v31
  %v732 = vunpack.c.h.b16 %v31
  %v733 = vunpack.c.l.b16 %v32
  %v734 = vunpack.c.l.b16 %v33
  %v735 = vunpack.c.h.b16 %v33
  %v736 = vunpack.c.l.b16 %v34
  %v737 = vunpack.c.l.b16 %v35
  %v738 = vunpack.c.h.b16 %v35
  %v739 = vunpack.c.l.b16 %v36
  %v740 = vunpack.c.l.b16 %v37
  %v741 = vunpack.c.h.b16 %v37
  %v742 = vunpack.c.l.b16 %v38
  %v743 = vunpack.c.l.b16 %v39
  %v744 = vunpack.c.h.b16 %v39
  %v745 = vunpack.c.l.b16 %v40
  %v746 = vunpack.c.l.b16 %v41
  %v747 = vunpack.c.h.b16 %v41
  %v748 = vunpack.c.l.b16 %v42
  %v749 = vunpack.c.l.b16 %v43
  %v750 = vunpack.c.h.b16 %v43
  %v751 = vunpack.c.l.b16 %v44
  %v752 = vunpack.c.l.b16 %v45
  %v753 = vunpack.c.h.b16 %v45
  %v754 = vunpack.c.l.b16 %v46
  %v755 = vunpack.c.l.b16 %v47
  %v756 = vunpack.c.h.b16 %v47
  %v757 = vunpack.c.l.b16 %v48
  %v758 = vunpack.c.l.b16 %v49
  %v759 = vunpack.c.h.b16 %v49
  %v760 = vunpack.c.l.b16 %v50
  %v761 = vunpack.c.l.b16 %v51
  %v762 = vunpack.c.h.b16 %v51
  %v763 = vunpack.c.l.b16 %v52
  %v764 = vunpack.c.l.b16 %v53
  %v765 = vunpack.c.h.b16 %v53
  %v766 = vunpack.c.l.b16 %v54
  %v767 = vunpack.c.l.b16 %v55
  %v768 = vunpack.c.h.b16 %v55
  %v769 = vunpack.c.l.b16 %v56
  %v770 = vunpack.c.l.b16 %v57
  %v771 = vunpack.c.h.b16 %v57
  %v772 = vunpack.c.l.b16 %v58
  %v773 = vunpack.c.l.b16 %v59
  %v774 = vunpack.c.h.b16 %v59
  %v775 = vunpack.c.l.b16 %v60
  %v776 = vunpack.c.l.b16 %v61
  %v777 = vunpack.c.h.b16 %v61
  %v778 = vunpack.c.l.b16 %v62
  %v779 = vunpack.c.l.b16 %v63
  %v780 = vunpack.c.h.b16 %v63
  %v781 = vunpack.c.l.b16 %v64
  %v782 = vunpack.c.l.b16 %v65
  %v783 = vunpack.c.h.b16 %v65
  %v784 = vunpack.c.l.b16 %v66
  %v785 = vunpack.c.l.b16 %v67
  %v786 = vunpack.c.h.b16 %v67
  %v787 = vunpack.c.l.b16 %v68
  %v788 = vunpack.c.l.b16 %v69
  %v789 = vunpack.c.h.b16 %v69
  %v790 = vunpack.c.l.b16 %v70
  %v791 = vunpack.c.l.b16 %v71
  %v792 = vunpack.c.h.b16 %v71
  %v793 = vunpack.c.l.b16 %v72
  %v794 = vunpack.c.l.b16 %v73
  %v795 = vunpack.c.h.b16 %v73
  %v796 = vunpack.c.l.b16 %v74
  %v797 = vunpack.c.l.b16 %v75
  %v798 = vunpack.c.h.b16 %v75
  %v799 = vunpack.c.l.b16 %v76
  %v800 = vunpack.c.l.b16 %v77
  %v801 = vunpack.c.h.b16 %v77
  %v802 = vunpack.c.l.b16 %v78
  %v803 = vunpack.c.l.b16 %v79
  %v804 = vunpack.c.h.b16 %v79
  %v805 = vunpack.c.l.b16 %v80
  %v806 = vunpack.c.l.b16 %v81
  %v807 = vunpack.c.h.b16 %v81
  %v808 = vunpack.c.l.b16 %v82
  %v809 = vunpack.c.l.b16 %v83
  %v810 = vunpack.c.h.b16 %v83
  %v811 = vunpack.c.l.b16 %v84
  %v812 = vunpack.c.l.b16 %v85
  %v813 = vunpack.c.h.b16 %v85
  %v814 = vunpack.c.l.b16 %v86
  %v815 = vunpack.c.l.b16 %v87
  %v816 = vunpack.c.h.b16 %v87
  %v817 = vunpack.c.l.b16 %v88
  %v818 = vunpack.c.l.b16 %v89
  %v819 = vunpack.c.h.b16 %v89
  %v820 = vunpack.c.l.b16 %v90
  %v821 = vunpack.c.l.b16 %v91
  %v822 = vunpack.c.h.b16 %v91
  %v823 = vunpack.c.l.b16 %v92
  %v824 = vunpack.c.l.b16 %v93
  %v825 = vunpack.c.h.b16 %v93
  %v826 = vunpack.c.l.b16 %v94
  %v827 = vunpack.c.l.b16 %v95
  %v828 = vunpack.c.h.b16 %v95
  %v829 = vunpack.c.l.b16 %v96
  %v830 = vunpack.c.l.b16 %v97
  %v831 = vunpack.c.h.b16 %v97
  %v832 = vunpack.c.l.b16 %v98
  %v833 = vunpack.c.l.b16 %v99
  %v834 = vunpack.c.h.b16 %v99
  %v835 = vunpack.c.l.b16 %v100
  %v836 = vunpack.c.l.b16 %v101
  %v837 = vunpack.c.h.b16 %v101
  %v838 = vunpack.c.l.b16 %v102
  %v839 = vunpack.c.l.b16 %v103
  %v840 = vunpack.c.h.b16 %v103
  %v841 = vunpack.c.l.b16 %v104
  %v842 = vunpack.c.l.b16 %v105
  %v843 = vunpack.c.h.b16 %v105
  %v844 = vunpack.c.l.b16 %v106
  %v845 = vunpack.c.l.b16 %v107
  %v846 = vunpack.c.h.b16 %v107
  %v847 = vunpack.c.l.b16 %v108
  %v848 = vunpack.c.l.b16 %v109
  %v849 = vunpack.c.h.b16 %v109
  %v850 = vunpack.c.l.b16 %v110
  %v851 = vunpack.c.l.b16 %v111
  %v852 = vunpack.c.h.b16 %v111
  %v853 = vunpack.c.l.b16 %v112
  %v854 = vunpack.c.l.b16 %v113
  %v855 = vunpack.c.h.b16 %v113
  %v856 = vunpack.c.l.b16 %v114
  %v857 = vunpack.c.l.b16 %v115
  %v858 = vunpack.c.h.b16 %v115
  %v859 = vunpack.c.l.b16 %v116
  %v860 = vunpack.c.l.b16 %v117
  %v861 = vunpack.c.h.b16 %v117
  %v862 = vunpack.c.l.b16 %v118
  %v863 = vunpack.c.l.b16 %v119
  %v864 = vunpack.c.h.b16 %v119
  %v865 = vunpack.c.l.b16 %v120
  %v866 = vunpack.c.l.b16 %v121
  %v867 = vunpack.c.h.b16 %v121
  %v868 = vunpack.c.l.b16 %v122
  %v869 = vunpack.c.l.b16 %v123
  %v870 = vunpack.c.h.b16 %v123
  %v871 = vunpack.c.l.b16 %v124
  %v872 = vunpack.c.l.b16 %v125
  %v873 = vunpack.c.h.b16 %v125
  %v874 = vunpack.c.l.b16 %v126
  %v875 = vunpack.c.l.b16 %v127
  %v876 = vunpack.c.h.b16 %v127
  %v877 = vunpack.c.l.b16 %v128
  %v878 = vunpack.c.l.b16 %v129
  %v879 = vunpack.c.h.b16 %v129
  %v880 = vunpack.c.l.b16 %v130
  %v881 = vunpack.c.l.b16 %v131
  %v882 = vunpack.c.h.b16 %v131
  %v883 = vunpack.c.l.b16 %v132
  %v884 = vunpack.c.l.b16 %v133
  %v885 = vunpack.c.h.b16 %v133
  %v886 = vunpack.c.l.b16 %v134
  %v887 = vunpack.c.l.b16 %v135
  %v888 = vunpack.c.h.b16 %v135
  %v889 = vunpack.c.l.b16 %v136
  %v890 = vunpack.c.l.b16 %v137
  %v891 = vunpack.c.h.b16 %v137
  %v892 = vunpack.c.l.b16 %v138
  %v893 = vunpack.c.l.b16 %v139
  %v894 = vunpack.c.h.b16 %v139
  %v895 = vunpack.c.l.b16 %v140
  %v896 = vunpack.c.l.b16 %v141
  %v897 = vunpack.c.h.b16 %v141
  %v898 = vunpack.c.l.b16 %v142
  %v899 = vunpack.c.l.b16 %v143
  %v900 = vunpack.c.h.b16 %v143
  %v901 = vunpack.c.l.b16 %v144
  %v902 = vunpack.c.l.b16 %v145
  %v903 = vunpack.c.h.b16 %v145
  %v904 = vunpack.c.l.b16 %v146
  %v905 = vunpack.c.l.b16 %v147
  %v906 = vunpack.c.h.b16 %v147
  %v907 = vunpack.c.l.b16 %v148
  %v908 = vunpack.c.l.b16 %v149
  %v909 = vunpack.c.h.b16 %v149
  %v910 = vunpack.c.l.b16 %v150
  %v911 = vunpack.c.l.b16 %v151
  %v912 = vunpack.c.h.b16 %v151
  %v913 = vunpack.c.l.b16 %v152
  %v914 = vunpack.c.l.b16 %v153
  %v915 = vunpack.c.h.b16 %v153
  %v916 = vunpack.c.l.b16 %v154
  %v917 = vunpack.c.l.b16 %v155
  %v918 = vunpack.c.h.b16 %v155
  %v919 = vunpack.c.l.b16 %v156
  %v920 = vunpack.c.l.b16 %v157
  %v921 = vunpack.c.h.b16 %v157
  %v922 = vunpack.c.l.b16 %v158
  %v923 = vunpack.c.l.b16 %v159
  %v924 = vunpack.c.h.b16 %v159
  %v925 = vunpack.c.l.b16 %v160
  %v926 = vunpack.c.l.b16 %v161
  %v927 = vunpack.c.h.b16 %v161
  %v928 = vunpack.c.l.b16 %v162
  %v929 = vunpack.c.l.b16 %v163
  %v930 = vunpack.c.h.b16 %v163
  %v931 = vunpack.c.l.b16 %v164
  %v932 = vunpack.c.l.b16 %v165
  %v933 = vunpack.c.h.b16 %v165
  %v934 = vunpack.c.l.b16 %v166
  %v935 = vunpack.c.l.b16 %v167
  %v936 = vunpack.c.h.b16 %v167
  %v937 = vunpack.c.l.b16 %v168
  %v938 = vunpack.c.l.b16 %v169
  %v939 = vunpack.c.h.b16 %v169
  %v940 = vunpack.c.l.b16 %v170
  %v941 = vunpack.c.l.b16 %v171
  %v942 = vunpack.c.h.b16 %v171
  %v943 = vunpack.c.l.b16 %v172
  %v944 = vunpack.c.l.b16 %v173
  %v945 = vunpack.c.h.b16 %v173
  %v946 = vunpack.c.l.b16 %v174
  %v947 = vunpack.c.l.b16 %v175
  %v948 = vunpack.c.h.b16 %v175
  %v949 = vunpack.c.l.b16 %v176
  %v950 = vunpack.c.l.b16 %v177
  %v951 = vunpack.c.h.b16 %v177
  %v952 = vunpack.c.l.b16 %v178
  %v953 = vunpack.c.l.b16 %v179
  %v954 = vunpack.c.h.b16 %v179
  %v955 = vunpack.c.l.b16 %v180
  %v956 = vunpack.c.l.b16 %v181
  %v957 = vunpack.c.h.b16 %v181
  %v958 = vunpack.c.l.b16 %v182
  %v959 = vunpack.c.l.b16 %v183
  %v960 = vunpack.c.h.b16 %v183
  %v961 = vunpack.c.l.b16 %v184
  %v962 = vunpack.c.l.b16 %v185
  %v963 = vunpack.c.h.b16 %v185
  %v964 = vunpack.c.l.b16 %v186
  %v965 = vunpack.c.l.b16 %v187
  %v966 = vunpack.c.h.b16 %v187
  %v967 = vunpack.c.l.b16 %v188
  %v968 = vunpack.c.l.b16 %v189
  %v969 = vunpack.c.h.b16 %v189
  %v970 = vunpack.c.l.b16 %v190
  %v971 = vunpack.c.l.b16 %v191
  %v972 = vunpack.c.h.b16 %v191
  %v973 = vunpack.c.l.b16 %v192
  %v974 = vunpack.c.l.b16 %v193
  %v975 = vunpack.c.h.b16 %v193
  %v976 = vunpack.c.l.b16 %v194
  %v977 = vunpack.c.l.b16 %v195
  %v978 = vunpack.c.h.b16 %v195
  %v979 = vunpack.c.l.b16 %v196
  %v980 = vunpack.c.l.b16 %v197
  %v981 = vunpack.c.h.b16 %v197
  %v982 = vunpack.c.l.b16 %v198
  %v983 = vunpack.c.l.b16 %v199
  %v984 = vunpack.c.h.b16 %v199
  %v985 = vunpack.c.l.b16 %v200
  %v986 = vunpack.c.l.b16 %v201
  %v987 = vunpack.c.h.b16 %v201
  %v988 = vunpack.c.l.b16 %v202
  %v989 = vunpack.c.l.b16 %v203
  %v990 = vunpack.c.h.b16 %v203
  %v991 = vunpack.c.l.b16 %v204
  %v992 = vunpack.c.l.b16 %v205
  %v993 = vunpack.c.h.b16 %v205
  %v994 = vunpack.c.l.b16 %v206
  %v995 = vunpack.c.l.b16 %v207
  %v996 = vunpack.c.h.b16 %v207
  %v997 = vunpack.c.l.b16 %v208
  %v998 = vunpack.c.l.b16 %v209
  %v999 = vunpack.c.h.b16 %v209
  %v1000 = vunpack.c.l.b16 %v210
  %v1001 = vunpack.c.l.b16 %v211
  %v1002 = vunpack.c.h.b16 %v211
  %v1003 = vunpack.c.l.b16 %v212
  %v1004 = vunpack.c.l.b16 %v213
  %v1005 = vunpack.c.h.b16 %v213
  %v1006 = vunpack.c.l.b16 %v214
  %v1007 = vunpack.c.l.b16 %v215
  %v1008 = vunpack.c.h.b16 %v215
  %v1009 = vunpack.c.l.b16 %v216
  %v1010 = vunpack.c.l.b16 %v217
  %v1011 = vunpack.c.h.b16 %v217
  %v1012 = vunpack.c.l.b16 %v218
  %v1013 = vunpack.c.l.b16 %v219
  %v1014 = vunpack.c.h.b16 %v219
  %v1015 = vunpack.c.l.b16 %v220
  %v1016 = vunpack.c.l.b16 %v221
  %v1017 = vunpack.c.h.b16 %v221
  %v1018 = vunpack.c.l.b16 %v222
  %v1019 = vunpack.c.l.b16 %v223
  %v1020 = vunpack.c.h.b16 %v223
  %v1021 = vunpack.c.l.b16 %v224
  %v1022 = vunpack.c.l.b16 %v225
  %v1023 = vunpack.c.h.b16 %v225
  %v1024 = vunpack.c.l.b16 %v226
  %v1025 = vunpack.c.l.b16 %v227
  %v1026 = vunpack.c.h.b16 %v227
  %v1027 = vunpack.c.l.b16 %v228
  %v1028 = vunpack.c.l.b16 %v229
  %v1029 = vunpack.c.h.b16 %v229
  %v1030 = vunpack.c.l.b16 %v230
  %v1031 = vunpack.c.l.b16 %v231
  %v1032 = vunpack.c.h.b16 %v231
  %v1033 = vunpack.c.l.b16 %v232
  %v1034 = vunpack.c.l.b16 %v233
  %v1035 = vunpack.c.h.b16 %v233
  %v1036 = vunpack.c.l.b16 %v234
  %v1037 = vunpack.c.l.b16 %v235
  %v1038 = vunpack.c.h.b16 %v235
  %v1039 = vunpack.c.l.b16 %v236
  %v1040 = vunpack.c.l.b16 %v237
  %v1041 = vunpack.c.h.b16 %v237
  %v1042 = vunpack.c.l.b16 %v238
  %v1043 = vunpack.c.l.b16 %v239
  %v1044 = vunpack.c.h.b16 %v239
  %v1045 = vunpack.c.l.b16 %v240
  %v1046 = vunpack.c.l.b16 %v241
  %v1047 = vunpack.c.h.b16 %v241
  %v1048 = vunpack.c.l.b16 %v242
  %v1049 = vunpack.c.l.b16 %v243
  %v1050 = vunpack.c.h.b16 %v243
  %v1051 = vunpack.c.l.b16 %v244
  %v1052 = vunpack.c.l.b16 %v245
  %v1053 = vunpack.c.h.b16 %v245
  %v1054 = vunpack.c.l.b16 %v246
  %v1055 = vunpack.c.l.b16 %v247
  %v1056 = vunpack.c.h.b16 %v247
  %v1057 = vunpack.c.l.b16 %v248
  %v1058 = vunpack.c.l.b16 %v249
  %v1059 = vunpack.c.h.b16 %v249
  %v1060 = vunpack.c.l.b16 %v250
  %v1061 = vunpack.c.l.b16 %v251
  %v1062 = vunpack.c.h.b16 %v251
  %v1063 = vunpack.c.l.b16 %v252
  %v1064 = vunpack.c.l.b16 %v253
  %v1065 = vunpack.c.h.b16 %v253
  %v1066 = vunpack.c.l.b16 %v254
  %v1067 = vunpack.c.l.b16 %v255
  %v1068 = vunpack.c.h.b16 %v255
  %v1069 = vunpack.c.l.b16 %v256
  %v1070 = vunpack.c.l.b16 %v257
  %v1071 = vunpack.c.h.b16 %v257
  %v1072 = vunpack.c.l.b16 %v258
  %v1073 = vunpack.c.l.b16 %v259
  %v1074 = vunpack.c.h.b16 %v259
  %v1075 = vunpack.c.l.b16 %v260
  %v1076 = vunpack.c.l.b16 %v261
  %v1077 = vunpack.c.h.b16 %v261
  %v1078 = vunpack.c.l.b16 %v262
  %v1079 = vunpack.c.l.b16 %v263
  %v1080 = vunpack.c.h.b16 %v263
  %v1081 = vunpack.c.l.b16 %v264
  %v1082 = vunpack.c.l.b16 %v265
  %v1083 = vunpack.c.h.b16 %v265
  %v1084 = vunpack.c.l.b16 %v266
  %v1085 = vunpack.c.l.b16 %v267
  %v1086 = vunpack.c.h.b16 %v267
  %v1087 = vunpack.c.l.b16 %v268
  %v1088 = vunpack.c.l.b16 %v269
  %v1089 = vunpack.c.h.b16 %v269
  %v1090 = vunpack.c.l.b16 %v270
  %v1091 = vunpack.c.l.b16 %v271
  %v1092 = vunpack.c.h.b16 %v271
  %v1093 = vunpack.c.l.b16 %v272
  %v1094 = vunpack.c.l.b16 %v273
  %v1095 = vunpack.c.h.b16 %v273
  %v1096 = vunpack.c.l.b16 %v274
  %v1097 = vunpack.c.l.b16 %v275
  %v1098 = vunpack.c.h.b16 %v275
  %v1099 = vunpack.c.l.b16 %v276
  %v1100 = vunpack.c.l.b16 %v277
  %v1101 = vunpack.c.h.b16 %v277
  %v1102 = vunpack.c.l.b16 %v278
  %v1103 = vunpack.c.l.b16 %v279
  %v1104 = vunpack.c.h.b16 %v279
  %v1105 = vunpack.c.l.b16 %v280
  %v1106 = vunpack.c.l.b16 %v281
  %v1107 = vunpack.c.h.b16 %v281
  %v1108 = vunpack.c.l.b16 %v282
  %v1109 = vunpack.c.l.b16 %v283
  %v1110 = vunpack.c.h.b16 %v283
  %v1111 = vunpack.c.l.b16 %v284
  %v1112 = vunpack.c.l.b16 %v285
  %v1113 = vunpack.c.h.b16 %v285
  %v1114 = vunpack.c.l.b16 %v286
  %v1115 = vunpack.c.l.b16 %v287
  %v1116 = vunpack.c.h.b16 %v287
  %v1117 = vunpack.c.l.b16 %v288
  %v1118 = vunpack.c.l.b16 %v289
  %v1119 = vunpack.c.h.b16 %v289
  %v1120 = vunpack.c.l.b16 %v290
  %v1121 = vunpack.c.l.b16 %v291
  %v1122 = vunpack.c.h.b16 %v291
  %v1123 = vunpack.c.l.b16 %v292
  %v1124 = vunpack.c.l.b16 %v293
  %v1125 = vunpack.c.h.b16 %v293
  %v1126 = vunpack.c.l.b16 %v294
  %v1127 = vunpack.c.l.b16 %v295
  %v1128 = vunpack.c.h.b16 %v295
  %v1129 = vunpack.c.l.b16 %v296
  %v1130 = vunpack.c.l.b16 %v297
  %v1131 = vunpack.c.h.b16 %v297
  %v1132 = vunpack.c.l.b16 %v298
  %v1133 = vunpack.c.l.b16 %v299
  %v1134 = vunpack.c.h.b16 %v299
  %v1135 = vunpack.c.l.b16 %v300
  %v1136 = vunpack.c.l.b16 %v301
  %v1137 = vunpack.c.h.b16 %v301
  %v1138 = vunpack.c.l.b16 %v302
  %v1139 = vunpack.c.l.b16 %v303
  %v1140 = vunpack.c.h.b16 %v303
  %v1141 = vunpack.c.l.b16 %v304
  %v1142 = vunpack.c.l.b16 %v305
  %v1143 = vunpack.c.h.b16 %v305
  %v1144 = vunpack.c.l.b16 %v306
  %v1145 = vunpack.c.l.b16 %v307
  %v1146 = vunpack.c.h.b16 %v307
  %v1147 = vunpack.c.l.b16 %v308
  %v1148 = vunpack.c.l.b16 %v309
  %v1149 = vunpack.c.h.b16 %v309
  %v1150 = vunpack.c.l.b16 %v310
  %v1151 = vunpack.c.l.b16 %v311
  %v1152 = vunpack.c.h.b16 %v311
  %v1153 = vunpack.c.l.b16 %v312
  %v1154 = vunpack.c.l.b16 %v313
  %v1155 = vunpack.c.h.b16 %v313
  %v1156 = vunpack.c.l.b16 %v314
  %v1157 = vunpack.c.l.b16 %v315
  %v1158 = vunpack.c.h.b16 %v315
  %v1159 = vunpack.c.l.b16 %v316
  %v1160 = vunpack.c.l.b16 %v317
  %v1161 = vunpack.c.h.b16 %v317
  %v1162 = vunpack.c.l.b16 %v318
  %v1163 = vunpack.c.l.b16 %v319
  %v1164 = vunpack.c.h.b16 %v319
  %v1165 = vunpack.c.l.b16 %v320
  %v1166 = vunpack.c.l.b16 %v321
  %v1167 = vunpack.c.h.b16 %v321
  %v1168 = vunpack.c.l.b16 %v322
  %v1169 = vunpack.c.l.b16 %v323
  %v1170 = vunpack.c.h.b16 %v323
  %v1171 = vunpack.c.l.b16 %v324
  %v1172 = vunpack.c.l.b16 %v325
  %v1173 = vunpack.c.h.b16 %v325
  %v1174 = vunpack.c.l.b16 %v326
  %v1175 = vunpack.c.l.b16 %v327
  %v1176 = vunpack.c.h.b16 %v327
  %v1177 = vunpack.c.l.b16 %v328
  %v1178 = vpack.c.b16 %v731, %v728
  %v1179 = vpack.c.b16 %v732, %v729
  %v1180 = vpack.c.b16 %v733, %v730
  %v1181 = vpack.c.b16 %v737, %v734
  %v1182 = vpack.c.b16 %v738, %v735
  %v1183 = vpack.c.b16 %v739, %v736
  %v1184 = vpack.c.b16 %v743, %v740
  %v1185 = vpack.c.b16 %v744, %v741
  %v1186 = vpack.c.b16 %v745, %v742
  %v1187 = vpack.c.b16 %v749, %v746
  %v1188 = vpack.c.b16 %v750, %v747
  %v1189 = vpack.c.b16 %v751, %v748
  %v1190 = vpack.c.b16 %v755, %v752
  %v1191 = vpack.c.b16 %v756, %v753
  %v1192 = vpack.c.b16 %v757, %v754
  %v1193 = vpack.c.b16 %v761, %v758
  %v1194 = vpack.c.b16 %v762, %v759
  %v1195 = vpack.c.b16 %v763, %v760
  %v1196 = vpack.c.b16 %v767, %v764
  %v1197 = vpack.c.b16 %v768, %v765
  %v1198 = vpack.c.b16 %v769, %v766
  %v1199 = vpack.c.b16 %v773, %v770
  %v1200 = vpack.c.b16 %v774, %v771
  %v1201 = vpack.c.b16 %v775, %v772
  %v1202 = vpack.c.b16 %v779, %v776
  %v1203 = vpack.c.b16 %v780, %v777
  %v1204 = vpack.c.b16 %v781, %v778
  %v1205 = vpack.c.b16 %v785, %v782
  %v1206 = vpack.c.b16 %v786, %v783
  %v1207 = vpack.c.b16 %v787, %v784
  %v1208 = vpack.c.b16 %v791, %v788
  %v1209 = vpack.c.b16 %v792, %v789
  %v1210 = vpack.c.b16 %v793, %v790
  %v1211 = vpack.c.b16 %v797, %v794
  %v1212 = vpack.c.b16 %v798, %v795
  %v1213 = vpack.c.b16 %v799, %v796
  %v1214 = vpack.c.b16 %v803, %v800
  %v1215 = vpack.c.b16 %v804, %v801
  %v1216 = vpack.c.b16 %v805, %v802
  %v1217 = vpack.c.b16 %v809, %v806
  %v1218 = vpack.c.b16 %v810, %v807
  %v1219 = vpack.c.b16 %v811, %v808
  %v1220 = vpack.c.b16 %v815, %v812
  %v1221 = vpack.c.b16 %v816, %v813
  %v1222 = vpack.c.b16 %v817, %v814
  %v1223 = vpack.c.b16 %v821, %v818
  %v1224 = vpack.c.b16 %v822, %v819
  %v1225 = vpack.c.b16 %v823, %v820
  %v1226 = vpack.c.b16 %v827, %v824
  %v1227 = vpack.c.b16 %v828, %v825
  %v1228 = vpack.c.b16 %v829, %v826
  %v1229 = vpack.c.b16 %v833, %v830
  %v1230 = vpack.c.b16 %v834, %v831
  %v1231 = vpack.c.b16 %v835, %v832
  %v1232 = vpack.c.b16 %v839, %v836
  %v1233 = vpack.c.b16 %v840, %v837
  %v1234 = vpack.c.b16 %v841, %v838
  %v1235 = vpack.c.b16 %v845, %v842
  %v1236 = vpack.c.b16 %v846, %v843
  %v1237 = vpack.c.b16 %v847, %v844
  %v1238 = vpack.c.b16 %v851, %v848
  %v1239 = vpack.c.b16 %v852, %v849
  %v1240 = vpack.c.b16 %v853, %v850
  %v1241 = vpack.c.b16 %v857, %v854
  %v1242 = vpack.c.b16 %v858, %v855
  %v1243 = vpack.c.b16 %v859, %v856
  %v1244 = vpack.c.b16 %v863, %v860
  %v1245 = vpack.c.b16 %v864, %v861
  %v1246 = vpack.c.b16 %v865, %v862
  %v1247 = vpack.c.b16 %v869, %v866
  %v1248 = vpack.c.b16 %v870, %v867
  %v1249 = vpack.c.b16 %v871, %v868
  %v1250 = vpack.c.b16 %v875, %v872
  %v1251 = vpack.c.b16 %v876, %v873
  %v1252 = vpack.c.b16 %v877, %v874
  %v1253 = vpack.c.b16 %v881, %v878
  %v1254 = vpack.c.b16 %v882, %v879
  %v1255 = vpack.c.b16 %v883, %v880
  %v1256 = vpack.c.b16 %v887, %v884
  %v1257 = vpack.c.b16 %v888, %v885
  %v1258 = vpack.c.b16 %v889, %v886
  %v1259 = vpack.c.b16 %v893, %v890
  %v1260 = vpack.c.b16 %v894, %v891
  %v1261 = vpack.c.b16 %v895, %v892
  %v1262 = vpack.c.b16 %v899, %v896
  %v1263 = vpack.c.b16 %v900, %v897
  %v1264 = vpack.c.b16 %v901, %v898
  %v1265 = vpack.c.b16 %v905, %v902
  %v1266 = vpack.c.b16 %v906, %v903
  %v1267 = vpack.c.b16 %v907, %v904
  %v1268 = vpack.c.b16 %v911, %v908
  %v1269 = vpack.c.b16 %v912, %v909
  %v1270 = vpack.c.b16 %v913, %v910
  %v1271 = vpack.c.b16 %v917, %v914
  %v1272 = vpack.c.b16 %v918, %v915
  %v1273 = vpack.c.b16 %v919, %v916
  %v1274 = vpack.c.b16 %v923, %v920
  %v1275 = vpack.c.b16 %v924, %v921
  %v1276 = vpack.c.b16 %v925, %v922
  %v1277 = vpack.c.b16 %v929, %v926
  %v1278 = vpack.c.b16 %v930, %v927
  %v1279 = vpack.c.b16 %v931, %v928
  %v1280 = vpack.c.b16 %v935, %v932
  %v1281 = vpack.c.b16 %v936, %v933
  %v1282 = vpack.c.b16 %v937, %v934
  %v1283 = vpack.c.b16 %v941, %v938
  %v1284 = vpack.c.b16 %v942, %v939
  %v1285 = vpack.c.b16 %v943, %v940
  %v1286 = vpack.c.b16 %v947, %v944
  %v1287 = vpack.c.b16 %v948, %v945
  %v1288 = vpack.c.b16 %v949, %v946
  %v1289 = vpack.c.b16 %v953, %v950
  %v1290 = vpack.c.b16 %v954, %v951
  %v1291 = vpack.c.b16 %v955, %v952
  %v1292 = vpack.c.b16 %v959, %v956
  %v1293 = vpack.c.b16 %v960, %v957
  %v1294 = vpack.c.b16 %v961, %v958
  %v1295 = vpack.c.b16 %v965, %v962
  %v1296 = vpack.c.b16 %v966, %v963
  %v1297 = vpack.c.b16 %v967, %v964
  %v1298 = vpack.c.b16 %v971, %v968
  %v1299 = vpack.c.b16 %v972, %v969
  %v1300 = vpack.c.b16 %v973, %v970
  %v1301 = vpack.c.b16 %v977, %v974
  %v1302 = vpack.c.b16 %v978, %v975
  %v1303 = vpack.c.b16 %v979, %v976
  %v1304 = vpack.c.b16 %v983, %v980
  %v1305 = vpack.c.b16 %v984, %v981
  %v1306 = vpack.c.b16 %v985, %v982
  %v1307 = vpack.c.b16 %v989, %v986
  %v1308 = vpack.c.b16 %v990, %v987
  %v1309 = vpack.c.b16 %v991, %v988
  %v1310 = vpack.c.b16 %v995, %v992
  %v1311 = vpack.c.b16 %v996, %v993
  %v1312 = vpack.c.b16 %v997, %v994
  %v1313 = vpack.c.b16 %v1001, %v998
  %v1314 = vpack.c.b16 %v1002, %v999
  %v1315 = vpack.c.b16 %v1003, %v1000
  %v1316 = vpack.c.b16 %v1007, %v1004
  %v1317 = vpack.c.b16 %v1008, %v1005
  %v1318 = vpack.c.b16 %v1009, %v1006
  %v1319 = vpack.c.b16 %v1013, %v1010
  %v1320 = vpack.c.b16 %v1014, %v1011
  %v1321 = vpack.c.b16 %v1015, %v1012
  %v1322 = vpack.c.b16 %v1019, %v1016
  %v1323 = vpack.c.b16 %v1020, %v1017
  %v1324 = vpack.c.b16 %v1021, %v1018
  %v1325 = vpack.c.b16 %v1025, %v1022
  %v1326 = vpack.c.b16 %v1026, %v1023
  %v1327 = vpack.c.b16 %v1027, %v1024
  %v1328 = vpack.c.b16 %v1031, %v1028
  %v1329 = vpack.c.b16 %v1032, %v1029
  %v1330 = vpack.c.b16 %v1033, %v1030
  %v1331 = vpack.c.b16 %v1037, %v1034
  %v1332 = vpack.c.b16 %v1038, %v1035
  %v1333 = vpack.c.b16 %v1039, %v1036
  %v1334 = vpack.c.b16 %v1043, %v1040
  %v1335 = vpack.c.b16 %v1044, %v1041
  %v1336 = vpack.c.b16 %v1045, %v1042
  %v1337 = vpack.c.b16 %v1049, %v1046
  %v1338 = vpack.c.b16 %v1050, %v1047
  %v1339 = vpack.c.b16 %v1051, %v1048
  %v1340 = vpack.c.b16 %v1055, %v1052
  %v1341 = vpack.c.b16 %v1056, %v1053
  %v1342 = vpack.c.b16 %v1057, %v1054
  %v1343 = vpack.c.b16 %v1061, %v1058
  %v1344 = vpack.c.b16 %v1062, %v1059
  %v1345 = vpack.c.b16 %v1063, %v1060
  %v1346 = vpack.c.b16 %v1067, %v1064
  %v1347 = vpack.c.b16 %v1068, %v1065
  %v1348 = vpack.c.b16 %v1069, %v1066
  %v1349 = vpack.c.b16 %v1073, %v1070
  %v1350 = vpack.c.b16 %v1074, %v1071
  %v1351 = vpack.c.b16 %v1075, %v1072
  %v1352 = vpack.c.b16 %v1079, %v1076
  %v1353 = vpack.c.b16 %v1080, %v1077
  %v1354 = vpack.c.b16 %v1081, %v1078
  %v1355 = vpack.c.b16 %v1085, %v1082
  %v1356 = vpack.c.b16 %v1086, %v1083
  %v1357 = vpack.c.b16 %v1087, %v1084
  %v1358 = vpack.c.b16 %v1091, %v1088
  %v1359 = vpack.c.b16 %v1092, %v1089
  %v1360 = vpack.c.b16 %v1093, %v1090
  %v1361 = vpack.c.b16 %v1097, %v1094
  %v1362 = vpack.c.b16 %v1098, %v1095
  %v1363 = vpack.c.b16 %v1099, %v1096
  %v1364 = vpack.c.b16 %v1103, %v1100
  %v1365 = vpack.c.b16 %v1104, %v1101
  %v1366 = vpack.c.b16 %v1105, %v1102
  %v1367 = vpack.c.b16 %v1109, %v1106
  %v1368 = vpack.c.b16 %v1110, %v1107
  %v1369 = vpack.c.b16 %v1111, %v1108
  %v1370 = vpack.c.b16 %v1115, %v1112
  %v1371 = vpack.c.b16 %v1116, %v1113
  %v1372 = vpack.c.b16 %v1117, %v1114
  %v1373 = vpack.c.b16 %v1121, %v1118
  %v1374 = vpack.c.b16 %v1122, %v1119
  %v1375 = vpack.c.b16 %v1123, %v1120
  %v1376 = vpack.c.b16 %v1127, %v1124
  %v1377 = vpack.c.b16 %v1128, %v1125
  %v1378 = vpack.c.b16 %v1129, %v1126
  %v1379 = vpack.c.b16 %v1133, %v1130
  %v1380 = vpack.c.b16 %v1134, %v1131
  %v1381 = vpack.c.b16 %v1135, %v1132
  %v1382 = vpack.c.b16 %v1139, %v1136
  %v1383 = vpack.c.b16 %v1140, %v1137
  %v1384 = vpack.c.b16 %v1141, %v1138
  %v1385 = vpack.c.b16 %v1145, %v1142
  %v1386 = vpack.c.b16 %v1146, %v1143
  %v1387 = vpack.c.b16 %v1147, %v1144
  %v1388 = vpack.c.b16 %v1151, %v1148
  %v1389 = vpack.c.b16 %v1152, %v1149
  %v1390 = vpack.c.b16 %v1153, %v1150
  %v1391 = vpack.c.b16 %v1157, %v1154
  %v1392 = vpack.c.b16 %v1158, %v1155
  %v1393 = vpack.c.b16 %v1159, %v1156
  %v1394 = vpack.c.b16 %v1163, %v1160
  %v1395 = vpack.c.b16 %v1164, %v1161
  %v1396 = vpack.c.b16 %v1165, %v1162
  %v1397 = vpack.c.b16 %v1169, %v1166
  %v1398 = vpack.c.b16 %v1170, %v1167
  %v1399 = vpack.c.b16 %v1171, %v1168
  %v1400 = vpack.c.b16 %v1175, %v1172
  %v1401 = vpack.c.b16 %v1176, %v1173
  %v1402 = vpack.c.b16 %v1177, %v1174
  %vm1628 = vcmask 392192
  %v1630 = vsel %vm1628, %v418, 0
  %1632 = vmatprep.subr.bf16.mxu0 %v1179
  %1633 = vmatpush1.bf16.msra.mxu0 %v1178
  %1634 = vmatprep.subr.bf16.mxu0 %v1182
  %1635 = vmatpush1.bf16.msra.mxu0 %v1181
  %1636 = vmatprep.subr.bf16.mxu0 %v1185
  %1637 = vmatpush1.bf16.msra.mxu0 %v1184
  %1638 = vmatprep.subr.bf16.mxu0 %v1188
  %1639 = vmatpush1.bf16.msra.mxu0 %v1187
  %1640 = vmatprep.subr.bf16.mxu0 %v1191
  %1641 = vmatpush1.bf16.msra.mxu0 %v1190
  %1642 = vmatprep.subr.bf16.mxu0 %v1194
  %1643 = vmatpush1.bf16.msra.mxu0 %v1193
  %1644 = vmatprep.subr.bf16.mxu0 %v1197
  %1645 = vmatpush1.bf16.msra.mxu0 %v1196
  %1646 = vmatprep.subr.bf16.mxu0 %v1200
  %1647 = vmatpush1.bf16.msra.mxu0 %v1199
  %1648 = vmatprep.subr.bf16.mxu0 %v1203
  %1649 = vmatpush1.bf16.msra.mxu0 %v1202
  %1650 = vmatprep.subr.bf16.mxu0 %v1206
  %1651 = vmatpush1.bf16.msra.mxu0 %v1205
  %1652 = vmatprep.subr.bf16.mxu0 %v1209
  %1653 = vmatpush1.bf16.msra.mxu0 %v1208
  %1654 = vmatprep.subr.bf16.mxu0 %v1212
  %1655 = vmatpush1.bf16.msra.mxu0 %v1211
  %1656 = vmatprep.subr.bf16.mxu0 %v1215
  %1657 = vmatpush1.bf16.msra.mxu0 %v1214
  %1658 = vmatprep.subr.bf16.mxu0 %v1218
  %1659 = vmatpush1.bf16.msra.mxu0 %v1217
  %1660 = vmatprep.subr.bf16.mxu0 %v1221
  %1661 = vmatpush1.bf16.msra.mxu0 %v1220
  %1662 = vmatprep.subr.bf16.mxu0 %v1224
  %1663 = vmatpush1.bf16.msra.mxu0 %v1223
  %1664 = vmatprep.mubr.bf16.mxu0 %v385
  %1665 = vmatmul.mubr.bf16.gmra.mrb[0].mxu0 %v371
  %v1666 = vpop.f32.mrb[0].mxu0
  %v1667 = vadd.f32 %v334, %v1666
  %v1668 = vpop.f32.mrb[0].mxu0
  %v1669 = vadd.f32 %v338, %v1668
  %v1670 = vpop.f32.mrb[0].mxu0
  %v1671 = vpop.f32.mrb[0].mxu0
  %1672 = vdwg.mxu0
  %1673 = vmatprep.subr.bf16.mxu0 %v1227
  %1674 = vmatpush1.bf16.msra.mxu0 %v1226
  %1675 = vmatprep.subr.bf16.mxu0 %v1230
  %1676 = vmatpush1.bf16.msra.mxu0 %v1229
  %1677 = vmatprep.subr.bf16.mxu0 %v1233
  %1678 = vmatpush1.bf16.msra.mxu0 %v1232
  %1679 = vmatprep.subr.bf16.mxu0 %v1236
  %1680 = vmatpush1.bf16.msra.mxu0 %v1235
  %1681 = vmatprep.subr.bf16.mxu0 %v1239
  %1682 = vmatpush1.bf16.msra.mxu0 %v1238
  %1683 = vmatprep.subr.bf16.mxu0 %v1242
  %1684 = vmatpush1.bf16.msra.mxu0 %v1241
  %1685 = vmatprep.subr.bf16.mxu0 %v1245
  %1686 = vmatpush1.bf16.msra.mxu0 %v1244
  %1687 = vmatprep.subr.bf16.mxu0 %v1248
  %1688 = vmatpush1.bf16.msra.mxu0 %v1247
  %1689 = vmatprep.subr.bf16.mxu0 %v1251
  %1690 = vmatpush1.bf16.msra.mxu0 %v1250
  %1691 = vmatprep.subr.bf16.mxu0 %v1254
  %1692 = vmatpush1.bf16.msra.mxu0 %v1253
  %1693 = vmatprep.subr.bf16.mxu0 %v1257
  %1694 = vmatpush1.bf16.msra.mxu0 %v1256
  %1695 = vmatprep.subr.bf16.mxu0 %v1260
  %1696 = vmatpush1.bf16.msra.mxu0 %v1259
  %1697 = vmatprep.subr.bf16.mxu0 %v1263
  %1698 = vmatpush1.bf16.msra.mxu0 %v1262
  %1699 = vmatprep.subr.bf16.mxu0 %v1266
  %1700 = vmatpush1.bf16.msra.mxu0 %v1265
  %1701 = vmatprep.subr.bf16.mxu0 %v1269
  %1702 = vmatpush1.bf16.msra.mxu0 %v1268
  %1703 = vmatprep.subr.bf16.mxu0 %v1272
  %1704 = vmatpush1.bf16.msra.mxu0 %v1271
  %1705 = vmatprep.mubr.bf16.mxu0 %v395
  %1706 = vmatmul.mubr.bf16.gmra.mrb[0].mxu0 %v393
  %v1707 = vpop.f32.mrb[0].mxu0
  %v1708 = vadd.f32 %v1667, %v1707
  %v1709 = vpop.f32.mrb[0].mxu0
  %v1710 = vadd.f32 %v1669, %v1709
  %v1711 = vpop.f32.mrb[0].mxu0
  %v1712 = vpop.f32.mrb[0].mxu0
  %1713 = vdwg.mxu0
  %1714 = vmatprep.subr.bf16.mxu0 %v1275
  %1715 = vmatpush1.bf16.msra.mxu0 %v1274
  %1716 = vmatprep.subr.bf16.mxu0 %v1278
  %1717 = vmatpush1.bf16.msra.mxu0 %v1277
  %1718 = vmatprep.subr.bf16.mxu0 %v1281
  %1719 = vmatpush1.bf16.msra.mxu0 %v1280
  %1720 = vmatprep.subr.bf16.mxu0 %v1284
  %1721 = vmatpush1.bf16.msra.mxu0 %v1283
  %1722 = vmatprep.subr.bf16.mxu0 %v1287
  %1723 = vmatpush1.bf16.msra.mxu0 %v1286
  %1724 = vmatprep.subr.bf16.mxu0 %v1290
  %1725 = vmatpush1.bf16.msra.mxu0 %v1289
  %1726 = vmatprep.subr.bf16.mxu0 %v1293
  %1727 = vmatpush1.bf16.msra.mxu0 %v1292
  %1728 = vmatprep.subr.bf16.mxu0 %v1296
  %1729 = vmatpush1.bf16.msra.mxu0 %v1295
  %1730 = vmatprep.subr.bf16.mxu0 %v1299
  %1731 = vmatpush1.bf16.msra.mxu0 %v1298
  %1732 = vmatprep.subr.bf16.mxu0 %v1302
  %1733 = vmatpush1.bf16.msra.mxu0 %v1301
  %1734 = vmatprep.subr.bf16.mxu0 %v1305
  %1735 = vmatpush1.bf16.msra.mxu0 %v1304
  %1736 = vmatprep.subr.bf16.mxu0 %v1308
  %1737 = vmatpush1.bf16.msra.mxu0 %v1307
  %1738 = vmatprep.subr.bf16.mxu0 %v1311
  %1739 = vmatpush1.bf16.msra.mxu0 %v1310
  %1740 = vmatprep.subr.bf16.mxu0 %v1314
  %1741 = vmatpush1.bf16.msra.mxu0 %v1313
  %1742 = vmatprep.subr.bf16.mxu0 %v1317
  %1743 = vmatpush1.bf16.msra.mxu0 %v1316
  %1744 = vmatprep.subr.bf16.mxu0 %v1320
  %1745 = vmatpush1.bf16.msra.mxu0 %v1319
  %1746 = vmatprep.mubr.bf16.mxu0 %v392
  %1747 = vmatmul.mubr.bf16.gmra.mrb[0].mxu0 %v378
  %v1748 = vpop.f32.mrb[0].mxu0
  %v1749 = vadd.f32 %v1708, %v1748
  %v1750 = vpop.f32.mrb[0].mxu0
  %v1751 = vadd.f32 %v1710, %v1750
  %v1752 = vpop.f32.mrb[0].mxu0
  %v1753 = vpop.f32.mrb[0].mxu0
  %1754 = vdwg.mxu0
  %1755 = vmatprep.subr.bf16.mxu0 %v1323
  %1756 = vmatpush1.bf16.msra.mxu0 %v1322
  %1757 = vmatprep.subr.bf16.mxu0 %v1326
  %1758 = vmatpush1.bf16.msra.mxu0 %v1325
  %1759 = vmatprep.subr.bf16.mxu0 %v1329
  %1760 = vmatpush1.bf16.msra.mxu0 %v1328
  %1761 = vmatprep.subr.bf16.mxu0 %v1332
  %1762 = vmatpush1.bf16.msra.mxu0 %v1331
  %1763 = vmatprep.subr.bf16.mxu0 %v1335
  %1764 = vmatpush1.bf16.msra.mxu0 %v1334
  %1765 = vmatprep.subr.bf16.mxu0 %v1338
  %1766 = vmatpush1.bf16.msra.mxu0 %v1337
  %1767 = vmatprep.subr.bf16.mxu0 %v1341
  %1768 = vmatpush1.bf16.msra.mxu0 %v1340
  %1769 = vmatprep.subr.bf16.mxu0 %v1344
  %1770 = vmatpush1.bf16.msra.mxu0 %v1343
  %1771 = vmatprep.subr.bf16.mxu0 %v1347
  %1772 = vmatpush1.bf16.msra.mxu0 %v1346
  %1773 = vmatprep.subr.bf16.mxu0 %v1350
  %1774 = vmatpush1.bf16.msra.mxu0 %v1349
  %1775 = vmatprep.subr.bf16.mxu0 %v1353
  %1776 = vmatpush1.bf16.msra.mxu0 %v1352
  %1777 = vmatprep.subr.bf16.mxu0 %v1356
  %1778 = vmatpush1.bf16.msra.mxu0 %v1355
  %1779 = vmatprep.subr.bf16.mxu0 %v1359
  %1780 = vmatpush1.bf16.msra.mxu0 %v1358
  %1781 = vmatprep.subr.bf16.mxu0 %v1362
  %1782 = vmatpush1.bf16.msra.mxu0 %v1361
  %1783 = vmatprep.subr.bf16.mxu0 %v1365
  %1784 = vmatpush1.bf16.msra.mxu0 %v1364
  %1785 = vmatprep.subr.bf16.mxu0 %v1368
  %1786 = vmatpush1.bf16.msra.mxu0 %v1367
  %1787 = vmatprep.mubr.bf16.mxu0 %v396
  %1788 = vmatmul.mubr.bf16.gmra.mrb[0].mxu0 %v394
  %v1789 = vpop.f32.mrb[0].mxu0
  %v1790 = vadd.f32 %v1749, %v1789
  %v1791 = vpop.f32.mrb[0].mxu0
  %v1792 = vadd.f32 %v1751, %v1791
  %v1793 = vpop.f32.mrb[0].mxu0
  %v1794 = vpop.f32.mrb[0].mxu0
  %1795 = vdwg.mxu0
  %1796 = vmatprep.subr.bf16.mxu0 %v1371
  %1797 = vmatpush1.bf16.msra.mxu0 %v1370
  %1798 = vmatprep.subr.bf16.mxu0 %v1374
  %1799 = vmatpush1.bf16.msra.mxu0 %v1373
  %1800 = vmatprep.subr.bf16.mxu0 %v1377
  %1801 = vmatpush1.bf16.msra.mxu0 %v1376
  %1802 = vmatprep.subr.bf16.mxu0 %v1380
  %1803 = vmatpush1.bf16.msra.mxu0 %v1379
  %1804 = vmatprep.subr.bf16.mxu0 %v1383
  %1805 = vmatpush1.bf16.msra.mxu0 %v1382
  %1806 = vmatprep.subr.bf16.mxu0 %v1386
  %1807 = vmatpush1.bf16.msra.mxu0 %v1385
  %1808 = vmatprep.subr.bf16.mxu0 %v1389
  %1809 = vmatpush1.bf16.msra.mxu0 %v1388
  %1810 = vmatprep.subr.bf16.mxu0 %v1392
  %1811 = vmatpush1.bf16.msra.mxu0 %v1391
  %1812 = vmatprep.subr.bf16.mxu0 %v1395
  %1813 = vmatpush1.bf16.msra.mxu0 %v1394
  %1814 = vmatprep.subr.bf16.mxu0 %v1398
  %1815 = vmatpush1.bf16.msra.mxu0 %v1397
  %1816 = vmatprep.subr.bf16.mxu0 %v1401
  %1817 = vmatpush1.bf16.msra.mxu0 %v1400
  %1818 = vmatprep.subr.bf16.mxu0 0
  %1819 = vmatpush1.bf16.msra.mxu0 0
  %1820 = vmatprep.subr.bf16.mxu0 0
  %1821 = vmatpush1.bf16.msra.mxu0 0
  %1822 = vmatprep.subr.bf16.mxu0 0
  %1823 = vmatpush1.bf16.msra.mxu0 0
  %1824 = vmatprep.subr.bf16.mxu0 0
  %1825 = vmatpush1.bf16.msra.mxu0 0
  %1826 = vmatprep.subr.bf16.mxu0 0
  %1827 = vmatpush1.bf16.msra.mxu0 0
  %1828 = vmatprep.mubr.bf16.mxu0 %v1630
  %1829 = vmatmul.mubr.bf16.gmra.mrb[0].mxu0 %v411
  %v1830 = vpop.f32.mrb[0].mxu0
  %v1831 = vadd.f32 %v1790, %v1830
  %v1832 = vpop.f32.mrb[0].mxu0
  %v1833 = vadd.f32 %v1792, %v1832
  %v1834 = vpop.f32.mrb[0].mxu0
  %v1835 = vpop.f32.mrb[0].mxu0
  %1836 = vdwg.mxu0
  %1837 = vmatprep.subr.bf16.mxu0 0
  %1838 = vmatpush1.bf16.msra.mxu0 %v1180
  %1839 = vmatprep.subr.bf16.mxu0 0
  %1840 = vmatpush1.bf16.msra.mxu0 %v1183
  %1841 = vmatprep.subr.bf16.mxu0 0
  %1842 = vmatpush1.bf16.msra.mxu0 %v1186
  %1843 = vmatprep.subr.bf16.mxu0 0
  %1844 = vmatpush1.bf16.msra.mxu0 %v1189
  %1845 = vmatprep.subr.bf16.mxu0 0
  %1846 = vmatpush1.bf16.msra.mxu0 %v1192
  %1847 = vmatprep.subr.bf16.mxu0 0
  %1848 = vmatpush1.bf16.msra.mxu0 %v1195
  %1849 = vmatprep.subr.bf16.mxu0 0
  %1850 = vmatpush1.bf16.msra.mxu0 %v1198
  %1851 = vmatprep.subr.bf16.mxu0 0
  %1852 = vmatpush1.bf16.msra.mxu0 %v1201
  %1853 = vmatprep.subr.bf16.mxu0 0
  %1854 = vmatpush1.bf16.msra.mxu0 %v1204
  %1855 = vmatprep.subr.bf16.mxu0 0
  %1856 = vmatpush1.bf16.msra.mxu0 %v1207
  %1857 = vmatprep.subr.bf16.mxu0 0
  %1858 = vmatpush1.bf16.msra.mxu0 %v1210
  %1859 = vmatprep.subr.bf16.mxu0 0
  %1860 = vmatpush1.bf16.msra.mxu0 %v1213
  %1861 = vmatprep.subr.bf16.mxu0 0
  %1862 = vmatpush1.bf16.msra.mxu0 %v1216
  %1863 = vmatprep.subr.bf16.mxu0 0
  %1864 = vmatpush1.bf16.msra.mxu0 %v1219
  %1865 = vmatprep.subr.bf16.mxu0 0
  %1866 = vmatpush1.bf16.msra.mxu0 %v1222
  %1867 = vmatprep.subr.bf16.mxu0 0
  %1868 = vmatpush1.bf16.msra.mxu0 %v1225
  %1869 = vmatprep.mubr.bf16.mxu0 %v385
  %1870 = vmatmul.mubr.bf16.gmra.mrb[0].mxu0 %v371
  %v1871 = vpop.f32.mrb[0].mxu0
  %v1872 = vadd.f32 %v342, %v1871
  %v1873 = vpop.f32.mrb[0].mxu0
  %v1874 = vpop.f32.mrb[0].mxu0
  %v1875 = vpop.f32.mrb[0].mxu0
  %1876 = vdwg.mxu0
  %1877 = vmatprep.subr.bf16.mxu0 0
  %1878 = vmatpush1.bf16.msra.mxu0 %v1228
  %1879 = vmatprep.subr.bf16.mxu0 0
  %1880 = vmatpush1.bf16.msra.mxu0 %v1231
  %1881 = vmatprep.subr.bf16.mxu0 0
  %1882 = vmatpush1.bf16.msra.mxu0 %v1234
  %1883 = vmatprep.subr.bf16.mxu0 0
  %1884 = vmatpush1.bf16.msra.mxu0 %v1237
  %1885 = vmatprep.subr.bf16.mxu0 0
  %1886 = vmatpush1.bf16.msra.mxu0 %v1240
  %1887 = vmatprep.subr.bf16.mxu0 0
  %1888 = vmatpush1.bf16.msra.mxu0 %v1243
  %1889 = vmatprep.subr.bf16.mxu0 0
  %1890 = vmatpush1.bf16.msra.mxu0 %v1246
  %1891 = vmatprep.subr.bf16.mxu0 0
  %1892 = vmatpush1.bf16.msra.mxu0 %v1249
  %1893 = vmatprep.subr.bf16.mxu0 0
  %1894 = vmatpush1.bf16.msra.mxu0 %v1252
  %1895 = vmatprep.subr.bf16.mxu0 0
  %1896 = vmatpush1.bf16.msra.mxu0 %v1255
  %1897 = vmatprep.subr.bf16.mxu0 0
  %1898 = vmatpush1.bf16.msra.mxu0 %v1258
  %1899 = vmatprep.subr.bf16.mxu0 0
  %1900 = vmatpush1.bf16.msra.mxu0 %v1261
  %1901 = vmatprep.subr.bf16.mxu0 0
  %1902 = vmatpush1.bf16.msra.mxu0 %v1264
  %1903 = vmatprep.subr.bf16.mxu0 0
  %1904 = vmatpush1.bf16.msra.mxu0 %v1267
  %1905 = vmatprep.subr.bf16.mxu0 0
  %1906 = vmatpush1.bf16.msra.mxu0 %v1270
  %1907 = vmatprep.subr.bf16.mxu0 0
  %1908 = vmatpush1.bf16.msra.mxu0 %v1273
  %1909 = vmatprep.mubr.bf16.mxu0 %v395
  %1910 = vmatmul.mubr.bf16.gmra.mrb[0].mxu0 %v393
  %v1911 = vpop.f32.mrb[0].mxu0
  %v1912 = vadd.f32 %v1872, %v1911
  %v1913 = vpop.f32.mrb[0].mxu0
  %v1914 = vpop.f32.mrb[0].mxu0
  %v1915 = vpop.f32.mrb[0].mxu0
  %1916 = vdwg.mxu0
  %1917 = vmatprep.subr.bf16.mxu0 0
  %1918 = vmatpush1.bf16.msra.mxu0 %v1276
  %1919 = vmatprep.subr.bf16.mxu0 0
  %1920 = vmatpush1.bf16.msra.mxu0 %v1279
  %1921 = vmatprep.subr.bf16.mxu0 0
  %1922 = vmatpush1.bf16.msra.mxu0 %v1282
  %1923 = vmatprep.subr.bf16.mxu0 0
  %1924 = vmatpush1.bf16.msra.mxu0 %v1285
  %1925 = vmatprep.subr.bf16.mxu0 0
  %1926 = vmatpush1.bf16.msra.mxu0 %v1288
  %1927 = vmatprep.subr.bf16.mxu0 0
  %1928 = vmatpush1.bf16.msra.mxu0 %v1291
  %1929 = vmatprep.subr.bf16.mxu0 0
  %1930 = vmatpush1.bf16.msra.mxu0 %v1294
  %1931 = vmatprep.subr.bf16.mxu0 0
  %1932 = vmatpush1.bf16.msra.mxu0 %v1297
  %1933 = vmatprep.subr.bf16.mxu0 0
  %1934 = vmatpush1.bf16.msra.mxu0 %v1300
  %1935 = vmatprep.subr.bf16.mxu0 0
  %1936 = vmatpush1.bf16.msra.mxu0 %v1303
  %1937 = vmatprep.subr.bf16.mxu0 0
  %1938 = vmatpush1.bf16.msra.mxu0 %v1306
  %1939 = vmatprep.subr.bf16.mxu0 0
  %1940 = vmatpush1.bf16.msra.mxu0 %v1309
  %1941 = vmatprep.subr.bf16.mxu0 0
  %1942 = vmatpush1.bf16.msra.mxu0 %v1312
  %1943 = vmatprep.subr.bf16.mxu0 0
  %1944 = vmatpush1.bf16.msra.mxu0 %v1315
  %1945 = vmatprep.subr.bf16.mxu0 0
  %1946 = vmatpush1.bf16.msra.mxu0 %v1318
  %1947 = vmatprep.subr.bf16.mxu0 0
  %1948 = vmatpush1.bf16.msra.mxu0 %v1321
  %1949 = vmatprep.mubr.bf16.mxu0 %v392
  %1950 = vmatmul.mubr.bf16.gmra.mrb[0].mxu0 %v378
  %v1951 = vpop.f32.mrb[0].mxu0
  %v1952 = vadd.f32 %v1912, %v1951
  %v1953 = vpop.f32.mrb[0].mxu0
  %v1954 = vpop.f32.mrb[0].mxu0
  %v1955 = vpop.f32.mrb[0].mxu0
  %1956 = vdwg.mxu0
  %1957 = vmatprep.subr.bf16.mxu0 0
  %1958 = vmatpush1.bf16.msra.mxu0 %v1324
  %1959 = vmatprep.subr.bf16.mxu0 0
  %1960 = vmatpush1.bf16.msra.mxu0 %v1327
  %1961 = vmatprep.subr.bf16.mxu0 0
  %1962 = vmatpush1.bf16.msra.mxu0 %v1330
  %1963 = vmatprep.subr.bf16.mxu0 0
  %1964 = vmatpush1.bf16.msra.mxu0 %v1333
  %1965 = vmatprep.subr.bf16.mxu0 0
  %1966 = vmatpush1.bf16.msra.mxu0 %v1336
  %1967 = vmatprep.subr.bf16.mxu0 0
  %1968 = vmatpush1.bf16.msra.mxu0 %v1339
  %1969 = vmatprep.subr.bf16.mxu0 0
  %1970 = vmatpush1.bf16.msra.mxu0 %v1342
  %1971 = vmatprep.subr.bf16.mxu0 0
  %1972 = vmatpush1.bf16.msra.mxu0 %v1345
  %1973 = vmatprep.subr.bf16.mxu0 0
  %1974 = vmatpush1.bf16.msra.mxu0 %v1348
  %1975 = vmatprep.subr.bf16.mxu0 0
  %1976 = vmatpush1.bf16.msra.mxu0 %v1351
  %1977 = vmatprep.subr.bf16.mxu0 0
  %1978 = vmatpush1.bf16.msra.mxu0 %v1354
  %1979 = vmatprep.subr.bf16.mxu0 0
  %1980 = vmatpush1.bf16.msra.mxu0 %v1357
  %1981 = vmatprep.subr.bf16.mxu0 0
  %1982 = vmatpush1.bf16.msra.mxu0 %v1360
  %1983 = vmatprep.subr.bf16.mxu0 0
  %1984 = vmatpush1.bf16.msra.mxu0 %v1363
  %1985 = vmatprep.subr.bf16.mxu0 0
  %1986 = vmatpush1.bf16.msra.mxu0 %v1366
  %1987 = vmatprep.subr.bf16.mxu0 0
  %1988 = vmatpush1.bf16.msra.mxu0 %v1369
  %1989 = vmatprep.mubr.bf16.mxu0 %v396
  %1990 = vmatmul.mubr.bf16.gmra.mrb[0].mxu0 %v394
  %v1991 = vpop.f32.mrb[0].mxu0
  %v1992 = vadd.f32 %v1952, %v1991
  %v1993 = vpop.f32.mrb[0].mxu0
  %v1994 = vpop.f32.mrb[0].mxu0
  %v1995 = vpop.f32.mrb[0].mxu0
  %1996 = vdwg.mxu0
  %1997 = vmatprep.subr.bf16.mxu0 0
  %1998 = vmatpush1.bf16.msra.mxu0 %v1372
  %1999 = vmatprep.subr.bf16.mxu0 0
  %2000 = vmatpush1.bf16.msra.mxu0 %v1375
  %2001 = vmatprep.subr.bf16.mxu0 0
  %2002 = vmatpush1.bf16.msra.mxu0 %v1378
  %2003 = vmatprep.subr.bf16.mxu0 0
  %2004 = vmatpush1.bf16.msra.mxu0 %v1381
  %2005 = vmatprep.subr.bf16.mxu0 0
  %2006 = vmatpush1.bf16.msra.mxu0 %v1384
  %2007 = vmatprep.subr.bf16.mxu0 0
  %2008 = vmatpush1.bf16.msra.mxu0 %v1387
  %2009 = vmatprep.subr.bf16.mxu0 0
  %2010 = vmatpush1.bf16.msra.mxu0 %v1390
  %2011 = vmatprep.subr.bf16.mxu0 0
  %2012 = vmatpush1.bf16.msra.mxu0 %v1393
  %2013 = vmatprep.subr.bf16.mxu0 0
  %2014 = vmatpush1.bf16.msra.mxu0 %v1396
  %2015 = vmatprep.subr.bf16.mxu0 0
  %2016 = vmatpush1.bf16.msra.mxu0 %v1399
  %2017 = vmatprep.subr.bf16.mxu0 0
  %2018 = vmatpush1.bf16.msra.mxu0 %v1402
  %2019 = vmatprep.subr.bf16.mxu0 0
  %2020 = vmatpush1.bf16.msra.mxu0 0
  %2021 = vmatprep.subr.bf16.mxu0 0
  %2022 = vmatpush1.bf16.msra.mxu0 0
  %2023 = vmatprep.subr.bf16.mxu0 0
  %2024 = vmatpush1.bf16.msra.mxu0 0
  %2025 = vmatprep.subr.bf16.mxu0 0
  %2026 = vmatpush1.bf16.msra.mxu0 0
  %2027 = vmatprep.subr.bf16.mxu0 0
  %2028 = vmatpush1.bf16.msra.mxu0 0
  %2029 = vmatprep.mubr.bf16.mxu0 %v1630
  %2030 = vmatmul.mubr.bf16.gmra.mrb[0].mxu0 %v411
  %v2031 = vpop.f32.mrb[0].mxu0
  %v2032 = vadd.f32 %v1992, %v2031
  %v2033 = vpop.f32.mrb[0].mxu0
  %v2034 = vpop.f32.mrb[0].mxu0
  %v2035 = vpop.f32.mrb[0].mxu0
  %2036 = vdwg.mxu0
  %v2037 = vtanh.pop %v1831
  %v2038 = vtanh.pop %v1833
  %v2039 = vtanh.pop %v2032
  %v2040 = vpack.c.bf16 %v2037, %v2037
  %v2041 = vpack.c.bf16 %v2038, %v2038
  %v2042 = vpack.c.bf16 %v2039, %v2039
  %v2043 = vld [vmem:[%s3] sm:$0xff]
  %v2044 = vld [vmem:[%s3 + $0x8] sm:$0xff]
  %v2045 = vld [vmem:[%s3 + $0x10] sm:$0xff]
  %v2046 = vld [vmem:[%s3 + $0x18] sm:$0xff]
  %v2047 = vld [vmem:[%s3 + $0x20] sm:$0xff]
  %v2048 = vld [vmem:[%s3 + $0x28] sm:$0xff]
  %v2049 = vld [vmem:[%s3 + $0x30] sm:$0xff]
  %v2050 = vld [vmem:[%s3 + $0x38] sm:$0xff]
  %v2051 = vld [vmem:[%s3 + $0x40] sm:$0xff]
  %v2052 = vld [vmem:[%s3 + $0x48] sm:$0xff]
  %v2053 = vld [vmem:[%s3 + $0x50] sm:$0xff]
  %v2054 = vld [vmem:[%s3 + $0x58] sm:$0xff]
  %v2055 = vld [vmem:[%s3 + $0x60] sm:$0xff]
  %v2056 = vld [vmem:[%s3 + $0x68] sm:$0xff]
  %v2057 = vld [vmem:[%s3 + $0x70] sm:$0xff]
  %v2058 = vld [vmem:[%s3 + $0x78] sm:$0xff]
  %v2059 = vld [vmem:[%s3 + $0x80] sm:$0xff]
  %v2060 = vld [vmem:[%s3 + $0x88] sm:$0xff]
  %v2061 = vld [vmem:[%s3 + $0x90] sm:$0xff]
  %v2062 = vld [vmem:[%s3 + $0x98] sm:$0xff]
  %v2063 = vld [vmem:[%s3 + $0xa0] sm:$0xff]
  %v2064 = vld [vmem:[%s3 + $0xa8] sm:$0xff]
  %v2065 = vld [vmem:[%s3 + $0xb0] sm:$0xff]
  %v2066 = vld [vmem:[%s3 + $0xb8] sm:$0xff]
  %v2067 = vld [vmem:[%s3 + $0xc0] sm:$0xff]
  %v2068 = vld [vmem:[%s3 + $0xc8] sm:$0xff]
  %v2069 = vld [vmem:[%s3 + $0xd0] sm:$0xff]
  %v2070 = vld [vmem:[%s3 + $0xd8] sm:$0xff]
  %v2071 = vld [vmem:[%s3 + $0xe0] sm:$0xff]
  %v2072 = vld [vmem:[%s3 + $0xe8] sm:$0xff]
  %v2073 = vld [vmem:[%s3 + $0xf0] sm:$0xff]
  %v2074 = vld [vmem:[%s3 + $0xf8] sm:$0xff]
  %v2075 = vld [vmem:[%s3 + $0x100] sm:$0xff]
  %v2076 = vld [vmem:[%s3 + $0x108] sm:$0xff]
  %v2077 = vld [vmem:[%s3 + $0x110] sm:$0xff]
  %v2078 = vld [vmem:[%s3 + $0x118] sm:$0xff]
  %v2079 = vld [vmem:[%s3 + $0x120] sm:$0xff]
  %v2080 = vld [vmem:[%s3 + $0x128] sm:$0xff]
  %v2081 = vld [vmem:[%s3 + $0x130] sm:$0xff]
  %v2082 = vld [vmem:[%s3 + $0x138] sm:$0xff]
  %v2083 = vld [vmem:[%s3 + $0x140] sm:$0xff]
  %v2084 = vld [vmem:[%s3 + $0x148] sm:$0xff]
  %v2085 = vld [vmem:[%s3 + $0x150] sm:$0xff]
  %v2086 = vld [vmem:[%s3 + $0x158] sm:$0xff]
  %v2087 = vld [vmem:[%s3 + $0x160] sm:$0xff]
  %v2088 = vld [vmem:[%s3 + $0x168] sm:$0xff]
  %v2089 = vld [vmem:[%s3 + $0x170] sm:$0xff]
  %v2090 = vld [vmem:[%s3 + $0x178] sm:$0xff]
  %v2091 = vld [vmem:[%s4] sm:$0x3]
  %v2093 = vlaneseq
  %v2094 = vshrl.u32 %v2093, 7
  %v2095 = vsub.s32 0, %v2094
  %v2096 = vrot.slane %v2091, %v2095
  %v2097 = vlaneseq
  %v2098 = vshrl.u32 %v2097, 7
  %v2099 = vsub.s32 1, %v2098
  %v2100 = vrot.slane %v2091, %v2099
  %v2151 = vunpack.c.l.b16 %v2043
  %v2152 = vunpack.c.h.b16 %v2043
  %v2153 = vunpack.c.l.b16 %v2044
  %v2154 = vunpack.c.h.b16 %v2044
  %v2155 = vunpack.c.l.b16 %v2045
  %v2156 = vunpack.c.h.b16 %v2045
  %v2157 = vunpack.c.l.b16 %v2046
  %v2158 = vunpack.c.h.b16 %v2046
  %v2159 = vunpack.c.l.b16 %v2047
  %v2160 = vunpack.c.h.b16 %v2047
  %v2161 = vunpack.c.l.b16 %v2048
  %v2162 = vunpack.c.h.b16 %v2048
  %v2163 = vunpack.c.l.b16 %v2049
  %v2164 = vunpack.c.h.b16 %v2049
  %v2165 = vunpack.c.l.b16 %v2050
  %v2166 = vunpack.c.h.b16 %v2050
  %v2167 = vunpack.c.l.b16 %v2051
  %v2168 = vunpack.c.h.b16 %v2051
  %v2169 = vunpack.c.l.b16 %v2052
  %v2170 = vunpack.c.h.b16 %v2052
  %v2171 = vunpack.c.l.b16 %v2053
  %v2172 = vunpack.c.h.b16 %v2053
  %v2173 = vunpack.c.l.b16 %v2054
  %v2174 = vunpack.c.h.b16 %v2054
  %v2175 = vunpack.c.l.b16 %v2055
  %v2176 = vunpack.c.h.b16 %v2055
  %v2177 = vunpack.c.l.b16 %v2056
  %v2178 = vunpack.c.h.b16 %v2056
  %v2179 = vunpack.c.l.b16 %v2057
  %v2180 = vunpack.c.h.b16 %v2057
  %v2181 = vunpack.c.l.b16 %v2058
  %v2182 = vunpack.c.h.b16 %v2058
  %v2183 = vunpack.c.l.b16 %v2059
  %v2184 = vunpack.c.h.b16 %v2059
  %v2185 = vunpack.c.l.b16 %v2060
  %v2186 = vunpack.c.h.b16 %v2060
  %v2187 = vunpack.c.l.b16 %v2061
  %v2188 = vunpack.c.h.b16 %v2061
  %v2189 = vunpack.c.l.b16 %v2062
  %v2190 = vunpack.c.h.b16 %v2062
  %v2191 = vunpack.c.l.b16 %v2063
  %v2192 = vunpack.c.h.b16 %v2063
  %v2193 = vunpack.c.l.b16 %v2064
  %v2194 = vunpack.c.h.b16 %v2064
  %v2195 = vunpack.c.l.b16 %v2065
  %v2196 = vunpack.c.h.b16 %v2065
  %v2197 = vunpack.c.l.b16 %v2066
  %v2198 = vunpack.c.h.b16 %v2066
  %v2199 = vunpack.c.l.b16 %v2067
  %v2200 = vunpack.c.h.b16 %v2067
  %v2201 = vunpack.c.l.b16 %v2068
  %v2202 = vunpack.c.h.b16 %v2068
  %v2203 = vunpack.c.l.b16 %v2069
  %v2204 = vunpack.c.h.b16 %v2069
  %v2205 = vunpack.c.l.b16 %v2070
  %v2206 = vunpack.c.h.b16 %v2070
  %v2207 = vunpack.c.l.b16 %v2071
  %v2208 = vunpack.c.h.b16 %v2071
  %v2209 = vunpack.c.l.b16 %v2072
  %v2210 = vunpack.c.h.b16 %v2072
  %v2211 = vunpack.c.l.b16 %v2073
  %v2212 = vunpack.c.h.b16 %v2073
  %v2213 = vunpack.c.l.b16 %v2074
  %v2214 = vunpack.c.h.b16 %v2074
  %v2215 = vunpack.c.l.b16 %v2075
  %v2216 = vunpack.c.h.b16 %v2075
  %v2217 = vunpack.c.l.b16 %v2076
  %v2218 = vunpack.c.h.b16 %v2076
  %v2219 = vunpack.c.l.b16 %v2077
  %v2220 = vunpack.c.h.b16 %v2077
  %v2221 = vunpack.c.l.b16 %v2078
  %v2222 = vunpack.c.h.b16 %v2078
  %v2223 = vunpack.c.l.b16 %v2079
  %v2224 = vunpack.c.h.b16 %v2079
  %v2225 = vunpack.c.l.b16 %v2080
  %v2226 = vunpack.c.h.b16 %v2080
  %v2227 = vunpack.c.l.b16 %v2081
  %v2228 = vunpack.c.h.b16 %v2081
  %v2229 = vunpack.c.l.b16 %v2082
  %v2230 = vunpack.c.h.b16 %v2082
  %v2231 = vunpack.c.l.b16 %v2083
  %v2232 = vunpack.c.h.b16 %v2083
  %v2233 = vunpack.c.l.b16 %v2084
  %v2234 = vunpack.c.h.b16 %v2084
  %v2235 = vunpack.c.l.b16 %v2085
  %v2236 = vunpack.c.h.b16 %v2085
  %v2237 = vunpack.c.l.b16 %v2086
  %v2238 = vunpack.c.h.b16 %v2086
  %v2239 = vunpack.c.l.b16 %v2087
  %v2240 = vunpack.c.h.b16 %v2087
  %v2241 = vunpack.c.l.b16 %v2088
  %v2242 = vunpack.c.h.b16 %v2088
  %v2243 = vunpack.c.l.b16 %v2089
  %v2244 = vunpack.c.h.b16 %v2089
  %v2245 = vunpack.c.l.b16 %v2090
  %v2246 = vunpack.c.h.b16 %v2090
  %v2247 = vpack.c.b16 %v2153, %v2151
  %v2248 = vpack.c.b16 %v2154, %v2152
  %v2249 = vpack.c.b16 %v2157, %v2155
  %v2250 = vpack.c.b16 %v2158, %v2156
  %v2251 = vpack.c.b16 %v2161, %v2159
  %v2252 = vpack.c.b16 %v2162, %v2160
  %v2253 = vpack.c.b16 %v2165, %v2163
  %v2254 = vpack.c.b16 %v2166, %v2164
  %v2255 = vpack.c.b16 %v2169, %v2167
  %v2256 = vpack.c.b16 %v2170, %v2168
  %v2257 = vpack.c.b16 %v2173, %v2171
  %v2258 = vpack.c.b16 %v2174, %v2172
  %v2259 = vpack.c.b16 %v2177, %v2175
  %v2260 = vpack.c.b16 %v2178, %v2176
  %v2261 = vpack.c.b16 %v2181, %v2179
  %v2262 = vpack.c.b16 %v2182, %v2180
  %v2263 = vpack.c.b16 %v2185, %v2183
  %v2264 = vpack.c.b16 %v2186, %v2184
  %v2265 = vpack.c.b16 %v2189, %v2187
  %v2266 = vpack.c.b16 %v2190, %v2188
  %v2267 = vpack.c.b16 %v2193, %v2191
  %v2268 = vpack.c.b16 %v2194, %v2192
  %v2269 = vpack.c.b16 %v2197, %v2195
  %v2270 = vpack.c.b16 %v2198, %v2196
  %v2271 = vpack.c.b16 %v2201, %v2199
  %v2272 = vpack.c.b16 %v2202, %v2200
  %v2273 = vpack.c.b16 %v2205, %v2203
  %v2274 = vpack.c.b16 %v2206, %v2204
  %v2275 = vpack.c.b16 %v2209, %v2207
  %v2276 = vpack.c.b16 %v2210, %v2208
  %v2277 = vpack.c.b16 %v2213, %v2211
  %v2278 = vpack.c.b16 %v2214, %v2212
  %v2279 = vpack.c.b16 %v2217, %v2215
  %v2280 = vpack.c.b16 %v2218, %v2216
  %v2281 = vpack.c.b16 %v2221, %v2219
  %v2282 = vpack.c.b16 %v2222, %v2220
  %v2283 = vpack.c.b16 %v2225, %v2223
  %v2284 = vpack.c.b16 %v2226, %v2224
  %v2285 = vpack.c.b16 %v2229, %v2227
  %v2286 = vpack.c.b16 %v2230, %v2228
  %v2287 = vpack.c.b16 %v2233, %v2231
  %v2288 = vpack.c.b16 %v2234, %v2232
  %v2289 = vpack.c.b16 %v2237, %v2235
  %v2290 = vpack.c.b16 %v2238, %v2236
  %v2291 = vpack.c.b16 %v2241, %v2239
  %v2292 = vpack.c.b16 %v2242, %v2240
  %v2293 = vpack.c.b16 %v2245, %v2243
  %v2294 = vpack.c.b16 %v2246, %v2244
  %2343 = vmatprep.subr.bf16.mxu0 %v2248
  %2344 = vmatpush1.bf16.msra.mxu0 %v2247
  %2345 = vmatprep.subr.bf16.mxu0 %v2250
  %2346 = vmatpush1.bf16.msra.mxu0 %v2249
  %2347 = vmatprep.subr.bf16.mxu0 %v2252
  %2348 = vmatpush1.bf16.msra.mxu0 %v2251
  %2349 = vmatprep.subr.bf16.mxu0 %v2254
  %2350 = vmatpush1.bf16.msra.mxu0 %v2253
  %2351 = vmatprep.subr.bf16.mxu0 %v2256
  %2352 = vmatpush1.bf16.msra.mxu0 %v2255
  %2353 = vmatprep.subr.bf16.mxu0 %v2258
  %2354 = vmatpush1.bf16.msra.mxu0 %v2257
  %2355 = vmatprep.subr.bf16.mxu0 %v2260
  %2356 = vmatpush1.bf16.msra.mxu0 %v2259
  %2357 = vmatprep.subr.bf16.mxu0 %v2262
  %2358 = vmatpush1.bf16.msra.mxu0 %v2261
  %2359 = vmatprep.subr.bf16.mxu0 %v2264
  %2360 = vmatpush1.bf16.msra.mxu0 %v2263
  %2361 = vmatprep.subr.bf16.mxu0 %v2266
  %2362 = vmatpush1.bf16.msra.mxu0 %v2265
  %2363 = vmatprep.subr.bf16.mxu0 %v2268
  %2364 = vmatpush1.bf16.msra.mxu0 %v2267
  %2365 = vmatprep.subr.bf16.mxu0 %v2270
  %2366 = vmatpush1.bf16.msra.mxu0 %v2269
  %2367 = vmatprep.subr.bf16.mxu0 %v2272
  %2368 = vmatpush1.bf16.msra.mxu0 %v2271
  %2369 = vmatprep.subr.bf16.mxu0 %v2274
  %2370 = vmatpush1.bf16.msra.mxu0 %v2273
  %2371 = vmatprep.subr.bf16.mxu0 %v2276
  %2372 = vmatpush1.bf16.msra.mxu0 %v2275
  %2373 = vmatprep.subr.bf16.mxu0 %v2278
  %2374 = vmatpush1.bf16.msra.mxu0 %v2277
  %2375 = vmatprep.mubr.bf16.mxu0 %v2041
  %2376 = vmatmul.mubr.bf16.gmra.mrb[0].mxu0 %v2040
  %v2377 = vpop.f32.mrb[0].mxu0
  %v2378 = vadd.f32 %v2096, %v2377
  %v2379 = vpop.f32.mrb[0].mxu0
  %v2380 = vadd.f32 %v2100, %v2379
  %v2381 = vpop.f32.mrb[0].mxu0
  %v2382 = vpop.f32.mrb[0].mxu0
  %2383 = vdwg.mxu0
  %2384 = vmatprep.subr.bf16.mxu0 %v2280
  %2385 = vmatpush1.bf16.msra.mxu0 %v2279
  %2386 = vmatprep.subr.bf16.mxu0 %v2282
  %2387 = vmatpush1.bf16.msra.mxu0 %v2281
  %2388 = vmatprep.subr.bf16.mxu0 %v2284
  %2389 = vmatpush1.bf16.msra.mxu0 %v2283
  %2390 = vmatprep.subr.bf16.mxu0 %v2286
  %2391 = vmatpush1.bf16.msra.mxu0 %v2285
  %2392 = vmatprep.subr.bf16.mxu0 %v2288
  %2393 = vmatpush1.bf16.msra.mxu0 %v2287
  %2394 = vmatprep.subr.bf16.mxu0 %v2290
  %2395 = vmatpush1.bf16.msra.mxu0 %v2289
  %2396 = vmatprep.subr.bf16.mxu0 %v2292
  %2397 = vmatpush1.bf16.msra.mxu0 %v2291
  %2398 = vmatprep.subr.bf16.mxu0 %v2294
  %2399 = vmatpush1.bf16.msra.mxu0 %v2293
  %2400 = vmatprep.subr.bf16.mxu0 0
  %2401 = vmatpush1.bf16.msra.mxu0 0
  %2402 = vmatprep.subr.bf16.mxu0 0
  %2403 = vmatpush1.bf16.msra.mxu0 0
  %2404 = vmatprep.subr.bf16.mxu0 0
  %2405 = vmatpush1.bf16.msra.mxu0 0
  %2406 = vmatprep.subr.bf16.mxu0 0
  %2407 = vmatpush1.bf16.msra.mxu0 0
  %2408 = vmatprep.subr.bf16.mxu0 0
  %2409 = vmatpush1.bf16.msra.mxu0 0
  %2410 = vmatprep.subr.bf16.mxu0 0
  %2411 = vmatpush1.bf16.msra.mxu0 0
  %2412 = vmatprep.subr.bf16.mxu0 0
  %2413 = vmatpush1.bf16.msra.mxu0 0
  %2414 = vmatprep.subr.bf16.mxu0 0
  %2415 = vmatpush1.bf16.msra.mxu0 0
  %2416 = vmatprep.mubr.bf16.mxu0 0
  %2417 = vmatmul.mubr.bf16.gmra.mrb[0].mxu0 %v2042
  %v2418 = vpop.f32.mrb[0].mxu0
  %v2419 = vadd.f32 %v2378, %v2418
  %v2420 = vpop.f32.mrb[0].mxu0
  %v2421 = vadd.f32 %v2380, %v2420
  %v2422 = vpop.f32.mrb[0].mxu0
  %v2423 = vpop.f32.mrb[0].mxu0
  %2424 = vdwg.mxu0
  %v2425 = vtanh.pop %v2419
  %v2426 = vtanh.pop %v2421
  %v2427 = vpack.c.bf16 %v2425, %v2425
  %v2428 = vpack.c.bf16 %v2426, %v2426
  %v2429 = vld [vmem:[%s5] sm:$0xf]
  %v2430 = vld [vmem:[%s5 + $0x4] sm:$0xf]
  %v2431 = vld [vmem:[%s5 + $0x8] sm:$0xf]
  %v2432 = vld [vmem:[%s5 + $0xc] sm:$0xf]
  %v2433 = vld [vmem:[%s5 + $0x10] sm:$0xf]
  %v2434 = vld [vmem:[%s5 + $0x14] sm:$0xf]
  %v2435 = vld [vmem:[%s5 + $0x18] sm:$0xf]
  %v2436 = vld [vmem:[%s5 + $0x1c] sm:$0xf]
  %v2437 = vld [vmem:[%s5 + $0x20] sm:$0xf]
  %v2438 = vld [vmem:[%s5 + $0x24] sm:$0xf]
  %v2439 = vld [vmem:[%s5 + $0x28] sm:$0xf]
  %v2440 = vld [vmem:[%s5 + $0x2c] sm:$0xf]
  %v2441 = vld [vmem:[%s5 + $0x30] sm:$0xf]
  %v2442 = vld [vmem:[%s5 + $0x34] sm:$0xf]
  %v2443 = vld [vmem:[%s5 + $0x38] sm:$0xf]
  %v2444 = vld [vmem:[%s5 + $0x3c] sm:$0xf]
  %v2445 = vld [vmem:[%s5 + $0x40] sm:$0xf]
  %v2446 = vld [vmem:[%s5 + $0x44] sm:$0xf]
  %v2447 = vld [vmem:[%s5 + $0x48] sm:$0xf]
  %v2448 = vld [vmem:[%s5 + $0x4c] sm:$0xf]
  %v2449 = vld [vmem:[%s5 + $0x50] sm:$0xf]
  %v2450 = vld [vmem:[%s5 + $0x54] sm:$0xf]
  %v2451 = vld [vmem:[%s5 + $0x58] sm:$0xf]
  %v2452 = vld [vmem:[%s5 + $0x5c] sm:$0xf]
  %v2453 = vld [vmem:[%s5 + $0x60] sm:$0xf]
  %v2454 = vld [vmem:[%s5 + $0x64] sm:$0xf]
  %v2455 = vld [vmem:[%s5 + $0x68] sm:$0xf]
  %v2456 = vld [vmem:[%s5 + $0x6c] sm:$0xf]
  %v2457 = vld [vmem:[%s5 + $0x70] sm:$0xf]
  %v2458 = vld [vmem:[%s5 + $0x74] sm:$0xf]
  %v2459 = vld [vmem:[%s5 + $0x78] sm:$0xf]
  %v2460 = vld [vmem:[%s5 + $0x7c] sm:$0xf]
  %v2461 = vld [vmem:[%s6] sm:$0x1]
  %v2463 = vlaneseq
  %v2464 = vshrl.u32 %v2463, 7
  %v2465 = vsub.s32 0, %v2464
  %v2466 = vrot.slane %v2461, %v2465
  %v2500 = vunpack.c.l.b16 %v2429
  %v2501 = vunpack.c.l.b16 %v2430
  %v2502 = vunpack.c.l.b16 %v2431
  %v2503 = vunpack.c.l.b16 %v2432
  %v2504 = vunpack.c.l.b16 %v2433
  %v2505 = vunpack.c.l.b16 %v2434
  %v2506 = vunpack.c.l.b16 %v2435
  %v2507 = vunpack.c.l.b16 %v2436
  %v2508 = vunpack.c.l.b16 %v2437
  %v2509 = vunpack.c.l.b16 %v2438
  %v2510 = vunpack.c.l.b16 %v2439
  %v2511 = vunpack.c.l.b16 %v2440
  %v2512 = vunpack.c.l.b16 %v2441
  %v2513 = vunpack.c.l.b16 %v2442
  %v2514 = vunpack.c.l.b16 %v2443
  %v2515 = vunpack.c.l.b16 %v2444
  %v2516 = vunpack.c.l.b16 %v2445
  %v2517 = vunpack.c.l.b16 %v2446
  %v2518 = vunpack.c.l.b16 %v2447
  %v2519 = vunpack.c.l.b16 %v2448
  %v2520 = vunpack.c.l.b16 %v2449
  %v2521 = vunpack.c.l.b16 %v2450
  %v2522 = vunpack.c.l.b16 %v2451
  %v2523 = vunpack.c.l.b16 %v2452
  %v2524 = vunpack.c.l.b16 %v2453
  %v2525 = vunpack.c.l.b16 %v2454
  %v2526 = vunpack.c.l.b16 %v2455
  %v2527 = vunpack.c.l.b16 %v2456
  %v2528 = vunpack.c.l.b16 %v2457
  %v2529 = vunpack.c.l.b16 %v2458
  %v2530 = vunpack.c.l.b16 %v2459
  %v2531 = vunpack.c.l.b16 %v2460
  %v2532 = vpack.c.b16 %v2501, %v2500
  %v2533 = vpack.c.b16 %v2503, %v2502
  %v2534 = vpack.c.b16 %v2505, %v2504
  %v2535 = vpack.c.b16 %v2507, %v2506
  %v2536 = vpack.c.b16 %v2509, %v2508
  %v2537 = vpack.c.b16 %v2511, %v2510
  %v2538 = vpack.c.b16 %v2513, %v2512
  %v2539 = vpack.c.b16 %v2515, %v2514
  %v2540 = vpack.c.b16 %v2517, %v2516
  %v2541 = vpack.c.b16 %v2519, %v2518
  %v2542 = vpack.c.b16 %v2521, %v2520
  %v2543 = vpack.c.b16 %v2523, %v2522
  %v2544 = vpack.c.b16 %v2525, %v2524
  %v2545 = vpack.c.b16 %v2527, %v2526
  %v2546 = vpack.c.b16 %v2529, %v2528
  %v2547 = vpack.c.b16 %v2531, %v2530
  %2564 = vmatprep.subr.bf16.mxu0 0
  %2565 = vmatpush1.bf16.msra.mxu0 %v2532
  %2566 = vmatprep.subr.bf16.mxu0 0
  %2567 = vmatpush1.bf16.msra.mxu0 %v2533
  %2568 = vmatprep.subr.bf16.mxu0 0
  %2569 = vmatpush1.bf16.msra.mxu0 %v2534
  %2570 = vmatprep.subr.bf16.mxu0 0
  %2571 = vmatpush1.bf16.msra.mxu0 %v2535
  %2572 = vmatprep.subr.bf16.mxu0 0
  %2573 = vmatpush1.bf16.msra.mxu0 %v2536
  %2574 = vmatprep.subr.bf16.mxu0 0
  %2575 = vmatpush1.bf16.msra.mxu0 %v2537
  %2576 = vmatprep.subr.bf16.mxu0 0
  %2577 = vmatpush1.bf16.msra.mxu0 %v2538
  %2578 = vmatprep.subr.bf16.mxu0 0
  %2579 = vmatpush1.bf16.msra.mxu0 %v2539
  %2580 = vmatprep.subr.bf16.mxu0 0
  %2581 = vmatpush1.bf16.msra.mxu0 %v2540
  %2582 = vmatprep.subr.bf16.mxu0 0
  %2583 = vmatpush1.bf16.msra.mxu0 %v2541
  %2584 = vmatprep.subr.bf16.mxu0 0
  %2585 = vmatpush1.bf16.msra.mxu0 %v2542
  %2586 = vmatprep.subr.bf16.mxu0 0
  %2587 = vmatpush1.bf16.msra.mxu0 %v2543
  %2588 = vmatprep.subr.bf16.mxu0 0
  %2589 = vmatpush1.bf16.msra.mxu0 %v2544
  %2590 = vmatprep.subr.bf16.mxu0 0
  %2591 = vmatpush1.bf16.msra.mxu0 %v2545
  %2592 = vmatprep.subr.bf16.mxu0 0
  %2593 = vmatpush1.bf16.msra.mxu0 %v2546
  %2594 = vmatprep.subr.bf16.mxu0 0
  %2595 = vmatpush1.bf16.msra.mxu0 %v2547
  %2596 = vmatprep.mubr.bf16.mxu0 %v2428
  %2597 = vmatmul.mubr.bf16.gmra.mrb[0].mxu0 %v2427
  %v2598 = vpop.f32.mrb[0].mxu0
  %v2599 = vadd.f32 %v2466, %v2598
  %v2600 = vpop.f32.mrb[0].mxu0
  %v2601 = vpop.f32.mrb[0].mxu0
  %v2602 = vpop.f32.mrb[0].mxu0
  %2603 = vdwg.mxu0
  %2604 = vst [vmem:[%s7] sm:$0x3] %v2599
  // Predicated region
  $region30: #{lenet_forward.5} parent=0 // pred_check
    _
  $region31: #{lenet_forward.5} parent=0 // pred_check_branch
    %2606 = sbr.rel (0) target = $region33
  $region32: #{lenet_forward.5} parent=0 // pred_region
    _
  $region33: #{lenet_forward.5} parent=0 // pred_fallthru
    _
  // Predicated region
  $region34: #{lenet_forward.5} parent=0 // pred_check
    _
  $region35: #{lenet_forward.5} parent=0 // pred_check_branch
    %2608 = sbr.rel (0) target = $region37
  $region36: #{lenet_forward.5} parent=0 // pred_region
    _
  $region37: #{lenet_forward.5} parent=0 // pred_fallthru
    _

</llo_original>
